<compile_context>
chip_gen: v5e
topology: v5e:2x2
jax: 0.10.0
libtpu: 0.0.40
codegen_flags: <defaults>
</compile_context>

<pallas_src>
import functools
import math

import jax
import jax.numpy as jnp
from jax import lax
from jax.experimental import pallas as pl
from jax.experimental.pallas import tpu as pltpu

_VMEM = pl.BlockSpec(memory_space=pltpu.MemorySpace.VMEM)
_BN_EPS = 1e-5

N_HEADS = 4
FEAT = 128
HEAD = FEAT // N_HEADS   # 32
C_IN = 55
C_PAD = 64               # lane-dense padded channel count


# ------------------------------ fused kernel --------------------------------

def _cross_attention_net_kernel(
    # fused conv_in tap slab + cross-batch attention mask
    x3_ref, mask_ref,
    # conv_in params
    wci1_ref, gci1_ref, bci1_ref,
    wci2_ref, gci2_ref, bci2_ref,
    # stacked transformer-layer params
    wqkv_ref, bqkv_ref, wo_ref, bo_ref,
    wf1_ref, bf1_ref, wf2_ref, bf2_ref,
    # conv_out params
    wco1_ref, gco1_ref, bco1_ref,
    wco2_ref, gco2_ref, bco2_ref,
    # output
    out_ref,
    *, batch, seq, n_layers, eps):

  M = batch * seq
  bf16 = jnp.bfloat16

  def mm(a, w):
    # MXU matmul: bf16 operands, f32 accumulation.
    return jnp.dot(a.astype(bf16), w.astype(bf16),
                   preferred_element_type=jnp.float32)

  def mm_t(a, b):
    # a @ b.T via contracting last dims (no explicit transpose).
    return lax.dot_general(a.astype(bf16), b.astype(bf16),
                           (((1,), (1,)), ((), ())),
                           preferred_element_type=jnp.float32)

  def bn_relu(y, rows, gamma, beta):
    # Two-pass batch stats (mean, then centered second moment); applied as a
    # single fused scale+shift per element.
    mean = jnp.sum(y, axis=0, keepdims=True) * (1.0 / rows)
    d = y - mean
    var = jnp.sum(d * d, axis=0, keepdims=True) * (1.0 / rows)
    scale = lax.rsqrt(var + eps) * gamma
    return jnp.maximum(d * scale + beta, 0.0)

  # -------------------------------- conv_in ---------------------------------
  # Conv1d(55,64,k=3,pad=1) as ONE deep matmul over the fused [M, 192] tap slab
  # (channels already zero-padded 55->64 per tap), then BN+ReLU, then the 1x1
  # conv to 128, BN+ReLU.  Conv biases omitted (cancelled by BN exactly).
  y = mm(x3_ref[...], wci1_ref[...])                               # [M, 64]
  y = bn_relu(y, M, gci1_ref[...], bci1_ref[...])
  y = mm(y, wci2_ref[...])                                         # [M, 128]
  h = bn_relu(y, M, gci2_ref[...], bci2_ref[...])                  # [M, 128]

  # --------------------------- transformer layers ----------------------------
  mask_add = mask_ref[...]                                         # [M, M] (0 / -1e9)
  for l in range(n_layers):
    wqkv_l = wqkv_ref[l]; bqkv_l = bqkv_ref[l]
    wo_l = wo_ref[l];     bo_l = bo_ref[l]
    wf1_l = wf1_ref[l];   bf1_l = bf1_ref[l]
    wf2_l = wf2_ref[l];   bf2_l = bf2_ref[l]

    # Fused 384-wide Q/K/V projection over the whole [M, 128] slab.
    qkv = mm(h, wqkv_l) + bqkv_l                                   # [M, 384]

    # Full-M masked attention; each head accumulates straight into the output
    # projection (no per-batch unroll, no head concat).  1/sqrt(d) is folded
    # into the Q weights at parameter-prep time.
    hacc = h + bo_l                                                # [M, 128] f32
    for hd in range(N_HEADS):
      c0 = hd * HEAD
      qh = qkv[:, c0:c0 + HEAD]                                    # [M, 32]
      kh = qkv[:, FEAT + c0:FEAT + c0 + HEAD]
      vh = qkv[:, 2 * FEAT + c0:2 * FEAT + c0 + HEAD]
      s = mm_t(qh, kh) + mask_add                                  # [M, M]
      p = jnp.exp(s - jnp.max(s, axis=-1, keepdims=True))          # unnormalized
      denom = jnp.sum(p, axis=-1, keepdims=True)                   # [M, 1]
      av = mm(p, vh)                                               # [M, 32]
      av = av * pl.reciprocal(denom, approx=True)                  # EUP recip
      hacc = hacc + mm(av, wo_l[c0:c0 + HEAD, :])                  # accumulate into Wo
    h = hacc

    # norm1/norm2 are identities in the reference (module bug) -> residuals only.
    f = jnp.maximum(mm(h, wf1_l) + bf1_l, 0.0)                     # [M, 128]
    h = h + (mm(f, wf2_l) + bf2_l)

  # -------------------------------- conv_out ---------------------------------
  # Conv1d(128,64,1,padding=1): the 2 pad positions per batch are zero before
  # BN; they enter the batch statistics analytically (never materialized).
  rows_ext = batch * (seq + 2)
  n_pad = 2.0 * batch

  y = mm(h, wco1_ref[...])                                         # [M, 64]
  mean = jnp.sum(y, axis=0, keepdims=True) * (1.0 / rows_ext)
  d = y - mean
  var = (jnp.sum(d * d, axis=0, keepdims=True)
         + n_pad * (mean * mean)) * (1.0 / rows_ext)
  scale = lax.rsqrt(var + eps) * gco1_ref[...]
  shift = bco1_ref[...] - mean * scale
  a_core = jnp.maximum(y * scale + shift, 0.0)                     # [M, 64]
  a_pad = jnp.maximum(shift, 0.0)                                  # [1, 64] (pad rows: y == 0)

  # Conv1d(64,55,1) + BN(55), output channels padded to 64 lanes.  The returned
  # position (out[:, :, -1]) is the right zero-pad column.
  y2 = mm(a_core, wco2_ref[...])                                   # [M, 64]
  y2_pad = mm(a_pad, wco2_ref[...])                                # [1, 64]
  mean2 = (jnp.sum(y2, axis=0, keepdims=True) + n_pad * y2_pad) * (1.0 / rows_ext)
  d2 = y2 - mean2
  dp = y2_pad - mean2
  var2 = (jnp.sum(d2 * d2, axis=0, keepdims=True)
          + n_pad * (dp * dp)) * (1.0 / rows_ext)
  scale2 = lax.rsqrt(var2 + eps) * gco2_ref[...]
  out_row = dp * scale2 + bco2_ref[...]                            # [1, 64]

  # Identical for every batch element (depends only on shared batch stats).
  out_ref[...] = jnp.broadcast_to(out_row, (batch, C_PAD))


# ------------------------------ forward wrapper ------------------------------

def cross_attention_net_fwd(x, params, *, n_layers=3):
  """x: [B, 55, n] (torch channel-first layout) -> [B, 55]."""
  B, C, n = x.shape
  assert C == C_IN
  L = n + 1                       # learned query token appended as last position
  M = B * L

  # Tiny XLA glue: append the query token, go channel-last, zero-pad channels
  # 55->64 (lane-dense), and fuse the three k=3 conv taps into one [M, 192] slab.
  q_tok = jnp.broadcast_to(params["out_query"].reshape(1, 1, C), (B, 1, C))
  xt = jnp.concatenate([jnp.transpose(x, (0, 2, 1)), q_tok], axis=1)    # [B, L, 55]
  xt = jnp.pad(xt, ((0, 0), (1, 1), (0, C_PAD - C)))                    # [B, L+2, 64]
  x3 = jnp.concatenate([xt[:, 0:L], xt[:, 1:L + 1], xt[:, 2:L + 2]],
                       axis=-1).reshape(M, 3 * C_PAD)                   # [M, 192]

  # Additive cross-batch attention mask (shape-only; constant-folded under jit).
  bid = jnp.repeat(jnp.arange(B, dtype=jnp.int32), L)
  mask_add = jnp.where(bid[:, None] == bid[None, :], 0.0, -1e9).astype(jnp.float32)

  operands = (
      x3, mask_add,
      params["wci1"], params["gci1"], params["bci1"],
      params["wci2"], params["gci2"], params["bci2"],
      params["wqkv"], params["bqkv"], params["wo"], params["bo"],
      params["wf1"], params["bf1"], params["wf2"], params["bf2"],
      params["wco1"], params["gco1"], params["bco1"],
      params["wco2"], params["gco2"], params["bco2"],
  )
  kernel = functools.partial(_cross_attention_net_kernel,
                             batch=B, seq=L, n_layers=n_layers, eps=_BN_EPS)
  out = pl.pallas_call(
      kernel,
      out_shape=jax.ShapeDtypeStruct((B, C_PAD), jnp.float32),   # lane-dense output
      in_specs=[_VMEM] * len(operands),
      out_specs=_VMEM,
  )(*operands)
  return out[:, :C_IN]


# --------------------------- parameter preparation ---------------------------
# Parameters are created directly in their "prepared" kernel form: fused taps,
# fused QKV with 1/sqrt(head) folded in, channel padding to 64, bf16 weights.

def init_params(key, n_layers=3):
  bf16 = jnp.bfloat16
  keys = iter(jax.random.split(key, 64))

  def uni(shape, bound):
    return jax.random.uniform(next(keys), shape, jnp.float32, -bound, bound)

  def lin(cin, cout):
    bound = 1.0 / math.sqrt(cin)
    return uni((cin, cout), bound), uni((1, cout), bound)

  def bn(c, pad_to=None):
    # PyTorch default is gamma=1, beta=0; perturb so the affine path is exercised.
    k1, k2 = jax.random.split(next(keys))
    g = 1.0 + 0.1 * jax.random.normal(k1, (1, c), jnp.float32)
    b = 0.1 * jax.random.normal(k2, (1, c), jnp.float32)
    if pad_to is not None and pad_to > c:
      g = jnp.pad(g, ((0, 0), (0, pad_to - c)))
      b = jnp.pad(b, ((0, 0), (0, pad_to - c)))
    return g, b

  p = {"out_query": jax.random.normal(next(keys), (C_IN,), jnp.float32)}

  # conv_in (conv biases omitted: exactly cancelled by training-mode BN).
  w = uni((3, C_IN, 64), 1.0 / math.sqrt(C_IN * 3))                 # Conv1d(55,64,3)
  p["wci1"] = jnp.pad(w, ((0, 0), (0, C_PAD - C_IN), (0, 0))) \
                 .reshape(3 * C_PAD, 64).astype(bf16)               # [192, 64]
  p["gci1"], p["bci1"] = bn(64)
  p["wci2"] = uni((64, FEAT), 1.0 / math.sqrt(64)).astype(bf16)     # [64, 128]
  p["gci2"], p["bci2"] = bn(FEAT)

  # transformer layers: fused [128, 384] QKV; 1/sqrt(head) folded into Q part.
  inv_sqrt_d = 1.0 / math.sqrt(HEAD)
  stacks = {k: [] for k in ("wqkv", "bqkv", "wo", "bo", "wf1", "bf1", "wf2", "bf2")}
  for _ in range(n_layers):
    wq, bq = lin(FEAT, FEAT)
    wk, bk = lin(FEAT, FEAT)
    wv, bv = lin(FEAT, FEAT)
    stacks["wqkv"].append(jnp.concatenate([wq * inv_sqrt_d, wk, wv], axis=1))
    stacks["bqkv"].append(jnp.concatenate([bq * inv_sqrt_d, bk, bv], axis=1))
    w, b = lin(FEAT, FEAT); stacks["wo"].append(w);  stacks["bo"].append(b)
    w, b = lin(FEAT, FEAT); stacks["wf1"].append(w); stacks["bf1"].append(b)  # hidden=128
    w, b = lin(FEAT, FEAT); stacks["wf2"].append(w); stacks["bf2"].append(b)
  for name in ("wqkv", "wo", "wf1", "wf2"):
    p[name] = jnp.stack(stacks[name]).astype(bf16)
  for name in ("bqkv", "bo", "bf1", "bf2"):
    p[name] = jnp.stack(stacks[name])

  # conv_out (conv biases omitted for the same reason; 55 outputs padded to 64).
  p["wco1"] = uni((FEAT, 64), 1.0 / math.sqrt(FEAT)).astype(bf16)   # [128, 64]
  p["gco1"], p["bco1"] = bn(64)
  w = uni((64, C_IN), 1.0 / math.sqrt(64))
  p["wco2"] = jnp.pad(w, ((0, 0), (0, C_PAD - C_IN))).astype(bf16)  # [64, 64]
  p["gco2"], p["bco2"] = bn(C_IN, pad_to=C_PAD)
  return p


# ----------------------------------- main ------------------------------------

if __name__ == "__main__":
  key = jax.random.PRNGKey(0)
  k_params, k_x = jax.random.split(key)
  n_layers = 3
  params = init_params(k_params, n_layers)

  # Torch-layout input [b, c=55, n]; sequence length becomes n + 1 = 16 after
  # the learned query token is appended.
  B, C, n = 2, 55, 15
  x = jax.random.normal(k_x, (B, C, n), jnp.float32)

  fwd = jax.jit(functools.partial(cross_attention_net_fwd, n_layers=n_layers))
  out = fwd(x, params)
  jax.block_until_ready(out)

  assert out.shape == (B, 55), out.shape
  assert bool(jnp.all(jnp.isfinite(out)))
  print("KERNEL_OK")
</pallas_src>

<mosaic_0001>
module attributes {stable_mosaic.version = 11 : i64} {
  func.func @_cross_attention_net_kernel(%arg0: memref<32x192xf32, #tpu.memory_space<vmem>>, %arg1: memref<32x32xf32, #tpu.memory_space<vmem>>, %arg2: memref<192x64xbf16, #tpu.memory_space<vmem>>, %arg3: memref<1x64xf32, #tpu.memory_space<vmem>>, %arg4: memref<1x64xf32, #tpu.memory_space<vmem>>, %arg5: memref<64x128xbf16, #tpu.memory_space<vmem>>, %arg6: memref<1x128xf32, #tpu.memory_space<vmem>>, %arg7: memref<1x128xf32, #tpu.memory_space<vmem>>, %arg8: memref<3x128x384xbf16, #tpu.memory_space<vmem>>, %arg9: memref<3x1x384xf32, #tpu.memory_space<vmem>>, %arg10: memref<3x128x128xbf16, #tpu.memory_space<vmem>>, %arg11: memref<3x1x128xf32, #tpu.memory_space<vmem>>, %arg12: memref<3x128x128xbf16, #tpu.memory_space<vmem>>, %arg13: memref<3x1x128xf32, #tpu.memory_space<vmem>>, %arg14: memref<3x128x128xbf16, #tpu.memory_space<vmem>>, %arg15: memref<3x1x128xf32, #tpu.memory_space<vmem>>, %arg16: memref<128x64xbf16, #tpu.memory_space<vmem>>, %arg17: memref<1x64xf32, #tpu.memory_space<vmem>>, %arg18: memref<1x64xf32, #tpu.memory_space<vmem>>, %arg19: memref<64x64xbf16, #tpu.memory_space<vmem>>, %arg20: memref<1x64xf32, #tpu.memory_space<vmem>>, %arg21: memref<1x64xf32, #tpu.memory_space<vmem>>, %arg22: memref<2x64xf32, #tpu.memory_space<vmem>>) attributes {dimension_semantics = [], scalar_prefetch = 0 : i64, scratch_operands = 0 : i64, tpu.core_type = #tpu.core_type<tc>} {
    %c0 = arith.constant 0 : index
    %c0_0 = arith.constant 0 : index
    %0 = vector.load %arg0[%c0, %c0_0] : memref<32x192xf32, #tpu.memory_space<vmem>>, vector<32x192xf32>
    %c0_1 = arith.constant 0 : index
    %c0_2 = arith.constant 0 : index
    %1 = vector.load %arg2[%c0_1, %c0_2] : memref<192x64xbf16, #tpu.memory_space<vmem>>, vector<192x64xbf16>
    %2 = arith.truncf %0 : vector<32x192xf32> to vector<32x192xbf16>
    %cst = arith.constant dense<0.000000e+00> : vector<32x64xf32>
    %3 = tpu.matmul %2, %1, %cst {dimension_numbers = #tpu.dot_dimension_numbers<[1], [0], [0], [1], [0, 0, 1, 1], [], []>} : vector<32x192xbf16>, vector<192x64xbf16>, vector<32x64xf32> -> vector<32x64xf32>
    %c0_3 = arith.constant 0 : index
    %c0_4 = arith.constant 0 : index
    %4 = vector.load %arg3[%c0_3, %c0_4] : memref<1x64xf32, #tpu.memory_space<vmem>>, vector<1x64xf32>
    %c0_5 = arith.constant 0 : index
    %c0_6 = arith.constant 0 : index
    %5 = vector.load %arg4[%c0_5, %c0_6] : memref<1x64xf32, #tpu.memory_space<vmem>>, vector<1x64xf32>
    %cst_7 = arith.constant dense<0.000000e+00> : vector<64xf32>
    %6 = vector.multi_reduction <add>, %3, %cst_7 [0] : vector<32x64xf32> to vector<64xf32>
    %7 = vector.shape_cast %6 : vector<64xf32> to vector<1x64xf32>
    %cst_8 = arith.constant 3.125000e-02 : f32
    %8 = vector.broadcast %cst_8 : f32 to vector<1x64xf32>
    %9 = arith.mulf %7, %8 : vector<1x64xf32>
    %10 = vector.broadcast %9 : vector<1x64xf32> to vector<32x64xf32>
    %11 = arith.subf %3, %10 : vector<32x64xf32>
    %12 = arith.mulf %11, %11 : vector<32x64xf32>
    %cst_9 = arith.constant dense<0.000000e+00> : vector<64xf32>
    %13 = vector.multi_reduction <add>, %12, %cst_9 [0] : vector<32x64xf32> to vector<64xf32>
    %14 = vector.shape_cast %13 : vector<64xf32> to vector<1x64xf32>
    %cst_10 = arith.constant 3.125000e-02 : f32
    %15 = vector.broadcast %cst_10 : f32 to vector<1x64xf32>
    %16 = arith.mulf %14, %15 : vector<1x64xf32>
    %cst_11 = arith.constant 9.99999974E-6 : f32
    %17 = vector.broadcast %cst_11 : f32 to vector<1x64xf32>
    %18 = arith.addf %16, %17 : vector<1x64xf32>
    %19 = math.rsqrt %18 : vector<1x64xf32>
    %20 = arith.mulf %19, %4 : vector<1x64xf32>
    %21 = vector.broadcast %20 : vector<1x64xf32> to vector<32x64xf32>
    %22 = arith.mulf %11, %21 : vector<32x64xf32>
    %23 = vector.broadcast %5 : vector<1x64xf32> to vector<32x64xf32>
    %24 = arith.addf %22, %23 : vector<32x64xf32>
    %cst_12 = arith.constant 0.000000e+00 : f32
    %25 = vector.broadcast %cst_12 : f32 to vector<32x64xf32>
    %26 = arith.maximumf %24, %25 : vector<32x64xf32>
    %c0_13 = arith.constant 0 : index
    %c0_14 = arith.constant 0 : index
    %27 = vector.load %arg5[%c0_13, %c0_14] : memref<64x128xbf16, #tpu.memory_space<vmem>>, vector<64x128xbf16>
    %28 = arith.truncf %26 : vector<32x64xf32> to vector<32x64xbf16>
    %cst_15 = arith.constant dense<0.000000e+00> : vector<32x128xf32>
    %29 = tpu.matmul %28, %27, %cst_15 {dimension_numbers = #tpu.dot_dimension_numbers<[1], [0], [0], [1], [0, 0, 1, 1], [], []>} : vector<32x64xbf16>, vector<64x128xbf16>, vector<32x128xf32> -> vector<32x128xf32>
    %c0_16 = arith.constant 0 : index
    %c0_17 = arith.constant 0 : index
    %30 = vector.load %arg6[%c0_16, %c0_17] : memref<1x128xf32, #tpu.memory_space<vmem>>, vector<1x128xf32>
    %c0_18 = arith.constant 0 : index
    %c0_19 = arith.constant 0 : index
    %31 = vector.load %arg7[%c0_18, %c0_19] : memref<1x128xf32, #tpu.memory_space<vmem>>, vector<1x128xf32>
    %cst_20 = arith.constant dense<0.000000e+00> : vector<128xf32>
    %32 = vector.multi_reduction <add>, %29, %cst_20 [0] : vector<32x128xf32> to vector<128xf32>
    %33 = vector.shape_cast %32 : vector<128xf32> to vector<1x128xf32>
    %cst_21 = arith.constant 3.125000e-02 : f32
    %34 = vector.broadcast %cst_21 : f32 to vector<1x128xf32>
    %35 = arith.mulf %33, %34 : vector<1x128xf32>
    %36 = vector.broadcast %35 : vector<1x128xf32> to vector<32x128xf32>
    %37 = arith.subf %29, %36 : vector<32x128xf32>
    %38 = arith.mulf %37, %37 : vector<32x128xf32>
    %cst_22 = arith.constant dense<0.000000e+00> : vector<128xf32>
    %39 = vector.multi_reduction <add>, %38, %cst_22 [0] : vector<32x128xf32> to vector<128xf32>
    %40 = vector.shape_cast %39 : vector<128xf32> to vector<1x128xf32>
    %cst_23 = arith.constant 3.125000e-02 : f32
    %41 = vector.broadcast %cst_23 : f32 to vector<1x128xf32>
    %42 = arith.mulf %40, %41 : vector<1x128xf32>
    %cst_24 = arith.constant 9.99999974E-6 : f32
    %43 = vector.broadcast %cst_24 : f32 to vector<1x128xf32>
    %44 = arith.addf %42, %43 : vector<1x128xf32>
    %45 = math.rsqrt %44 : vector<1x128xf32>
    %46 = arith.mulf %45, %30 : vector<1x128xf32>
    %47 = vector.broadcast %46 : vector<1x128xf32> to vector<32x128xf32>
    %48 = arith.mulf %37, %47 : vector<32x128xf32>
    %49 = vector.broadcast %31 : vector<1x128xf32> to vector<32x128xf32>
    %50 = arith.addf %48, %49 : vector<32x128xf32>
    %cst_25 = arith.constant 0.000000e+00 : f32
    %51 = vector.broadcast %cst_25 : f32 to vector<32x128xf32>
    %52 = arith.maximumf %50, %51 : vector<32x128xf32>
    %c0_26 = arith.constant 0 : index
    %c0_27 = arith.constant 0 : index
    %53 = vector.load %arg1[%c0_26, %c0_27] : memref<32x32xf32, #tpu.memory_space<vmem>>, vector<32x32xf32>
    %c0_28 = arith.constant 0 : index
    %c0_29 = arith.constant 0 : index
    %c0_30 = arith.constant 0 : index
    %54 = vector.load %arg8[%c0_28, %c0_29, %c0_30] : memref<3x128x384xbf16, #tpu.memory_space<vmem>>, vector<1x128x384xbf16>
    %55 = vector.shape_cast %54 : vector<1x128x384xbf16> to vector<128x384xbf16>
    %c0_31 = arith.constant 0 : index
    %c0_32 = arith.constant 0 : index
    %c0_33 = arith.constant 0 : index
    %56 = vector.load %arg9[%c0_31, %c0_32, %c0_33] : memref<3x1x384xf32, #tpu.memory_space<vmem>>, vector<1x1x384xf32>
    %57 = vector.shape_cast %56 : vector<1x1x384xf32> to vector<1x384xf32>
    %c0_34 = arith.constant 0 : index
    %c0_35 = arith.constant 0 : index
    %c0_36 = arith.constant 0 : index
    %58 = vector.load %arg10[%c0_34, %c0_35, %c0_36] : memref<3x128x128xbf16, #tpu.memory_space<vmem>>, vector<1x128x128xbf16>
    %59 = vector.shape_cast %58 : vector<1x128x128xbf16> to vector<128x128xbf16>
    %c0_37 = arith.constant 0 : index
    %c0_38 = arith.constant 0 : index
    %c0_39 = arith.constant 0 : index
    %60 = vector.load %arg11[%c0_37, %c0_38, %c0_39] : memref<3x1x128xf32, #tpu.memory_space<vmem>>, vector<1x1x128xf32>
    %61 = vector.shape_cast %60 : vector<1x1x128xf32> to vector<1x128xf32>
    %c0_40 = arith.constant 0 : index
    %c0_41 = arith.constant 0 : index
    %c0_42 = arith.constant 0 : index
    %62 = vector.load %arg12[%c0_40, %c0_41, %c0_42] : memref<3x128x128xbf16, #tpu.memory_space<vmem>>, vector<1x128x128xbf16>
    %63 = vector.shape_cast %62 : vector<1x128x128xbf16> to vector<128x128xbf16>
    %c0_43 = arith.constant 0 : index
    %c0_44 = arith.constant 0 : index
    %c0_45 = arith.constant 0 : index
    %64 = vector.load %arg13[%c0_43, %c0_44, %c0_45] : memref<3x1x128xf32, #tpu.memory_space<vmem>>, vector<1x1x128xf32>
    %65 = vector.shape_cast %64 : vector<1x1x128xf32> to vector<1x128xf32>
    %c0_46 = arith.constant 0 : index
    %c0_47 = arith.constant 0 : index
    %c0_48 = arith.constant 0 : index
    %66 = vector.load %arg14[%c0_46, %c0_47, %c0_48] : memref<3x128x128xbf16, #tpu.memory_space<vmem>>, vector<1x128x128xbf16>
    %67 = vector.shape_cast %66 : vector<1x128x128xbf16> to vector<128x128xbf16>
    %c0_49 = arith.constant 0 : index
    %c0_50 = arith.constant 0 : index
    %c0_51 = arith.constant 0 : index
    %68 = vector.load %arg15[%c0_49, %c0_50, %c0_51] : memref<3x1x128xf32, #tpu.memory_space<vmem>>, vector<1x1x128xf32>
    %69 = vector.shape_cast %68 : vector<1x1x128xf32> to vector<1x128xf32>
    %70 = arith.truncf %52 : vector<32x128xf32> to vector<32x128xbf16>
    %cst_52 = arith.constant dense<0.000000e+00> : vector<32x384xf32>
    %71 = tpu.matmul %70, %55, %cst_52 {dimension_numbers = #tpu.dot_dimension_numbers<[1], [0], [0], [1], [0, 0, 1, 1], [], []>} : vector<32x128xbf16>, vector<128x384xbf16>, vector<32x384xf32> -> vector<32x384xf32>
    %72 = vector.broadcast %57 : vector<1x384xf32> to vector<32x384xf32>
    %73 = arith.addf %71, %72 : vector<32x384xf32>
    %74 = vector.broadcast %61 : vector<1x128xf32> to vector<32x128xf32>
    %75 = arith.addf %52, %74 : vector<32x128xf32>
    %76 = vector.extract_strided_slice %73 {offsets = [0, 0], sizes = [32, 32], strides = [1, 1]} : vector<32x384xf32> to vector<32x32xf32>
    %77 = vector.extract_strided_slice %73 {offsets = [0, 128], sizes = [32, 32], strides = [1, 1]} : vector<32x384xf32> to vector<32x32xf32>
    %78 = vector.extract_strided_slice %73 {offsets = [0, 256], sizes = [32, 32], strides = [1, 1]} : vector<32x384xf32> to vector<32x32xf32>
    %79 = arith.truncf %76 : vector<32x32xf32> to vector<32x32xbf16>
    %80 = arith.truncf %77 : vector<32x32xf32> to vector<32x32xbf16>
    %cst_53 = arith.constant dense<0.000000e+00> : vector<32x32xf32>
    %81 = tpu.matmul %79, %80, %cst_53 {dimension_numbers = #tpu.dot_dimension_numbers<[1], [1], [0], [0], [0, 0, 1, 0], [], []>} : vector<32x32xbf16>, vector<32x32xbf16>, vector<32x32xf32> -> vector<32x32xf32>
    %82 = arith.addf %81, %53 : vector<32x32xf32>
    %cst_54 = arith.constant dense<0xFF800000> : vector<32xf32>
    %83 = vector.multi_reduction <maximumf>, %82, %cst_54 [1] : vector<32x32xf32> to vector<32xf32>
    %84 = vector.shape_cast %83 : vector<32xf32> to vector<32x1xf32>
    %85 = vector.broadcast %84 : vector<32x1xf32> to vector<32x32xf32>
    %86 = arith.subf %82, %85 : vector<32x32xf32>
    %87 = math.exp %86 : vector<32x32xf32>
    %cst_55 = arith.constant dense<0.000000e+00> : vector<32xf32>
    %88 = vector.multi_reduction <add>, %87, %cst_55 [1] : vector<32x32xf32> to vector<32xf32>
    %89 = vector.shape_cast %88 : vector<32xf32> to vector<32x1xf32>
    %90 = arith.truncf %87 : vector<32x32xf32> to vector<32x32xbf16>
    %91 = arith.truncf %78 : vector<32x32xf32> to vector<32x32xbf16>
    %cst_56 = arith.constant dense<0.000000e+00> : vector<32x32xf32>
    %92 = tpu.matmul %90, %91, %cst_56 {dimension_numbers = #tpu.dot_dimension_numbers<[1], [0], [0], [1], [0, 0, 1, 1], [], []>} : vector<32x32xbf16>, vector<32x32xbf16>, vector<32x32xf32> -> vector<32x32xf32>
    %93 = tpu.reciprocal %89 {approx = true} : vector<32x1xf32> -> vector<32x1xf32>
    %94 = vector.broadcast %93 : vector<32x1xf32> to vector<32x32xf32>
    %95 = arith.mulf %92, %94 : vector<32x32xf32>
    %96 = vector.extract_strided_slice %59 {offsets = [0, 0], sizes = [32, 128], strides = [1, 1]} : vector<128x128xbf16> to vector<32x128xbf16>
    %97 = arith.truncf %95 : vector<32x32xf32> to vector<32x32xbf16>
    %cst_57 = arith.constant dense<0.000000e+00> : vector<32x128xf32>
    %98 = tpu.matmul %97, %96, %cst_57 {dimension_numbers = #tpu.dot_dimension_numbers<[1], [0], [0], [1], [0, 0, 1, 1], [], []>} : vector<32x32xbf16>, vector<32x128xbf16>, vector<32x128xf32> -> vector<32x128xf32>
    %99 = arith.addf %75, %98 : vector<32x128xf32>
    %100 = vector.extract_strided_slice %73 {offsets = [0, 32], sizes = [32, 32], strides = [1, 1]} : vector<32x384xf32> to vector<32x32xf32>
    %101 = vector.extract_strided_slice %73 {offsets = [0, 160], sizes = [32, 32], strides = [1, 1]} : vector<32x384xf32> to vector<32x32xf32>
    %102 = vector.extract_strided_slice %73 {offsets = [0, 288], sizes = [32, 32], strides = [1, 1]} : vector<32x384xf32> to vector<32x32xf32>
    %103 = arith.truncf %100 : vector<32x32xf32> to vector<32x32xbf16>
    %104 = arith.truncf %101 : vector<32x32xf32> to vector<32x32xbf16>
    %cst_58 = arith.constant dense<0.000000e+00> : vector<32x32xf32>
    %105 = tpu.matmul %103, %104, %cst_58 {dimension_numbers = #tpu.dot_dimension_numbers<[1], [1], [0], [0], [0, 0, 1, 0], [], []>} : vector<32x32xbf16>, vector<32x32xbf16>, vector<32x32xf32> -> vector<32x32xf32>
    %106 = arith.addf %105, %53 : vector<32x32xf32>
    %cst_59 = arith.constant dense<0xFF800000> : vector<32xf32>
    %107 = vector.multi_reduction <maximumf>, %106, %cst_59 [1] : vector<32x32xf32> to vector<32xf32>
    %108 = vector.shape_cast %107 : vector<32xf32> to vector<32x1xf32>
    %109 = vector.broadcast %108 : vector<32x1xf32> to vector<32x32xf32>
    %110 = arith.subf %106, %109 : vector<32x32xf32>
    %111 = math.exp %110 : vector<32x32xf32>
    %cst_60 = arith.constant dense<0.000000e+00> : vector<32xf32>
    %112 = vector.multi_reduction <add>, %111, %cst_60 [1] : vector<32x32xf32> to vector<32xf32>
    %113 = vector.shape_cast %112 : vector<32xf32> to vector<32x1xf32>
    %114 = arith.truncf %111 : vector<32x32xf32> to vector<32x32xbf16>
    %115 = arith.truncf %102 : vector<32x32xf32> to vector<32x32xbf16>
    %cst_61 = arith.constant dense<0.000000e+00> : vector<32x32xf32>
    %116 = tpu.matmul %114, %115, %cst_61 {dimension_numbers = #tpu.dot_dimension_numbers<[1], [0], [0], [1], [0, 0, 1, 1], [], []>} : vector<32x32xbf16>, vector<32x32xbf16>, vector<32x32xf32> -> vector<32x32xf32>
    %117 = tpu.reciprocal %113 {approx = true} : vector<32x1xf32> -> vector<32x1xf32>
    %118 = vector.broadcast %117 : vector<32x1xf32> to vector<32x32xf32>
    %119 = arith.mulf %116, %118 : vector<32x32xf32>
    %120 = vector.extract_strided_slice %59 {offsets = [32, 0], sizes = [32, 128], strides = [1, 1]} : vector<128x128xbf16> to vector<32x128xbf16>
    %121 = arith.truncf %119 : vector<32x32xf32> to vector<32x32xbf16>
    %cst_62 = arith.constant dense<0.000000e+00> : vector<32x128xf32>
    %122 = tpu.matmul %121, %120, %cst_62 {dimension_numbers = #tpu.dot_dimension_numbers<[1], [0], [0], [1], [0, 0, 1, 1], [], []>} : vector<32x32xbf16>, vector<32x128xbf16>, vector<32x128xf32> -> vector<32x128xf32>
    %123 = arith.addf %99, %122 : vector<32x128xf32>
    %124 = vector.extract_strided_slice %73 {offsets = [0, 64], sizes = [32, 32], strides = [1, 1]} : vector<32x384xf32> to vector<32x32xf32>
    %125 = vector.extract_strided_slice %73 {offsets = [0, 192], sizes = [32, 32], strides = [1, 1]} : vector<32x384xf32> to vector<32x32xf32>
    %126 = vector.extract_strided_slice %73 {offsets = [0, 320], sizes = [32, 32], strides = [1, 1]} : vector<32x384xf32> to vector<32x32xf32>
    %127 = arith.truncf %124 : vector<32x32xf32> to vector<32x32xbf16>
    %128 = arith.truncf %125 : vector<32x32xf32> to vector<32x32xbf16>
    %cst_63 = arith.constant dense<0.000000e+00> : vector<32x32xf32>
    %129 = tpu.matmul %127, %128, %cst_63 {dimension_numbers = #tpu.dot_dimension_numbers<[1], [1], [0], [0], [0, 0, 1, 0], [], []>} : vector<32x32xbf16>, vector<32x32xbf16>, vector<32x32xf32> -> vector<32x32xf32>
    %130 = arith.addf %129, %53 : vector<32x32xf32>
    %cst_64 = arith.constant dense<0xFF800000> : vector<32xf32>
    %131 = vector.multi_reduction <maximumf>, %130, %cst_64 [1] : vector<32x32xf32> to vector<32xf32>
    %132 = vector.shape_cast %131 : vector<32xf32> to vector<32x1xf32>
    %133 = vector.broadcast %132 : vector<32x1xf32> to vector<32x32xf32>
    %134 = arith.subf %130, %133 : vector<32x32xf32>
    %135 = math.exp %134 : vector<32x32xf32>
    %cst_65 = arith.constant dense<0.000000e+00> : vector<32xf32>
    %136 = vector.multi_reduction <add>, %135, %cst_65 [1] : vector<32x32xf32> to vector<32xf32>
    %137 = vector.shape_cast %136 : vector<32xf32> to vector<32x1xf32>
    %138 = arith.truncf %135 : vector<32x32xf32> to vector<32x32xbf16>
    %139 = arith.truncf %126 : vector<32x32xf32> to vector<32x32xbf16>
    %cst_66 = arith.constant dense<0.000000e+00> : vector<32x32xf32>
    %140 = tpu.matmul %138, %139, %cst_66 {dimension_numbers = #tpu.dot_dimension_numbers<[1], [0], [0], [1], [0, 0, 1, 1], [], []>} : vector<32x32xbf16>, vector<32x32xbf16>, vector<32x32xf32> -> vector<32x32xf32>
    %141 = tpu.reciprocal %137 {approx = true} : vector<32x1xf32> -> vector<32x1xf32>
    %142 = vector.broadcast %141 : vector<32x1xf32> to vector<32x32xf32>
    %143 = arith.mulf %140, %142 : vector<32x32xf32>
    %144 = vector.extract_strided_slice %59 {offsets = [64, 0], sizes = [32, 128], strides = [1, 1]} : vector<128x128xbf16> to vector<32x128xbf16>
    %145 = arith.truncf %143 : vector<32x32xf32> to vector<32x32xbf16>
    %cst_67 = arith.constant dense<0.000000e+00> : vector<32x128xf32>
    %146 = tpu.matmul %145, %144, %cst_67 {dimension_numbers = #tpu.dot_dimension_numbers<[1], [0], [0], [1], [0, 0, 1, 1], [], []>} : vector<32x32xbf16>, vector<32x128xbf16>, vector<32x128xf32> -> vector<32x128xf32>
    %147 = arith.addf %123, %146 : vector<32x128xf32>
    %148 = vector.extract_strided_slice %73 {offsets = [0, 96], sizes = [32, 32], strides = [1, 1]} : vector<32x384xf32> to vector<32x32xf32>
    %149 = vector.extract_strided_slice %73 {offsets = [0, 224], sizes = [32, 32], strides = [1, 1]} : vector<32x384xf32> to vector<32x32xf32>
    %150 = vector.extract_strided_slice %73 {offsets = [0, 352], sizes = [32, 32], strides = [1, 1]} : vector<32x384xf32> to vector<32x32xf32>
    %151 = arith.truncf %148 : vector<32x32xf32> to vector<32x32xbf16>
    %152 = arith.truncf %149 : vector<32x32xf32> to vector<32x32xbf16>
    %cst_68 = arith.constant dense<0.000000e+00> : vector<32x32xf32>
    %153 = tpu.matmul %151, %152, %cst_68 {dimension_numbers = #tpu.dot_dimension_numbers<[1], [1], [0], [0], [0, 0, 1, 0], [], []>} : vector<32x32xbf16>, vector<32x32xbf16>, vector<32x32xf32> -> vector<32x32xf32>
    %154 = arith.addf %153, %53 : vector<32x32xf32>
    %cst_69 = arith.constant dense<0xFF800000> : vector<32xf32>
    %155 = vector.multi_reduction <maximumf>, %154, %cst_69 [1] : vector<32x32xf32> to vector<32xf32>
    %156 = vector.shape_cast %155 : vector<32xf32> to vector<32x1xf32>
    %157 = vector.broadcast %156 : vector<32x1xf32> to vector<32x32xf32>
    %158 = arith.subf %154, %157 : vector<32x32xf32>
    %159 = math.exp %158 : vector<32x32xf32>
    %cst_70 = arith.constant dense<0.000000e+00> : vector<32xf32>
    %160 = vector.multi_reduction <add>, %159, %cst_70 [1] : vector<32x32xf32> to vector<32xf32>
    %161 = vector.shape_cast %160 : vector<32xf32> to vector<32x1xf32>
    %162 = arith.truncf %159 : vector<32x32xf32> to vector<32x32xbf16>
    %163 = arith.truncf %150 : vector<32x32xf32> to vector<32x32xbf16>
    %cst_71 = arith.constant dense<0.000000e+00> : vector<32x32xf32>
    %164 = tpu.matmul %162, %163, %cst_71 {dimension_numbers = #tpu.dot_dimension_numbers<[1], [0], [0], [1], [0, 0, 1, 1], [], []>} : vector<32x32xbf16>, vector<32x32xbf16>, vector<32x32xf32> -> vector<32x32xf32>
    %165 = tpu.reciprocal %161 {approx = true} : vector<32x1xf32> -> vector<32x1xf32>
    %166 = vector.broadcast %165 : vector<32x1xf32> to vector<32x32xf32>
    %167 = arith.mulf %164, %166 : vector<32x32xf32>
    %168 = vector.extract_strided_slice %59 {offsets = [96, 0], sizes = [32, 128], strides = [1, 1]} : vector<128x128xbf16> to vector<32x128xbf16>
    %169 = arith.truncf %167 : vector<32x32xf32> to vector<32x32xbf16>
    %cst_72 = arith.constant dense<0.000000e+00> : vector<32x128xf32>
    %170 = tpu.matmul %169, %168, %cst_72 {dimension_numbers = #tpu.dot_dimension_numbers<[1], [0], [0], [1], [0, 0, 1, 1], [], []>} : vector<32x32xbf16>, vector<32x128xbf16>, vector<32x128xf32> -> vector<32x128xf32>
    %171 = arith.addf %147, %170 : vector<32x128xf32>
    %172 = arith.truncf %171 : vector<32x128xf32> to vector<32x128xbf16>
    %cst_73 = arith.constant dense<0.000000e+00> : vector<32x128xf32>
    %173 = tpu.matmul %172, %63, %cst_73 {dimension_numbers = #tpu.dot_dimension_numbers<[1], [0], [0], [1], [0, 0, 1, 1], [], []>} : vector<32x128xbf16>, vector<128x128xbf16>, vector<32x128xf32> -> vector<32x128xf32>
    %174 = vector.broadcast %65 : vector<1x128xf32> to vector<32x128xf32>
    %175 = arith.addf %173, %174 : vector<32x128xf32>
    %cst_74 = arith.constant 0.000000e+00 : f32
    %176 = vector.broadcast %cst_74 : f32 to vector<32x128xf32>
    %177 = arith.maximumf %175, %176 : vector<32x128xf32>
    %178 = arith.truncf %177 : vector<32x128xf32> to vector<32x128xbf16>
    %cst_75 = arith.constant dense<0.000000e+00> : vector<32x128xf32>
    %179 = tpu.matmul %178, %67, %cst_75 {dimension_numbers = #tpu.dot_dimension_numbers<[1], [0], [0], [1], [0, 0, 1, 1], [], []>} : vector<32x128xbf16>, vector<128x128xbf16>, vector<32x128xf32> -> vector<32x128xf32>
    %180 = vector.broadcast %69 : vector<1x128xf32> to vector<32x128xf32>
    %181 = arith.addf %179, %180 : vector<32x128xf32>
    %182 = arith.addf %171, %181 : vector<32x128xf32>
    %c1 = arith.constant 1 : index
    %c0_76 = arith.constant 0 : index
    %c0_77 = arith.constant 0 : index
    %183 = vector.load %arg8[%c1, %c0_76, %c0_77] : memref<3x128x384xbf16, #tpu.memory_space<vmem>>, vector<1x128x384xbf16>
    %184 = vector.shape_cast %183 : vector<1x128x384xbf16> to vector<128x384xbf16>
    %c1_78 = arith.constant 1 : index
    %c0_79 = arith.constant 0 : index
    %c0_80 = arith.constant 0 : index
    %185 = vector.load %arg9[%c1_78, %c0_79, %c0_80] : memref<3x1x384xf32, #tpu.memory_space<vmem>>, vector<1x1x384xf32>
    %186 = vector.shape_cast %185 : vector<1x1x384xf32> to vector<1x384xf32>
    %c1_81 = arith.constant 1 : index
    %c0_82 = arith.constant 0 : index
    %c0_83 = arith.constant 0 : index
    %187 = vector.load %arg10[%c1_81, %c0_82, %c0_83] : memref<3x128x128xbf16, #tpu.memory_space<vmem>>, vector<1x128x128xbf16>
    %188 = vector.shape_cast %187 : vector<1x128x128xbf16> to vector<128x128xbf16>
    %c1_84 = arith.constant 1 : index
    %c0_85 = arith.constant 0 : index
    %c0_86 = arith.constant 0 : index
    %189 = vector.load %arg11[%c1_84, %c0_85, %c0_86] : memref<3x1x128xf32, #tpu.memory_space<vmem>>, vector<1x1x128xf32>
    %190 = vector.shape_cast %189 : vector<1x1x128xf32> to vector<1x128xf32>
    %c1_87 = arith.constant 1 : index
    %c0_88 = arith.constant 0 : index
    %c0_89 = arith.constant 0 : index
    %191 = vector.load %arg12[%c1_87, %c0_88, %c0_89] : memref<3x128x128xbf16, #tpu.memory_space<vmem>>, vector<1x128x128xbf16>
    %192 = vector.shape_cast %191 : vector<1x128x128xbf16> to vector<128x128xbf16>
    %c1_90 = arith.constant 1 : index
    %c0_91 = arith.constant 0 : index
    %c0_92 = arith.constant 0 : index
    %193 = vector.load %arg13[%c1_90, %c0_91, %c0_92] : memref<3x1x128xf32, #tpu.memory_space<vmem>>, vector<1x1x128xf32>
    %194 = vector.shape_cast %193 : vector<1x1x128xf32> to vector<1x128xf32>
    %c1_93 = arith.constant 1 : index
    %c0_94 = arith.constant 0 : index
    %c0_95 = arith.constant 0 : index
    %195 = vector.load %arg14[%c1_93, %c0_94, %c0_95] : memref<3x128x128xbf16, #tpu.memory_space<vmem>>, vector<1x128x128xbf16>
    %196 = vector.shape_cast %195 : vector<1x128x128xbf16> to vector<128x128xbf16>
    %c1_96 = arith.constant 1 : index
    %c0_97 = arith.constant 0 : index
    %c0_98 = arith.constant 0 : index
    %197 = vector.load %arg15[%c1_96, %c0_97, %c0_98] : memref<3x1x128xf32, #tpu.memory_space<vmem>>, vector<1x1x128xf32>
    %198 = vector.shape_cast %197 : vector<1x1x128xf32> to vector<1x128xf32>
    %199 = arith.truncf %182 : vector<32x128xf32> to vector<32x128xbf16>
    %cst_99 = arith.constant dense<0.000000e+00> : vector<32x384xf32>
    %200 = tpu.matmul %199, %184, %cst_99 {dimension_numbers = #tpu.dot_dimension_numbers<[1], [0], [0], [1], [0, 0, 1, 1], [], []>} : vector<32x128xbf16>, vector<128x384xbf16>, vector<32x384xf32> -> vector<32x384xf32>
    %201 = vector.broadcast %186 : vector<1x384xf32> to vector<32x384xf32>
    %202 = arith.addf %200, %201 : vector<32x384xf32>
    %203 = vector.broadcast %190 : vector<1x128xf32> to vector<32x128xf32>
    %204 = arith.addf %182, %203 : vector<32x128xf32>
    %205 = vector.extract_strided_slice %202 {offsets = [0, 0], sizes = [32, 32], strides = [1, 1]} : vector<32x384xf32> to vector<32x32xf32>
    %206 = vector.extract_strided_slice %202 {offsets = [0, 128], sizes = [32, 32], strides = [1, 1]} : vector<32x384xf32> to vector<32x32xf32>
    %207 = vector.extract_strided_slice %202 {offsets = [0, 256], sizes = [32, 32], strides = [1, 1]} : vector<32x384xf32> to vector<32x32xf32>
    %208 = arith.truncf %205 : vector<32x32xf32> to vector<32x32xbf16>
    %209 = arith.truncf %206 : vector<32x32xf32> to vector<32x32xbf16>
    %cst_100 = arith.constant dense<0.000000e+00> : vector<32x32xf32>
    %210 = tpu.matmul %208, %209, %cst_100 {dimension_numbers = #tpu.dot_dimension_numbers<[1], [1], [0], [0], [0, 0, 1, 0], [], []>} : vector<32x32xbf16>, vector<32x32xbf16>, vector<32x32xf32> -> vector<32x32xf32>
    %211 = arith.addf %210, %53 : vector<32x32xf32>
    %cst_101 = arith.constant dense<0xFF800000> : vector<32xf32>
    %212 = vector.multi_reduction <maximumf>, %211, %cst_101 [1] : vector<32x32xf32> to vector<32xf32>
    %213 = vector.shape_cast %212 : vector<32xf32> to vector<32x1xf32>
    %214 = vector.broadcast %213 : vector<32x1xf32> to vector<32x32xf32>
    %215 = arith.subf %211, %214 : vector<32x32xf32>
    %216 = math.exp %215 : vector<32x32xf32>
    %cst_102 = arith.constant dense<0.000000e+00> : vector<32xf32>
    %217 = vector.multi_reduction <add>, %216, %cst_102 [1] : vector<32x32xf32> to vector<32xf32>
    %218 = vector.shape_cast %217 : vector<32xf32> to vector<32x1xf32>
    %219 = arith.truncf %216 : vector<32x32xf32> to vector<32x32xbf16>
    %220 = arith.truncf %207 : vector<32x32xf32> to vector<32x32xbf16>
    %cst_103 = arith.constant dense<0.000000e+00> : vector<32x32xf32>
    %221 = tpu.matmul %219, %220, %cst_103 {dimension_numbers = #tpu.dot_dimension_numbers<[1], [0], [0], [1], [0, 0, 1, 1], [], []>} : vector<32x32xbf16>, vector<32x32xbf16>, vector<32x32xf32> -> vector<32x32xf32>
    %222 = tpu.reciprocal %218 {approx = true} : vector<32x1xf32> -> vector<32x1xf32>
    %223 = vector.broadcast %222 : vector<32x1xf32> to vector<32x32xf32>
    %224 = arith.mulf %221, %223 : vector<32x32xf32>
    %225 = vector.extract_strided_slice %188 {offsets = [0, 0], sizes = [32, 128], strides = [1, 1]} : vector<128x128xbf16> to vector<32x128xbf16>
    %226 = arith.truncf %224 : vector<32x32xf32> to vector<32x32xbf16>
    %cst_104 = arith.constant dense<0.000000e+00> : vector<32x128xf32>
    %227 = tpu.matmul %226, %225, %cst_104 {dimension_numbers = #tpu.dot_dimension_numbers<[1], [0], [0], [1], [0, 0, 1, 1], [], []>} : vector<32x32xbf16>, vector<32x128xbf16>, vector<32x128xf32> -> vector<32x128xf32>
    %228 = arith.addf %204, %227 : vector<32x128xf32>
    %229 = vector.extract_strided_slice %202 {offsets = [0, 32], sizes = [32, 32], strides = [1, 1]} : vector<32x384xf32> to vector<32x32xf32>
    %230 = vector.extract_strided_slice %202 {offsets = [0, 160], sizes = [32, 32], strides = [1, 1]} : vector<32x384xf32> to vector<32x32xf32>
    %231 = vector.extract_strided_slice %202 {offsets = [0, 288], sizes = [32, 32], strides = [1, 1]} : vector<32x384xf32> to vector<32x32xf32>
    %232 = arith.truncf %229 : vector<32x32xf32> to vector<32x32xbf16>
    %233 = arith.truncf %230 : vector<32x32xf32> to vector<32x32xbf16>
    %cst_105 = arith.constant dense<0.000000e+00> : vector<32x32xf32>
    %234 = tpu.matmul %232, %233, %cst_105 {dimension_numbers = #tpu.dot_dimension_numbers<[1], [1], [0], [0], [0, 0, 1, 0], [], []>} : vector<32x32xbf16>, vector<32x32xbf16>, vector<32x32xf32> -> vector<32x32xf32>
    %235 = arith.addf %234, %53 : vector<32x32xf32>
    %cst_106 = arith.constant dense<0xFF800000> : vector<32xf32>
    %236 = vector.multi_reduction <maximumf>, %235, %cst_106 [1] : vector<32x32xf32> to vector<32xf32>
    %237 = vector.shape_cast %236 : vector<32xf32> to vector<32x1xf32>
    %238 = vector.broadcast %237 : vector<32x1xf32> to vector<32x32xf32>
    %239 = arith.subf %235, %238 : vector<32x32xf32>
    %240 = math.exp %239 : vector<32x32xf32>
    %cst_107 = arith.constant dense<0.000000e+00> : vector<32xf32>
    %241 = vector.multi_reduction <add>, %240, %cst_107 [1] : vector<32x32xf32> to vector<32xf32>
    %242 = vector.shape_cast %241 : vector<32xf32> to vector<32x1xf32>
    %243 = arith.truncf %240 : vector<32x32xf32> to vector<32x32xbf16>
    %244 = arith.truncf %231 : vector<32x32xf32> to vector<32x32xbf16>
    %cst_108 = arith.constant dense<0.000000e+00> : vector<32x32xf32>
    %245 = tpu.matmul %243, %244, %cst_108 {dimension_numbers = #tpu.dot_dimension_numbers<[1], [0], [0], [1], [0, 0, 1, 1], [], []>} : vector<32x32xbf16>, vector<32x32xbf16>, vector<32x32xf32> -> vector<32x32xf32>
    %246 = tpu.reciprocal %242 {approx = true} : vector<32x1xf32> -> vector<32x1xf32>
    %247 = vector.broadcast %246 : vector<32x1xf32> to vector<32x32xf32>
    %248 = arith.mulf %245, %247 : vector<32x32xf32>
    %249 = vector.extract_strided_slice %188 {offsets = [32, 0], sizes = [32, 128], strides = [1, 1]} : vector<128x128xbf16> to vector<32x128xbf16>
    %250 = arith.truncf %248 : vector<32x32xf32> to vector<32x32xbf16>
    %cst_109 = arith.constant dense<0.000000e+00> : vector<32x128xf32>
    %251 = tpu.matmul %250, %249, %cst_109 {dimension_numbers = #tpu.dot_dimension_numbers<[1], [0], [0], [1], [0, 0, 1, 1], [], []>} : vector<32x32xbf16>, vector<32x128xbf16>, vector<32x128xf32> -> vector<32x128xf32>
    %252 = arith.addf %228, %251 : vector<32x128xf32>
    %253 = vector.extract_strided_slice %202 {offsets = [0, 64], sizes = [32, 32], strides = [1, 1]} : vector<32x384xf32> to vector<32x32xf32>
    %254 = vector.extract_strided_slice %202 {offsets = [0, 192], sizes = [32, 32], strides = [1, 1]} : vector<32x384xf32> to vector<32x32xf32>
    %255 = vector.extract_strided_slice %202 {offsets = [0, 320], sizes = [32, 32], strides = [1, 1]} : vector<32x384xf32> to vector<32x32xf32>
    %256 = arith.truncf %253 : vector<32x32xf32> to vector<32x32xbf16>
    %257 = arith.truncf %254 : vector<32x32xf32> to vector<32x32xbf16>
    %cst_110 = arith.constant dense<0.000000e+00> : vector<32x32xf32>
    %258 = tpu.matmul %256, %257, %cst_110 {dimension_numbers = #tpu.dot_dimension_numbers<[1], [1], [0], [0], [0, 0, 1, 0], [], []>} : vector<32x32xbf16>, vector<32x32xbf16>, vector<32x32xf32> -> vector<32x32xf32>
    %259 = arith.addf %258, %53 : vector<32x32xf32>
    %cst_111 = arith.constant dense<0xFF800000> : vector<32xf32>
    %260 = vector.multi_reduction <maximumf>, %259, %cst_111 [1] : vector<32x32xf32> to vector<32xf32>
    %261 = vector.shape_cast %260 : vector<32xf32> to vector<32x1xf32>
    %262 = vector.broadcast %261 : vector<32x1xf32> to vector<32x32xf32>
    %263 = arith.subf %259, %262 : vector<32x32xf32>
    %264 = math.exp %263 : vector<32x32xf32>
    %cst_112 = arith.constant dense<0.000000e+00> : vector<32xf32>
    %265 = vector.multi_reduction <add>, %264, %cst_112 [1] : vector<32x32xf32> to vector<32xf32>
    %266 = vector.shape_cast %265 : vector<32xf32> to vector<32x1xf32>
    %267 = arith.truncf %264 : vector<32x32xf32> to vector<32x32xbf16>
    %268 = arith.truncf %255 : vector<32x32xf32> to vector<32x32xbf16>
    %cst_113 = arith.constant dense<0.000000e+00> : vector<32x32xf32>
    %269 = tpu.matmul %267, %268, %cst_113 {dimension_numbers = #tpu.dot_dimension_numbers<[1], [0], [0], [1], [0, 0, 1, 1], [], []>} : vector<32x32xbf16>, vector<32x32xbf16>, vector<32x32xf32> -> vector<32x32xf32>
    %270 = tpu.reciprocal %266 {approx = true} : vector<32x1xf32> -> vector<32x1xf32>
    %271 = vector.broadcast %270 : vector<32x1xf32> to vector<32x32xf32>
    %272 = arith.mulf %269, %271 : vector<32x32xf32>
    %273 = vector.extract_strided_slice %188 {offsets = [64, 0], sizes = [32, 128], strides = [1, 1]} : vector<128x128xbf16> to vector<32x128xbf16>
    %274 = arith.truncf %272 : vector<32x32xf32> to vector<32x32xbf16>
    %cst_114 = arith.constant dense<0.000000e+00> : vector<32x128xf32>
    %275 = tpu.matmul %274, %273, %cst_114 {dimension_numbers = #tpu.dot_dimension_numbers<[1], [0], [0], [1], [0, 0, 1, 1], [], []>} : vector<32x32xbf16>, vector<32x128xbf16>, vector<32x128xf32> -> vector<32x128xf32>
    %276 = arith.addf %252, %275 : vector<32x128xf32>
    %277 = vector.extract_strided_slice %202 {offsets = [0, 96], sizes = [32, 32], strides = [1, 1]} : vector<32x384xf32> to vector<32x32xf32>
    %278 = vector.extract_strided_slice %202 {offsets = [0, 224], sizes = [32, 32], strides = [1, 1]} : vector<32x384xf32> to vector<32x32xf32>
    %279 = vector.extract_strided_slice %202 {offsets = [0, 352], sizes = [32, 32], strides = [1, 1]} : vector<32x384xf32> to vector<32x32xf32>
    %280 = arith.truncf %277 : vector<32x32xf32> to vector<32x32xbf16>
    %281 = arith.truncf %278 : vector<32x32xf32> to vector<32x32xbf16>
    %cst_115 = arith.constant dense<0.000000e+00> : vector<32x32xf32>
    %282 = tpu.matmul %280, %281, %cst_115 {dimension_numbers = #tpu.dot_dimension_numbers<[1], [1], [0], [0], [0, 0, 1, 0], [], []>} : vector<32x32xbf16>, vector<32x32xbf16>, vector<32x32xf32> -> vector<32x32xf32>
    %283 = arith.addf %282, %53 : vector<32x32xf32>
    %cst_116 = arith.constant dense<0xFF800000> : vector<32xf32>
    %284 = vector.multi_reduction <maximumf>, %283, %cst_116 [1] : vector<32x32xf32> to vector<32xf32>
    %285 = vector.shape_cast %284 : vector<32xf32> to vector<32x1xf32>
    %286 = vector.broadcast %285 : vector<32x1xf32> to vector<32x32xf32>
    %287 = arith.subf %283, %286 : vector<32x32xf32>
    %288 = math.exp %287 : vector<32x32xf32>
    %cst_117 = arith.constant dense<0.000000e+00> : vector<32xf32>
    %289 = vector.multi_reduction <add>, %288, %cst_117 [1] : vector<32x32xf32> to vector<32xf32>
    %290 = vector.shape_cast %289 : vector<32xf32> to vector<32x1xf32>
    %291 = arith.truncf %288 : vector<32x32xf32> to vector<32x32xbf16>
    %292 = arith.truncf %279 : vector<32x32xf32> to vector<32x32xbf16>
    %cst_118 = arith.constant dense<0.000000e+00> : vector<32x32xf32>
    %293 = tpu.matmul %291, %292, %cst_118 {dimension_numbers = #tpu.dot_dimension_numbers<[1], [0], [0], [1], [0, 0, 1, 1], [], []>} : vector<32x32xbf16>, vector<32x32xbf16>, vector<32x32xf32> -> vector<32x32xf32>
    %294 = tpu.reciprocal %290 {approx = true} : vector<32x1xf32> -> vector<32x1xf32>
    %295 = vector.broadcast %294 : vector<32x1xf32> to vector<32x32xf32>
    %296 = arith.mulf %293, %295 : vector<32x32xf32>
    %297 = vector.extract_strided_slice %188 {offsets = [96, 0], sizes = [32, 128], strides = [1, 1]} : vector<128x128xbf16> to vector<32x128xbf16>
    %298 = arith.truncf %296 : vector<32x32xf32> to vector<32x32xbf16>
    %cst_119 = arith.constant dense<0.000000e+00> : vector<32x128xf32>
    %299 = tpu.matmul %298, %297, %cst_119 {dimension_numbers = #tpu.dot_dimension_numbers<[1], [0], [0], [1], [0, 0, 1, 1], [], []>} : vector<32x32xbf16>, vector<32x128xbf16>, vector<32x128xf32> -> vector<32x128xf32>
    %300 = arith.addf %276, %299 : vector<32x128xf32>
    %301 = arith.truncf %300 : vector<32x128xf32> to vector<32x128xbf16>
    %cst_120 = arith.constant dense<0.000000e+00> : vector<32x128xf32>
    %302 = tpu.matmul %301, %192, %cst_120 {dimension_numbers = #tpu.dot_dimension_numbers<[1], [0], [0], [1], [0, 0, 1, 1], [], []>} : vector<32x128xbf16>, vector<128x128xbf16>, vector<32x128xf32> -> vector<32x128xf32>
    %303 = vector.broadcast %194 : vector<1x128xf32> to vector<32x128xf32>
    %304 = arith.addf %302, %303 : vector<32x128xf32>
    %cst_121 = arith.constant 0.000000e+00 : f32
    %305 = vector.broadcast %cst_121 : f32 to vector<32x128xf32>
    %306 = arith.maximumf %304, %305 : vector<32x128xf32>
    %307 = arith.truncf %306 : vector<32x128xf32> to vector<32x128xbf16>
    %cst_122 = arith.constant dense<0.000000e+00> : vector<32x128xf32>
    %308 = tpu.matmul %307, %196, %cst_122 {dimension_numbers = #tpu.dot_dimension_numbers<[1], [0], [0], [1], [0, 0, 1, 1], [], []>} : vector<32x128xbf16>, vector<128x128xbf16>, vector<32x128xf32> -> vector<32x128xf32>
    %309 = vector.broadcast %198 : vector<1x128xf32> to vector<32x128xf32>
    %310 = arith.addf %308, %309 : vector<32x128xf32>
    %311 = arith.addf %300, %310 : vector<32x128xf32>
    %c2 = arith.constant 2 : index
    %c0_123 = arith.constant 0 : index
    %c0_124 = arith.constant 0 : index
    %312 = vector.load %arg8[%c2, %c0_123, %c0_124] : memref<3x128x384xbf16, #tpu.memory_space<vmem>>, vector<1x128x384xbf16>
    %313 = vector.shape_cast %312 : vector<1x128x384xbf16> to vector<128x384xbf16>
    %c2_125 = arith.constant 2 : index
    %c0_126 = arith.constant 0 : index
    %c0_127 = arith.constant 0 : index
    %314 = vector.load %arg9[%c2_125, %c0_126, %c0_127] : memref<3x1x384xf32, #tpu.memory_space<vmem>>, vector<1x1x384xf32>
    %315 = vector.shape_cast %314 : vector<1x1x384xf32> to vector<1x384xf32>
    %c2_128 = arith.constant 2 : index
    %c0_129 = arith.constant 0 : index
    %c0_130 = arith.constant 0 : index
    %316 = vector.load %arg10[%c2_128, %c0_129, %c0_130] : memref<3x128x128xbf16, #tpu.memory_space<vmem>>, vector<1x128x128xbf16>
    %317 = vector.shape_cast %316 : vector<1x128x128xbf16> to vector<128x128xbf16>
    %c2_131 = arith.constant 2 : index
    %c0_132 = arith.constant 0 : index
    %c0_133 = arith.constant 0 : index
    %318 = vector.load %arg11[%c2_131, %c0_132, %c0_133] : memref<3x1x128xf32, #tpu.memory_space<vmem>>, vector<1x1x128xf32>
    %319 = vector.shape_cast %318 : vector<1x1x128xf32> to vector<1x128xf32>
    %c2_134 = arith.constant 2 : index
    %c0_135 = arith.constant 0 : index
    %c0_136 = arith.constant 0 : index
    %320 = vector.load %arg12[%c2_134, %c0_135, %c0_136] : memref<3x128x128xbf16, #tpu.memory_space<vmem>>, vector<1x128x128xbf16>
    %321 = vector.shape_cast %320 : vector<1x128x128xbf16> to vector<128x128xbf16>
    %c2_137 = arith.constant 2 : index
    %c0_138 = arith.constant 0 : index
    %c0_139 = arith.constant 0 : index
    %322 = vector.load %arg13[%c2_137, %c0_138, %c0_139] : memref<3x1x128xf32, #tpu.memory_space<vmem>>, vector<1x1x128xf32>
    %323 = vector.shape_cast %322 : vector<1x1x128xf32> to vector<1x128xf32>
    %c2_140 = arith.constant 2 : index
    %c0_141 = arith.constant 0 : index
    %c0_142 = arith.constant 0 : index
    %324 = vector.load %arg14[%c2_140, %c0_141, %c0_142] : memref<3x128x128xbf16, #tpu.memory_space<vmem>>, vector<1x128x128xbf16>
    %325 = vector.shape_cast %324 : vector<1x128x128xbf16> to vector<128x128xbf16>
    %c2_143 = arith.constant 2 : index
    %c0_144 = arith.constant 0 : index
    %c0_145 = arith.constant 0 : index
    %326 = vector.load %arg15[%c2_143, %c0_144, %c0_145] : memref<3x1x128xf32, #tpu.memory_space<vmem>>, vector<1x1x128xf32>
    %327 = vector.shape_cast %326 : vector<1x1x128xf32> to vector<1x128xf32>
    %328 = arith.truncf %311 : vector<32x128xf32> to vector<32x128xbf16>
    %cst_146 = arith.constant dense<0.000000e+00> : vector<32x384xf32>
    %329 = tpu.matmul %328, %313, %cst_146 {dimension_numbers = #tpu.dot_dimension_numbers<[1], [0], [0], [1], [0, 0, 1, 1], [], []>} : vector<32x128xbf16>, vector<128x384xbf16>, vector<32x384xf32> -> vector<32x384xf32>
    %330 = vector.broadcast %315 : vector<1x384xf32> to vector<32x384xf32>
    %331 = arith.addf %329, %330 : vector<32x384xf32>
    %332 = vector.broadcast %319 : vector<1x128xf32> to vector<32x128xf32>
    %333 = arith.addf %311, %332 : vector<32x128xf32>
    %334 = vector.extract_strided_slice %331 {offsets = [0, 0], sizes = [32, 32], strides = [1, 1]} : vector<32x384xf32> to vector<32x32xf32>
    %335 = vector.extract_strided_slice %331 {offsets = [0, 128], sizes = [32, 32], strides = [1, 1]} : vector<32x384xf32> to vector<32x32xf32>
    %336 = vector.extract_strided_slice %331 {offsets = [0, 256], sizes = [32, 32], strides = [1, 1]} : vector<32x384xf32> to vector<32x32xf32>
    %337 = arith.truncf %334 : vector<32x32xf32> to vector<32x32xbf16>
    %338 = arith.truncf %335 : vector<32x32xf32> to vector<32x32xbf16>
    %cst_147 = arith.constant dense<0.000000e+00> : vector<32x32xf32>
    %339 = tpu.matmul %337, %338, %cst_147 {dimension_numbers = #tpu.dot_dimension_numbers<[1], [1], [0], [0], [0, 0, 1, 0], [], []>} : vector<32x32xbf16>, vector<32x32xbf16>, vector<32x32xf32> -> vector<32x32xf32>
    %340 = arith.addf %339, %53 : vector<32x32xf32>
    %cst_148 = arith.constant dense<0xFF800000> : vector<32xf32>
    %341 = vector.multi_reduction <maximumf>, %340, %cst_148 [1] : vector<32x32xf32> to vector<32xf32>
    %342 = vector.shape_cast %341 : vector<32xf32> to vector<32x1xf32>
    %343 = vector.broadcast %342 : vector<32x1xf32> to vector<32x32xf32>
    %344 = arith.subf %340, %343 : vector<32x32xf32>
    %345 = math.exp %344 : vector<32x32xf32>
    %cst_149 = arith.constant dense<0.000000e+00> : vector<32xf32>
    %346 = vector.multi_reduction <add>, %345, %cst_149 [1] : vector<32x32xf32> to vector<32xf32>
    %347 = vector.shape_cast %346 : vector<32xf32> to vector<32x1xf32>
    %348 = arith.truncf %345 : vector<32x32xf32> to vector<32x32xbf16>
    %349 = arith.truncf %336 : vector<32x32xf32> to vector<32x32xbf16>
    %cst_150 = arith.constant dense<0.000000e+00> : vector<32x32xf32>
    %350 = tpu.matmul %348, %349, %cst_150 {dimension_numbers = #tpu.dot_dimension_numbers<[1], [0], [0], [1], [0, 0, 1, 1], [], []>} : vector<32x32xbf16>, vector<32x32xbf16>, vector<32x32xf32> -> vector<32x32xf32>
    %351 = tpu.reciprocal %347 {approx = true} : vector<32x1xf32> -> vector<32x1xf32>
    %352 = vector.broadcast %351 : vector<32x1xf32> to vector<32x32xf32>
    %353 = arith.mulf %350, %352 : vector<32x32xf32>
    %354 = vector.extract_strided_slice %317 {offsets = [0, 0], sizes = [32, 128], strides = [1, 1]} : vector<128x128xbf16> to vector<32x128xbf16>
    %355 = arith.truncf %353 : vector<32x32xf32> to vector<32x32xbf16>
    %cst_151 = arith.constant dense<0.000000e+00> : vector<32x128xf32>
    %356 = tpu.matmul %355, %354, %cst_151 {dimension_numbers = #tpu.dot_dimension_numbers<[1], [0], [0], [1], [0, 0, 1, 1], [], []>} : vector<32x32xbf16>, vector<32x128xbf16>, vector<32x128xf32> -> vector<32x128xf32>
    %357 = arith.addf %333, %356 : vector<32x128xf32>
    %358 = vector.extract_strided_slice %331 {offsets = [0, 32], sizes = [32, 32], strides = [1, 1]} : vector<32x384xf32> to vector<32x32xf32>
    %359 = vector.extract_strided_slice %331 {offsets = [0, 160], sizes = [32, 32], strides = [1, 1]} : vector<32x384xf32> to vector<32x32xf32>
    %360 = vector.extract_strided_slice %331 {offsets = [0, 288], sizes = [32, 32], strides = [1, 1]} : vector<32x384xf32> to vector<32x32xf32>
    %361 = arith.truncf %358 : vector<32x32xf32> to vector<32x32xbf16>
    %362 = arith.truncf %359 : vector<32x32xf32> to vector<32x32xbf16>
    %cst_152 = arith.constant dense<0.000000e+00> : vector<32x32xf32>
    %363 = tpu.matmul %361, %362, %cst_152 {dimension_numbers = #tpu.dot_dimension_numbers<[1], [1], [0], [0], [0, 0, 1, 0], [], []>} : vector<32x32xbf16>, vector<32x32xbf16>, vector<32x32xf32> -> vector<32x32xf32>
    %364 = arith.addf %363, %53 : vector<32x32xf32>
    %cst_153 = arith.constant dense<0xFF800000> : vector<32xf32>
    %365 = vector.multi_reduction <maximumf>, %364, %cst_153 [1] : vector<32x32xf32> to vector<32xf32>
    %366 = vector.shape_cast %365 : vector<32xf32> to vector<32x1xf32>
    %367 = vector.broadcast %366 : vector<32x1xf32> to vector<32x32xf32>
    %368 = arith.subf %364, %367 : vector<32x32xf32>
    %369 = math.exp %368 : vector<32x32xf32>
    %cst_154 = arith.constant dense<0.000000e+00> : vector<32xf32>
    %370 = vector.multi_reduction <add>, %369, %cst_154 [1] : vector<32x32xf32> to vector<32xf32>
    %371 = vector.shape_cast %370 : vector<32xf32> to vector<32x1xf32>
    %372 = arith.truncf %369 : vector<32x32xf32> to vector<32x32xbf16>
    %373 = arith.truncf %360 : vector<32x32xf32> to vector<32x32xbf16>
    %cst_155 = arith.constant dense<0.000000e+00> : vector<32x32xf32>
    %374 = tpu.matmul %372, %373, %cst_155 {dimension_numbers = #tpu.dot_dimension_numbers<[1], [0], [0], [1], [0, 0, 1, 1], [], []>} : vector<32x32xbf16>, vector<32x32xbf16>, vector<32x32xf32> -> vector<32x32xf32>
    %375 = tpu.reciprocal %371 {approx = true} : vector<32x1xf32> -> vector<32x1xf32>
    %376 = vector.broadcast %375 : vector<32x1xf32> to vector<32x32xf32>
    %377 = arith.mulf %374, %376 : vector<32x32xf32>
    %378 = vector.extract_strided_slice %317 {offsets = [32, 0], sizes = [32, 128], strides = [1, 1]} : vector<128x128xbf16> to vector<32x128xbf16>
    %379 = arith.truncf %377 : vector<32x32xf32> to vector<32x32xbf16>
    %cst_156 = arith.constant dense<0.000000e+00> : vector<32x128xf32>
    %380 = tpu.matmul %379, %378, %cst_156 {dimension_numbers = #tpu.dot_dimension_numbers<[1], [0], [0], [1], [0, 0, 1, 1], [], []>} : vector<32x32xbf16>, vector<32x128xbf16>, vector<32x128xf32> -> vector<32x128xf32>
    %381 = arith.addf %357, %380 : vector<32x128xf32>
    %382 = vector.extract_strided_slice %331 {offsets = [0, 64], sizes = [32, 32], strides = [1, 1]} : vector<32x384xf32> to vector<32x32xf32>
    %383 = vector.extract_strided_slice %331 {offsets = [0, 192], sizes = [32, 32], strides = [1, 1]} : vector<32x384xf32> to vector<32x32xf32>
    %384 = vector.extract_strided_slice %331 {offsets = [0, 320], sizes = [32, 32], strides = [1, 1]} : vector<32x384xf32> to vector<32x32xf32>
    %385 = arith.truncf %382 : vector<32x32xf32> to vector<32x32xbf16>
    %386 = arith.truncf %383 : vector<32x32xf32> to vector<32x32xbf16>
    %cst_157 = arith.constant dense<0.000000e+00> : vector<32x32xf32>
    %387 = tpu.matmul %385, %386, %cst_157 {dimension_numbers = #tpu.dot_dimension_numbers<[1], [1], [0], [0], [0, 0, 1, 0], [], []>} : vector<32x32xbf16>, vector<32x32xbf16>, vector<32x32xf32> -> vector<32x32xf32>
    %388 = arith.addf %387, %53 : vector<32x32xf32>
    %cst_158 = arith.constant dense<0xFF800000> : vector<32xf32>
    %389 = vector.multi_reduction <maximumf>, %388, %cst_158 [1] : vector<32x32xf32> to vector<32xf32>
    %390 = vector.shape_cast %389 : vector<32xf32> to vector<32x1xf32>
    %391 = vector.broadcast %390 : vector<32x1xf32> to vector<32x32xf32>
    %392 = arith.subf %388, %391 : vector<32x32xf32>
    %393 = math.exp %392 : vector<32x32xf32>
    %cst_159 = arith.constant dense<0.000000e+00> : vector<32xf32>
    %394 = vector.multi_reduction <add>, %393, %cst_159 [1] : vector<32x32xf32> to vector<32xf32>
    %395 = vector.shape_cast %394 : vector<32xf32> to vector<32x1xf32>
    %396 = arith.truncf %393 : vector<32x32xf32> to vector<32x32xbf16>
    %397 = arith.truncf %384 : vector<32x32xf32> to vector<32x32xbf16>
    %cst_160 = arith.constant dense<0.000000e+00> : vector<32x32xf32>
    %398 = tpu.matmul %396, %397, %cst_160 {dimension_numbers = #tpu.dot_dimension_numbers<[1], [0], [0], [1], [0, 0, 1, 1], [], []>} : vector<32x32xbf16>, vector<32x32xbf16>, vector<32x32xf32> -> vector<32x32xf32>
    %399 = tpu.reciprocal %395 {approx = true} : vector<32x1xf32> -> vector<32x1xf32>
    %400 = vector.broadcast %399 : vector<32x1xf32> to vector<32x32xf32>
    %401 = arith.mulf %398, %400 : vector<32x32xf32>
    %402 = vector.extract_strided_slice %317 {offsets = [64, 0], sizes = [32, 128], strides = [1, 1]} : vector<128x128xbf16> to vector<32x128xbf16>
    %403 = arith.truncf %401 : vector<32x32xf32> to vector<32x32xbf16>
    %cst_161 = arith.constant dense<0.000000e+00> : vector<32x128xf32>
    %404 = tpu.matmul %403, %402, %cst_161 {dimension_numbers = #tpu.dot_dimension_numbers<[1], [0], [0], [1], [0, 0, 1, 1], [], []>} : vector<32x32xbf16>, vector<32x128xbf16>, vector<32x128xf32> -> vector<32x128xf32>
    %405 = arith.addf %381, %404 : vector<32x128xf32>
    %406 = vector.extract_strided_slice %331 {offsets = [0, 96], sizes = [32, 32], strides = [1, 1]} : vector<32x384xf32> to vector<32x32xf32>
    %407 = vector.extract_strided_slice %331 {offsets = [0, 224], sizes = [32, 32], strides = [1, 1]} : vector<32x384xf32> to vector<32x32xf32>
    %408 = vector.extract_strided_slice %331 {offsets = [0, 352], sizes = [32, 32], strides = [1, 1]} : vector<32x384xf32> to vector<32x32xf32>
    %409 = arith.truncf %406 : vector<32x32xf32> to vector<32x32xbf16>
    %410 = arith.truncf %407 : vector<32x32xf32> to vector<32x32xbf16>
    %cst_162 = arith.constant dense<0.000000e+00> : vector<32x32xf32>
    %411 = tpu.matmul %409, %410, %cst_162 {dimension_numbers = #tpu.dot_dimension_numbers<[1], [1], [0], [0], [0, 0, 1, 0], [], []>} : vector<32x32xbf16>, vector<32x32xbf16>, vector<32x32xf32> -> vector<32x32xf32>
    %412 = arith.addf %411, %53 : vector<32x32xf32>
    %cst_163 = arith.constant dense<0xFF800000> : vector<32xf32>
    %413 = vector.multi_reduction <maximumf>, %412, %cst_163 [1] : vector<32x32xf32> to vector<32xf32>
    %414 = vector.shape_cast %413 : vector<32xf32> to vector<32x1xf32>
    %415 = vector.broadcast %414 : vector<32x1xf32> to vector<32x32xf32>
    %416 = arith.subf %412, %415 : vector<32x32xf32>
    %417 = math.exp %416 : vector<32x32xf32>
    %cst_164 = arith.constant dense<0.000000e+00> : vector<32xf32>
    %418 = vector.multi_reduction <add>, %417, %cst_164 [1] : vector<32x32xf32> to vector<32xf32>
    %419 = vector.shape_cast %418 : vector<32xf32> to vector<32x1xf32>
    %420 = arith.truncf %417 : vector<32x32xf32> to vector<32x32xbf16>
    %421 = arith.truncf %408 : vector<32x32xf32> to vector<32x32xbf16>
    %cst_165 = arith.constant dense<0.000000e+00> : vector<32x32xf32>
    %422 = tpu.matmul %420, %421, %cst_165 {dimension_numbers = #tpu.dot_dimension_numbers<[1], [0], [0], [1], [0, 0, 1, 1], [], []>} : vector<32x32xbf16>, vector<32x32xbf16>, vector<32x32xf32> -> vector<32x32xf32>
    %423 = tpu.reciprocal %419 {approx = true} : vector<32x1xf32> -> vector<32x1xf32>
    %424 = vector.broadcast %423 : vector<32x1xf32> to vector<32x32xf32>
    %425 = arith.mulf %422, %424 : vector<32x32xf32>
    %426 = vector.extract_strided_slice %317 {offsets = [96, 0], sizes = [32, 128], strides = [1, 1]} : vector<128x128xbf16> to vector<32x128xbf16>
    %427 = arith.truncf %425 : vector<32x32xf32> to vector<32x32xbf16>
    %cst_166 = arith.constant dense<0.000000e+00> : vector<32x128xf32>
    %428 = tpu.matmul %427, %426, %cst_166 {dimension_numbers = #tpu.dot_dimension_numbers<[1], [0], [0], [1], [0, 0, 1, 1], [], []>} : vector<32x32xbf16>, vector<32x128xbf16>, vector<32x128xf32> -> vector<32x128xf32>
    %429 = arith.addf %405, %428 : vector<32x128xf32>
    %430 = arith.truncf %429 : vector<32x128xf32> to vector<32x128xbf16>
    %cst_167 = arith.constant dense<0.000000e+00> : vector<32x128xf32>
    %431 = tpu.matmul %430, %321, %cst_167 {dimension_numbers = #tpu.dot_dimension_numbers<[1], [0], [0], [1], [0, 0, 1, 1], [], []>} : vector<32x128xbf16>, vector<128x128xbf16>, vector<32x128xf32> -> vector<32x128xf32>
    %432 = vector.broadcast %323 : vector<1x128xf32> to vector<32x128xf32>
    %433 = arith.addf %431, %432 : vector<32x128xf32>
    %cst_168 = arith.constant 0.000000e+00 : f32
    %434 = vector.broadcast %cst_168 : f32 to vector<32x128xf32>
    %435 = arith.maximumf %433, %434 : vector<32x128xf32>
    %436 = arith.truncf %435 : vector<32x128xf32> to vector<32x128xbf16>
    %cst_169 = arith.constant dense<0.000000e+00> : vector<32x128xf32>
    %437 = tpu.matmul %436, %325, %cst_169 {dimension_numbers = #tpu.dot_dimension_numbers<[1], [0], [0], [1], [0, 0, 1, 1], [], []>} : vector<32x128xbf16>, vector<128x128xbf16>, vector<32x128xf32> -> vector<32x128xf32>
    %438 = vector.broadcast %327 : vector<1x128xf32> to vector<32x128xf32>
    %439 = arith.addf %437, %438 : vector<32x128xf32>
    %440 = arith.addf %429, %439 : vector<32x128xf32>
    %c0_170 = arith.constant 0 : index
    %c0_171 = arith.constant 0 : index
    %441 = vector.load %arg16[%c0_170, %c0_171] : memref<128x64xbf16, #tpu.memory_space<vmem>>, vector<128x64xbf16>
    %442 = arith.truncf %440 : vector<32x128xf32> to vector<32x128xbf16>
    %cst_172 = arith.constant dense<0.000000e+00> : vector<32x64xf32>
    %443 = tpu.matmul %442, %441, %cst_172 {dimension_numbers = #tpu.dot_dimension_numbers<[1], [0], [0], [1], [0, 0, 1, 1], [], []>} : vector<32x128xbf16>, vector<128x64xbf16>, vector<32x64xf32> -> vector<32x64xf32>
    %cst_173 = arith.constant dense<0.000000e+00> : vector<64xf32>
    %444 = vector.multi_reduction <add>, %443, %cst_173 [0] : vector<32x64xf32> to vector<64xf32>
    %445 = vector.shape_cast %444 : vector<64xf32> to vector<1x64xf32>
    %cst_174 = arith.constant 0.027777778 : f32
    %446 = vector.broadcast %cst_174 : f32 to vector<1x64xf32>
    %447 = arith.mulf %445, %446 : vector<1x64xf32>
    %448 = vector.broadcast %447 : vector<1x64xf32> to vector<32x64xf32>
    %449 = arith.subf %443, %448 : vector<32x64xf32>
    %450 = arith.mulf %449, %449 : vector<32x64xf32>
    %cst_175 = arith.constant dense<0.000000e+00> : vector<64xf32>
    %451 = vector.multi_reduction <add>, %450, %cst_175 [0] : vector<32x64xf32> to vector<64xf32>
    %452 = vector.shape_cast %451 : vector<64xf32> to vector<1x64xf32>
    %453 = arith.mulf %447, %447 : vector<1x64xf32>
    %cst_176 = arith.constant 4.000000e+00 : f32
    %454 = vector.broadcast %cst_176 : f32 to vector<1x64xf32>
    %455 = arith.mulf %454, %453 : vector<1x64xf32>
    %456 = arith.addf %452, %455 : vector<1x64xf32>
    %cst_177 = arith.constant 0.027777778 : f32
    %457 = vector.broadcast %cst_177 : f32 to vector<1x64xf32>
    %458 = arith.mulf %456, %457 : vector<1x64xf32>
    %cst_178 = arith.constant 9.99999974E-6 : f32
    %459 = vector.broadcast %cst_178 : f32 to vector<1x64xf32>
    %460 = arith.addf %458, %459 : vector<1x64xf32>
    %461 = math.rsqrt %460 : vector<1x64xf32>
    %c0_179 = arith.constant 0 : index
    %c0_180 = arith.constant 0 : index
    %462 = vector.load %arg17[%c0_179, %c0_180] : memref<1x64xf32, #tpu.memory_space<vmem>>, vector<1x64xf32>
    %463 = arith.mulf %461, %462 : vector<1x64xf32>
    %c0_181 = arith.constant 0 : index
    %c0_182 = arith.constant 0 : index
    %464 = vector.load %arg18[%c0_181, %c0_182] : memref<1x64xf32, #tpu.memory_space<vmem>>, vector<1x64xf32>
    %465 = arith.mulf %447, %463 : vector<1x64xf32>
    %466 = arith.subf %464, %465 : vector<1x64xf32>
    %467 = vector.broadcast %463 : vector<1x64xf32> to vector<32x64xf32>
    %468 = arith.mulf %443, %467 : vector<32x64xf32>
    %469 = vector.broadcast %466 : vector<1x64xf32> to vector<32x64xf32>
    %470 = arith.addf %468, %469 : vector<32x64xf32>
    %cst_183 = arith.constant 0.000000e+00 : f32
    %471 = vector.broadcast %cst_183 : f32 to vector<32x64xf32>
    %472 = arith.maximumf %470, %471 : vector<32x64xf32>
    %cst_184 = arith.constant 0.000000e+00 : f32
    %473 = vector.broadcast %cst_184 : f32 to vector<1x64xf32>
    %474 = arith.maximumf %466, %473 : vector<1x64xf32>
    %c0_185 = arith.constant 0 : index
    %c0_186 = arith.constant 0 : index
    %475 = vector.load %arg19[%c0_185, %c0_186] : memref<64x64xbf16, #tpu.memory_space<vmem>>, vector<64x64xbf16>
    %476 = arith.truncf %472 : vector<32x64xf32> to vector<32x64xbf16>
    %cst_187 = arith.constant dense<0.000000e+00> : vector<32x64xf32>
    %477 = tpu.matmul %476, %475, %cst_187 {dimension_numbers = #tpu.dot_dimension_numbers<[1], [0], [0], [1], [0, 0, 1, 1], [], []>} : vector<32x64xbf16>, vector<64x64xbf16>, vector<32x64xf32> -> vector<32x64xf32>
    %c0_188 = arith.constant 0 : index
    %c0_189 = arith.constant 0 : index
    %478 = vector.load %arg19[%c0_188, %c0_189] : memref<64x64xbf16, #tpu.memory_space<vmem>>, vector<64x64xbf16>
    %479 = arith.truncf %474 : vector<1x64xf32> to vector<1x64xbf16>
    %cst_190 = arith.constant dense<0.000000e+00> : vector<1x64xf32>
    %480 = tpu.matmul %479, %478, %cst_190 {dimension_numbers = #tpu.dot_dimension_numbers<[1], [0], [0], [1], [0, 0, 1, 1], [], []>} : vector<1x64xbf16>, vector<64x64xbf16>, vector<1x64xf32> -> vector<1x64xf32>
    %cst_191 = arith.constant dense<0.000000e+00> : vector<64xf32>
    %481 = vector.multi_reduction <add>, %477, %cst_191 [0] : vector<32x64xf32> to vector<64xf32>
    %482 = vector.shape_cast %481 : vector<64xf32> to vector<1x64xf32>
    %cst_192 = arith.constant 4.000000e+00 : f32
    %483 = vector.broadcast %cst_192 : f32 to vector<1x64xf32>
    %484 = arith.mulf %483, %480 : vector<1x64xf32>
    %485 = arith.addf %482, %484 : vector<1x64xf32>
    %cst_193 = arith.constant 0.027777778 : f32
    %486 = vector.broadcast %cst_193 : f32 to vector<1x64xf32>
    %487 = arith.mulf %485, %486 : vector<1x64xf32>
    %488 = vector.broadcast %487 : vector<1x64xf32> to vector<32x64xf32>
    %489 = arith.subf %477, %488 : vector<32x64xf32>
    %490 = arith.subf %480, %487 : vector<1x64xf32>
    %491 = arith.mulf %489, %489 : vector<32x64xf32>
    %cst_194 = arith.constant dense<0.000000e+00> : vector<64xf32>
    %492 = vector.multi_reduction <add>, %491, %cst_194 [0] : vector<32x64xf32> to vector<64xf32>
    %493 = vector.shape_cast %492 : vector<64xf32> to vector<1x64xf32>
    %494 = arith.mulf %490, %490 : vector<1x64xf32>
    %cst_195 = arith.constant 4.000000e+00 : f32
    %495 = vector.broadcast %cst_195 : f32 to vector<1x64xf32>
    %496 = arith.mulf %495, %494 : vector<1x64xf32>
    %497 = arith.addf %493, %496 : vector<1x64xf32>
    %cst_196 = arith.constant 0.027777778 : f32
    %498 = vector.broadcast %cst_196 : f32 to vector<1x64xf32>
    %499 = arith.mulf %497, %498 : vector<1x64xf32>
    %cst_197 = arith.constant 9.99999974E-6 : f32
    %500 = vector.broadcast %cst_197 : f32 to vector<1x64xf32>
    %501 = arith.addf %499, %500 : vector<1x64xf32>
    %502 = math.rsqrt %501 : vector<1x64xf32>
    %c0_198 = arith.constant 0 : index
    %c0_199 = arith.constant 0 : index
    %503 = vector.load %arg20[%c0_198, %c0_199] : memref<1x64xf32, #tpu.memory_space<vmem>>, vector<1x64xf32>
    %504 = arith.mulf %502, %503 : vector<1x64xf32>
    %505 = arith.mulf %490, %504 : vector<1x64xf32>
    %c0_200 = arith.constant 0 : index
    %c0_201 = arith.constant 0 : index
    %506 = vector.load %arg21[%c0_200, %c0_201] : memref<1x64xf32, #tpu.memory_space<vmem>>, vector<1x64xf32>
    %507 = arith.addf %505, %506 : vector<1x64xf32>
    %508 = vector.shape_cast %507 : vector<1x64xf32> to vector<1x64xf32>
    %509 = vector.broadcast %508 : vector<1x64xf32> to vector<2x64xf32>
    %c0_202 = arith.constant 0 : index
    %c0_203 = arith.constant 0 : index
    %510 = vector.load %arg22[%c0_202, %c0_203] : memref<2x64xf32, #tpu.memory_space<vmem>>, vector<2x64xf32>
    tpu.vector_store %arg22[%c0_202, %c0_203], %509 {strides = array<i32>} : memref<2x64xf32, #tpu.memory_space<vmem>>, vector<2x64xf32>,
    return
  }
}

</mosaic_0001>

<llo_original>
// kernel: eq.8
$region0: #{eq.8}
  %s0 = inlined_call_operand.vmem [shape: s32[2,16], index: 0, kind: input, shape index: {}]
  %s1 = inlined_call_operand.vmem [shape: s32[32], index: 1, kind: output, shape index: {}]
  $region1: #{eq.8} parent=0
    #allocation0 [shape = 'u8[4096]{0}', space=vmem, size = 0x1000, scoped, tag = 'scoped mem for output reshape']
    #allocation1 [shape = 'u8[4096]{0}', space=vmem, size = 0x1000, scoped, tag = 'scoped mem for input reshape']
    %s3 = ssub.s32 4, 1
    %v4 = vld [vmem:[%s0] sm:%s3]
    %5 = vst [vmem:[#allocation1] sm:%s3] %v4
    %v6 = vld [vmem:[#allocation1] sm:$0x1]
    %vm7 = vcmask 130048
    %8 = vst.msk [vmem:[#allocation0] sm:$0x1] %vm7, %v6
    %s9 = scalar_lea.vmem [#allocation1], 1
    %v10 = vld [vmem:[%s9] sm:$0x1]
    %11 = vrot.lane.b32.xlu0 %v10, 16
    %v12 = vpop.permute.xlu0 %11
    %vm13 = vcmask 261248
    %14 = vst.msk [vmem:[#allocation0] sm:$0x1] %vm13, %v12
    %s16 = ssub.s32 2, 1
    %v17 = vld [vmem:[#allocation0] sm:%s16]
    %s19 = ssub.s32 2, 1
    %20 = vst [vmem:[%s1] sm:%s19] %v17

// kernel: cross_attention_net_fwd.1
$region0: #{cross_attention_net_fwd.1}
  #allocation0 [shape = 'u32[]', space=smem, size = 0x4, offset = 0x4, fixed_abs, tag = 'smem constant byte address 0x4 - core index']
  #allocation1 [shape = 'u32[72,128]{1,0:T(1,128)}', space=vmem, size = 0x9000, scoped, tag = 'internal scratch']
  %s0 = inlined_call_operand.vmem [shape: f32[32,192], index: 0, kind: input, shape index: {}]
  %s1 = inlined_call_operand.vmem [shape: f32[32,32], index: 1, kind: input, shape index: {}]
  %s2 = inlined_call_operand.vmem [shape: bf16[192,64], index: 2, kind: input, shape index: {}]
  %s3 = inlined_call_operand.vmem [shape: f32[1,64], index: 3, kind: input, shape index: {}]
  %s4 = inlined_call_operand.vmem [shape: f32[1,64], index: 4, kind: input, shape index: {}]
  %s5 = inlined_call_operand.vmem [shape: bf16[64,128], index: 5, kind: input, shape index: {}]
  %s6 = inlined_call_operand.vmem [shape: f32[1,128], index: 6, kind: input, shape index: {}]
  %s7 = inlined_call_operand.vmem [shape: f32[1,128], index: 7, kind: input, shape index: {}]
  %s8 = inlined_call_operand.hbm [shape: bf16[3,128,384], index: 8, kind: input, shape index: {}]
  %s9 = inlined_call_operand.vmem [shape: f32[3,1,384], index: 9, kind: input, shape index: {}]
  %s10 = inlined_call_operand.vmem [shape: bf16[3,128,128], index: 10, kind: input, shape index: {}]
  %s11 = inlined_call_operand.vmem [shape: f32[3,1,128], index: 11, kind: input, shape index: {}]
  %s12 = inlined_call_operand.vmem [shape: bf16[3,128,128], index: 12, kind: input, shape index: {}]
  %s13 = inlined_call_operand.vmem [shape: f32[3,1,128], index: 13, kind: input, shape index: {}]
  %s14 = inlined_call_operand.vmem [shape: bf16[3,128,128], index: 14, kind: input, shape index: {}]
  %s15 = inlined_call_operand.vmem [shape: f32[3,1,128], index: 15, kind: input, shape index: {}]
  %s16 = inlined_call_operand.vmem [shape: bf16[128,64], index: 16, kind: input, shape index: {}]
  %s17 = inlined_call_operand.vmem [shape: f32[1,64], index: 17, kind: input, shape index: {}]
  %s18 = inlined_call_operand.vmem [shape: f32[1,64], index: 18, kind: input, shape index: {}]
  %s19 = inlined_call_operand.vmem [shape: bf16[64,64], index: 19, kind: input, shape index: {}]
  %s20 = inlined_call_operand.vmem [shape: f32[1,64], index: 20, kind: input, shape index: {}]
  %s21 = inlined_call_operand.vmem [shape: f32[1,64], index: 21, kind: input, shape index: {}]
  %s22 = inlined_call_operand.hbm [shape: f32[2,64], index: 22, kind: output, shape index: {}]
  %s23 = sld [smem:[#allocation0]]
  $region102: #{cross_attention_net_fwd.1} parent=0
    _
  %s25 = ssub.s32 1, %s23
  %s26 = scalar_select 0, %s25, %s23
  $region1: #{cross_attention_net_fwd.1} parent=0
    #allocation2 [shape = 'u8[294912]{0}', space=vmem, size = 0x48000, scoped, tag = 'input window, operand 8, single buffered']
    #allocation3 [shape = 's32[1]{0}', space=sflag, size = 0x4, scoped, tag = 'scoped memory for cross_attention_net_fwd.1']
    #allocation4 [shape = 's32[1]{0}', space=sflag, size = 0x4, scoped, tag = 'scoped memory for cross_attention_net_fwd.1']
    #allocation5 [shape = 'u8[1024]{0}', space=vmem, size = 0x400, scoped, tag = 'output window, operand 0, single buffered']
    %27 = vsyncpa [#allocation3], 0
    %28 = vsyncpa [#allocation4], 0
    // Predicated region
    $region2: #{cross_attention_net_fwd.1} parent=1 // pred_check
      _
    $region3: #{cross_attention_net_fwd.1} parent=1 // pred_check_branch
      %30 = sbr.rel (0) target = $region5
    $region4: #{cross_attention_net_fwd.1} parent=1 // pred_region
      _
    $region5: #{cross_attention_net_fwd.1} parent=1 // pred_fallthru
      _
    // Predicated region
    $region6: #{cross_attention_net_fwd.1} parent=1 // pred_check
      _
    $region7: #{cross_attention_net_fwd.1} parent=1 // pred_check_branch
      %32 = sbr.rel (0) target = $region9
    $region8: #{cross_attention_net_fwd.1} parent=1 // pred_region
      _
    $region9: #{cross_attention_net_fwd.1} parent=1 // pred_fallthru
      _
    // Predicated region
    $region10: #{cross_attention_net_fwd.1} parent=1 // pred_check
      _
    $region11: #{cross_attention_net_fwd.1} parent=1 // pred_check_branch
      %34 = sbr.rel (0) target = $region13
    $region12: #{cross_attention_net_fwd.1} parent=1 // pred_region
      _
    $region13: #{cross_attention_net_fwd.1} parent=1 // pred_fallthru
      _
    // Predicated region
    $region14: #{cross_attention_net_fwd.1} parent=1 // pred_check
      _
    $region15: #{cross_attention_net_fwd.1} parent=1 // pred_check_branch
      %36 = sbr.rel (0) target = $region17
    $region16: #{cross_attention_net_fwd.1} parent=1 // pred_region
      _
    $region17: #{cross_attention_net_fwd.1} parent=1 // pred_fallthru
      _
    // Predicated region
    $region18: #{cross_attention_net_fwd.1} parent=1 // pred_check
      _
    $region19: #{cross_attention_net_fwd.1} parent=1 // pred_check_branch
      %38 = sbr.rel (0) target = $region21
    $region20: #{cross_attention_net_fwd.1} parent=1 // pred_region
      _
    $region21: #{cross_attention_net_fwd.1} parent=1 // pred_fallthru
      _
    // Predicated region
    $region22: #{cross_attention_net_fwd.1} parent=1 // pred_check
      _
    $region23: #{cross_attention_net_fwd.1} parent=1 // pred_check_branch
      %40 = sbr.rel (0) target = $region25
    $region24: #{cross_attention_net_fwd.1} parent=1 // pred_region
      _
    $region25: #{cross_attention_net_fwd.1} parent=1 // pred_fallthru
      _
    // Predicated region
    $region26: #{cross_attention_net_fwd.1} parent=1 // pred_check
      _
    $region27: #{cross_attention_net_fwd.1} parent=1 // pred_check_branch
      %42 = sbr.rel (0) target = $region29
    $region28: #{cross_attention_net_fwd.1} parent=1 // pred_region
      _
    $region29: #{cross_attention_net_fwd.1} parent=1 // pred_fallthru
      _
    // Predicated region
    $region30: #{cross_attention_net_fwd.1} parent=1 // pred_check
      _
    $region31: #{cross_attention_net_fwd.1} parent=1 // pred_check_branch
      %44 = sbr.rel (0) target = $region33
    $region32: #{cross_attention_net_fwd.1} parent=1 // pred_region
      _
    $region33: #{cross_attention_net_fwd.1} parent=1 // pred_fallthru
      _
    // Predicated region
    $region34: #{cross_attention_net_fwd.1} parent=1 // pred_check
      _
    $region35: #{cross_attention_net_fwd.1} parent=1 // pred_check_branch
      %46 = sbr.rel (0) target = $region37
    $region36: #{cross_attention_net_fwd.1} parent=1 // pred_region
      %48 = vsyncadd [#allocation3], 0
      %s49 = sshll.u32 %s8, 4
      %s50 = int_to_ptr.hbm [resolvable:$true] %s49
      %s51 = sshll.u32 [#allocation2], 4
      %s52 = int_to_ptr.vmem [resolvable:$true] %s51
      %57 = dma.hbm_to_vmem [thread:$0]  %s50, 9216, %s52, [#allocation3], 192, 192, 12
    $region37: #{cross_attention_net_fwd.1} parent=1 // pred_fallthru
      _
    // Predicated region
    $region38: #{cross_attention_net_fwd.1} parent=1 // pred_check
      _
    $region39: #{cross_attention_net_fwd.1} parent=1 // pred_check_branch
      %59 = sbr.rel (0) target = $region41
    $region40: #{cross_attention_net_fwd.1} parent=1 // pred_region
      _
    $region41: #{cross_attention_net_fwd.1} parent=1 // pred_fallthru
      _
    // Predicated region
    $region42: #{cross_attention_net_fwd.1} parent=1 // pred_check
      _
    $region43: #{cross_attention_net_fwd.1} parent=1 // pred_check_branch
      %61 = sbr.rel (0) target = $region45
    $region44: #{cross_attention_net_fwd.1} parent=1 // pred_region
      _
    $region45: #{cross_attention_net_fwd.1} parent=1 // pred_fallthru
      _
    // Predicated region
    $region46: #{cross_attention_net_fwd.1} parent=1 // pred_check
      _
    $region47: #{cross_attention_net_fwd.1} parent=1 // pred_check_branch
      %63 = sbr.rel (0) target = $region49
    $region48: #{cross_attention_net_fwd.1} parent=1 // pred_region
      _
    $region49: #{cross_attention_net_fwd.1} parent=1 // pred_fallthru
      _
    // Predicated region
    $region50: #{cross_attention_net_fwd.1} parent=1 // pred_check
      _
    $region51: #{cross_attention_net_fwd.1} parent=1 // pred_check_branch
      %65 = sbr.rel (0) target = $region53
    $region52: #{cross_attention_net_fwd.1} parent=1 // pred_region
      _
    $region53: #{cross_attention_net_fwd.1} parent=1 // pred_fallthru
      _
    // Predicated region
    $region54: #{cross_attention_net_fwd.1} parent=1 // pred_check
      _
    $region55: #{cross_attention_net_fwd.1} parent=1 // pred_check_branch
      %67 = sbr.rel (0) target = $region57
    $region56: #{cross_attention_net_fwd.1} parent=1 // pred_region
      _
    $region57: #{cross_attention_net_fwd.1} parent=1 // pred_fallthru
      _
    // Predicated region
    $region58: #{cross_attention_net_fwd.1} parent=1 // pred_check
      _
    $region59: #{cross_attention_net_fwd.1} parent=1 // pred_check_branch
      %69 = sbr.rel (0) target = $region61
    $region60: #{cross_attention_net_fwd.1} parent=1 // pred_region
      _
    $region61: #{cross_attention_net_fwd.1} parent=1 // pred_fallthru
      _
    // Predicated region
    $region62: #{cross_attention_net_fwd.1} parent=1 // pred_check
      _
    $region63: #{cross_attention_net_fwd.1} parent=1 // pred_check_branch
      %71 = sbr.rel (0) target = $region65
    $region64: #{cross_attention_net_fwd.1} parent=1 // pred_region
      _
    $region65: #{cross_attention_net_fwd.1} parent=1 // pred_fallthru
      _
    // Predicated region
    $region66: #{cross_attention_net_fwd.1} parent=1 // pred_check
      _
    $region67: #{cross_attention_net_fwd.1} parent=1 // pred_check_branch
      %73 = sbr.rel (0) target = $region69
    $region68: #{cross_attention_net_fwd.1} parent=1 // pred_region
      _
    $region69: #{cross_attention_net_fwd.1} parent=1 // pred_fallthru
      _
    // Predicated region
    $region70: #{cross_attention_net_fwd.1} parent=1 // pred_check
      _
    $region71: #{cross_attention_net_fwd.1} parent=1 // pred_check_branch
      %75 = sbr.rel (0) target = $region73
    $region72: #{cross_attention_net_fwd.1} parent=1 // pred_region
      _
    $region73: #{cross_attention_net_fwd.1} parent=1 // pred_fallthru
      _
    // Predicated region
    $region74: #{cross_attention_net_fwd.1} parent=1 // pred_check
      _
    $region75: #{cross_attention_net_fwd.1} parent=1 // pred_check_branch
      %77 = sbr.rel (0) target = $region77
    $region76: #{cross_attention_net_fwd.1} parent=1 // pred_region
      _
    $region77: #{cross_attention_net_fwd.1} parent=1 // pred_fallthru
      _
    // Predicated region
    $region78: #{cross_attention_net_fwd.1} parent=1 // pred_check
      _
    $region79: #{cross_attention_net_fwd.1} parent=1 // pred_check_branch
      %79 = sbr.rel (0) target = $region81
    $region80: #{cross_attention_net_fwd.1} parent=1 // pred_region
      _
    $region81: #{cross_attention_net_fwd.1} parent=1 // pred_fallthru
      _
    // Predicated region
    $region82: #{cross_attention_net_fwd.1} parent=1 // pred_check
      _
    $region83: #{cross_attention_net_fwd.1} parent=1 // pred_check_branch
      %81 = sbr.rel (0) target = $region85
    $region84: #{cross_attention_net_fwd.1} parent=1 // pred_region
      _
    $region85: #{cross_attention_net_fwd.1} parent=1 // pred_fallthru
      _
    // Predicated region
    $region86: #{cross_attention_net_fwd.1} parent=1 // pred_check
      _
    $region87: #{cross_attention_net_fwd.1} parent=1 // pred_check_branch
      %83 = sbr.rel (0) target = $region89
    $region88: #{cross_attention_net_fwd.1} parent=1 // pred_region
      _
    $region89: #{cross_attention_net_fwd.1} parent=1 // pred_fallthru
      _
    // Predicated region
    $region90: #{cross_attention_net_fwd.1} parent=1 // pred_check
      _
    $region91: #{cross_attention_net_fwd.1} parent=1 // pred_check_branch
      %85 = sbr.rel (0) target = $region93
    $region92: #{cross_attention_net_fwd.1} parent=1 // pred_region
      %87 = dma.done [#allocation3], 9216
    $region93: #{cross_attention_net_fwd.1} parent=1 // pred_fallthru
      _
    %v89 = vld [vmem:[%s0] sm:$0xff]
    %v90 = vld [vmem:[%s0 + $0x8] sm:$0xff]
    %v91 = vld [vmem:[%s0 + $0x10] sm:$0xff]
    %v92 = vld [vmem:[%s0 + $0x18] sm:$0xff]
    %v93 = vld [vmem:[%s0 + $0x20] sm:$0xff]
    %v94 = vld [vmem:[%s0 + $0x28] sm:$0xff]
    %v95 = vld [vmem:[%s0 + $0x30] sm:$0xff]
    %v96 = vld [vmem:[%s0 + $0x38] sm:$0xff]
    %v97 = vld [vmem:[%s2] sm:$0xf]
    %v98 = vld [vmem:[%s2 + $0x4] sm:$0xf]
    %v99 = vld [vmem:[%s2 + $0x8] sm:$0xf]
    %v100 = vld [vmem:[%s2 + $0xc] sm:$0xf]
    %v101 = vld [vmem:[%s2 + $0x10] sm:$0xf]
    %v102 = vld [vmem:[%s2 + $0x14] sm:$0xf]
    %v103 = vld [vmem:[%s2 + $0x18] sm:$0xf]
    %v104 = vld [vmem:[%s2 + $0x1c] sm:$0xf]
    %v105 = vld [vmem:[%s2 + $0x20] sm:$0xf]
    %v106 = vld [vmem:[%s2 + $0x24] sm:$0xf]
    %v107 = vld [vmem:[%s2 + $0x28] sm:$0xf]
    %v108 = vld [vmem:[%s2 + $0x2c] sm:$0xf]
    %v109 = vld [vmem:[%s2 + $0x30] sm:$0xf]
    %v110 = vld [vmem:[%s2 + $0x34] sm:$0xf]
    %v111 = vld [vmem:[%s2 + $0x38] sm:$0xf]
    %v112 = vld [vmem:[%s2 + $0x3c] sm:$0xf]
    %v113 = vld [vmem:[%s2 + $0x40] sm:$0xf]
    %v114 = vld [vmem:[%s2 + $0x44] sm:$0xf]
    %v115 = vld [vmem:[%s2 + $0x48] sm:$0xf]
    %v116 = vld [vmem:[%s2 + $0x4c] sm:$0xf]
    %v117 = vld [vmem:[%s2 + $0x50] sm:$0xf]
    %v118 = vld [vmem:[%s2 + $0x54] sm:$0xf]
    %v119 = vld [vmem:[%s2 + $0x58] sm:$0xf]
    %v120 = vld [vmem:[%s2 + $0x5c] sm:$0xf]
    %v121 = vpack.c.bf16 %v91, %v89
    %v122 = vpack.c.bf16 %v92, %v90
    %v123 = vpack.c.bf16 %v95, %v93
    %v124 = vpack.c.bf16 %v96, %v94
    %v149 = vunpack.c.l.b16 %v97
    %v150 = vunpack.c.l.b16 %v98
    %v151 = vunpack.c.l.b16 %v99
    %v152 = vunpack.c.l.b16 %v100
    %v153 = vunpack.c.l.b16 %v101
    %v154 = vunpack.c.l.b16 %v102
    %v155 = vunpack.c.l.b16 %v103
    %v156 = vunpack.c.l.b16 %v104
    %v157 = vunpack.c.l.b16 %v105
    %v158 = vunpack.c.l.b16 %v106
    %v159 = vunpack.c.l.b16 %v107
    %v160 = vunpack.c.l.b16 %v108
    %v161 = vunpack.c.l.b16 %v109
    %v162 = vunpack.c.l.b16 %v110
    %v163 = vunpack.c.l.b16 %v111
    %v164 = vunpack.c.l.b16 %v112
    %v165 = vunpack.c.l.b16 %v113
    %v166 = vunpack.c.l.b16 %v114
    %v167 = vunpack.c.l.b16 %v115
    %v168 = vunpack.c.l.b16 %v116
    %v169 = vunpack.c.l.b16 %v117
    %v170 = vunpack.c.l.b16 %v118
    %v171 = vunpack.c.l.b16 %v119
    %v172 = vunpack.c.l.b16 %v120
    %v173 = vpack.c.b16 %v150, %v149
    %v174 = vpack.c.b16 %v152, %v151
    %v175 = vpack.c.b16 %v154, %v153
    %v176 = vpack.c.b16 %v156, %v155
    %v177 = vpack.c.b16 %v158, %v157
    %v178 = vpack.c.b16 %v160, %v159
    %v179 = vpack.c.b16 %v162, %v161
    %v180 = vpack.c.b16 %v164, %v163
    %v181 = vpack.c.b16 %v166, %v165
    %v182 = vpack.c.b16 %v168, %v167
    %v183 = vpack.c.b16 %v170, %v169
    %v184 = vpack.c.b16 %v172, %v171
    %vm197 = vcmask 523264
    %v199 = vsel %vm197, %v122, 0
    %v202 = vsel %vm197, %v124, 0
    %204 = vmatpush.bf16.msra.mxu0 %v180
    %205 = vmatpush.bf16.msra.mxu0 %v179
    %206 = vmatpush.bf16.msra.mxu0 %v178
    %207 = vmatpush.bf16.msra.mxu0 %v177
    %208 = vmatpush.bf16.msra.mxu0 %v176
    %209 = vmatpush.bf16.msra.mxu0 %v175
    %210 = vmatpush.bf16.msra.mxu0 %v174
    %211 = vmatpush.bf16.msra.mxu0 %v173
    %212 = vmatmul.bf16.gmra.mxu0 %v121
    %v213 = vpop.f32.mrf.mxu0
    %v214 = vadd.f32 0.0, %v213
    %v215 = vpop.f32.mrf.mxu0
    %v216 = vadd.f32 0.0, %v215
    %217 = vmatmul.bf16.gmra.mxu0 %v123
    %v218 = vpop.f32.mrf.mxu0
    %v219 = vadd.f32 0.0, %v218
    %v220 = vpop.f32.mrf.mxu0
    %v221 = vadd.f32 0.0, %v220
    %222 = vdwg.mxu0
    %223 = vmatpush.bf16.msra.mxu0 0
    %224 = vmatpush.bf16.msra.mxu0 0
    %225 = vmatpush.bf16.msra.mxu0 0
    %226 = vmatpush.bf16.msra.mxu0 0
    %227 = vmatpush.bf16.msra.mxu0 %v184
    %228 = vmatpush.bf16.msra.mxu0 %v183
    %229 = vmatpush.bf16.msra.mxu0 %v182
    %230 = vmatpush.bf16.msra.mxu0 %v181
    %231 = vmatmul.bf16.gmra.mxu0 %v199
    %v232 = vpop.f32.mrf.mxu0
    %v233 = vadd.f32 %v214, %v232
    %v234 = vpop.f32.mrf.mxu0
    %v235 = vadd.f32 %v216, %v234
    %236 = vmatmul.bf16.gmra.mxu0 %v202
    %v237 = vpop.f32.mrf.mxu0
    %v238 = vadd.f32 %v219, %v237
    %v239 = vpop.f32.mrf.mxu0
    %v240 = vadd.f32 %v221, %v239
    %241 = vdwg.mxu0
    %v242 = vld [vmem:[%s3] sm:$0x1]
    %v243 = vld [vmem:[%s4] sm:$0x1]
    %v244 = vsel %vm197, %v233, 0.0
    %v245 = vsel %vm197, %v235, 0.0
    %v246 = vadd.f32 %v244, %v245
    %v247 = vsel %vm197, %v238, 0.0
    %v248 = vadd.f32 %v246, %v247
    %v249 = vsel %vm197, %v240, 0.0
    %v250 = vadd.f32 %v248, %v249
    %v251 = vrot.slane %v250, 4
    %v252 = vadd.f32 %v250, %v251
    %v253 = vrot.slane %v252, 2
    %v254 = vadd.f32 %v252, %v253
    %v255 = vrot.slane %v254, 1
    %v256 = vadd.f32 %v254, %v255
    %v257 = vmul.f32 %v256, 0.03125
    %v258 = vsub.f32 %v233, %v257
    %v259 = vsub.f32 %v235, %v257
    %v260 = vsub.f32 %v238, %v257
    %v261 = vsub.f32 %v240, %v257
    %v262 = vmul.f32 %v258, %v258
    %v263 = vmul.f32 %v259, %v259
    %v264 = vmul.f32 %v260, %v260
    %v265 = vmul.f32 %v261, %v261
    %v266 = vsel %vm197, %v262, 0.0
    %v267 = vsel %vm197, %v263, 0.0
    %v268 = vadd.f32 %v266, %v267
    %v269 = vsel %vm197, %v264, 0.0
    %v270 = vadd.f32 %v268, %v269
    %v271 = vsel %vm197, %v265, 0.0
    %v272 = vadd.f32 %v270, %v271
    %v273 = vrot.slane %v272, 4
    %v274 = vadd.f32 %v272, %v273
    %v275 = vrot.slane %v274, 2
    %v276 = vadd.f32 %v274, %v275
    %v277 = vrot.slane %v276, 1
    %v278 = vadd.f32 %v276, %v277
    %v279 = vmul.f32 %v278, 0.03125
    %v280 = vadd.f32 %v279, 1e-05
    %v281 = vrsqrt.pop %v280
    %v282 = vmul.f32 %v281, %v280
    %v283 = vmul.f32 %v282, %v281
    %v284 = vmul.f32 0.5, %v283
    %v285 = vsub.f32 1.5, %v284
    %v286 = vmul.f32 %v281, %v285
    %vm287 = vweird.f32 %v280
    %vm288 = vweird.f32 %v281
    %vm289 = vmor %vm287, %vm288
    %v290 = vsel %vm289, %v281, %v286
    %v291 = vmul.f32 %v290, %v242
    %v292 = vperm.slane %v291, 0
    %v293 = vmul.f32 %v258, %v292
    %v294 = vmul.f32 %v259, %v292
    %v295 = vmul.f32 %v260, %v292
    %v296 = vmul.f32 %v261, %v292
    %v298 = vperm.slane %v243, 0
    %v300 = vadd.f32 %v293, %v298
    %v301 = vadd.f32 %v294, %v298
    %v302 = vadd.f32 %v295, %v298
    %v303 = vadd.f32 %v296, %v298
    %v304 = vmax.f32 %v300, 0.0
    %v305 = vmax.f32 %v301, 0.0
    %v306 = vmax.f32 %v302, 0.0
    %v307 = vmax.f32 %v303, 0.0
    %v308 = vld [vmem:[%s5] sm:$0xf]
    %v309 = vld [vmem:[%s5 + $0x4] sm:$0xf]
    %v310 = vld [vmem:[%s5 + $0x8] sm:$0xf]
    %v311 = vld [vmem:[%s5 + $0xc] sm:$0xf]
    %v312 = vld [vmem:[%s5 + $0x10] sm:$0xf]
    %v313 = vld [vmem:[%s5 + $0x14] sm:$0xf]
    %v314 = vld [vmem:[%s5 + $0x18] sm:$0xf]
    %v315 = vld [vmem:[%s5 + $0x1c] sm:$0xf]
    %v316 = vpack.c.bf16 %v305, %v304
    %v317 = vpack.c.bf16 %v307, %v306
    %v326 = vunpack.c.l.b16 %v308
    %v327 = vunpack.c.l.b16 %v309
    %v328 = vunpack.c.l.b16 %v310
    %v329 = vunpack.c.l.b16 %v311
    %v330 = vunpack.c.l.b16 %v312
    %v331 = vunpack.c.l.b16 %v313
    %v332 = vunpack.c.l.b16 %v314
    %v333 = vunpack.c.l.b16 %v315
    %v334 = vpack.c.b16 %v327, %v326
    %v335 = vpack.c.b16 %v329, %v328
    %v336 = vpack.c.b16 %v331, %v330
    %v337 = vpack.c.b16 %v333, %v332
    %v343 = vsel %vm197, %v316, 0
    %v346 = vsel %vm197, %v317, 0
    %348 = vmatpush.bf16.msra.mxu0 0
    %349 = vmatpush.bf16.msra.mxu0 0
    %350 = vmatpush.bf16.msra.mxu0 0
    %351 = vmatpush.bf16.msra.mxu0 0
    %352 = vmatpush.bf16.msra.mxu0 %v337
    %353 = vmatpush.bf16.msra.mxu0 %v336
    %354 = vmatpush.bf16.msra.mxu0 %v335
    %355 = vmatpush.bf16.msra.mxu0 %v334
    %356 = vmatmul.bf16.gmra.mxu0 %v343
    %v357 = vpop.f32.mrf.mxu0
    %v358 = vadd.f32 0.0, %v357
    %v359 = vpop.f32.mrf.mxu0
    %v360 = vadd.f32 0.0, %v359
    %361 = vmatmul.bf16.gmra.mxu0 %v346
    %v362 = vpop.f32.mrf.mxu0
    %v363 = vadd.f32 0.0, %v362
    %v364 = vpop.f32.mrf.mxu0
    %v365 = vadd.f32 0.0, %v364
    %366 = vdwg.mxu0
    %v367 = vld [vmem:[%s6] sm:$0x1]
    %v368 = vld [vmem:[%s7] sm:$0x1]
    %v369 = vadd.f32 %v358, %v360
    %v370 = vadd.f32 %v369, %v363
    %v371 = vadd.f32 %v370, %v365
    %v372 = vrot.slane %v371, 4
    %v373 = vadd.f32 %v371, %v372
    %v374 = vrot.slane %v373, 2
    %v375 = vadd.f32 %v373, %v374
    %v376 = vrot.slane %v375, 1
    %v377 = vadd.f32 %v375, %v376
    %v378 = vmul.f32 %v377, 0.03125
    %v379 = vsub.f32 %v358, %v378
    %v380 = vsub.f32 %v360, %v378
    %v381 = vsub.f32 %v363, %v378
    %v382 = vsub.f32 %v365, %v378
    %v383 = vmul.f32 %v379, %v379
    %v384 = vmul.f32 %v380, %v380
    %v385 = vmul.f32 %v381, %v381
    %v386 = vmul.f32 %v382, %v382
    %v387 = vadd.f32 %v383, %v384
    %v388 = vadd.f32 %v387, %v385
    %v389 = vadd.f32 %v388, %v386
    %v390 = vrot.slane %v389, 4
    %v391 = vadd.f32 %v389, %v390
    %v392 = vrot.slane %v391, 2
    %v393 = vadd.f32 %v391, %v392
    %v394 = vrot.slane %v393, 1
    %v395 = vadd.f32 %v393, %v394
    %v396 = vmul.f32 %v395, 0.03125
    %v397 = vadd.f32 %v396, 1e-05
    %v398 = vrsqrt.pop %v397
    %v399 = vmul.f32 %v398, %v397
    %v400 = vmul.f32 %v399, %v398
    %v401 = vmul.f32 0.5, %v400
    %v402 = vsub.f32 1.5, %v401
    %v403 = vmul.f32 %v398, %v402
    %vm404 = vweird.f32 %v397
    %vm405 = vweird.f32 %v398
    %vm406 = vmor %vm404, %vm405
    %v407 = vsel %vm406, %v398, %v403
    %v408 = vmul.f32 %v407, %v367
    %v409 = vperm.slane %v408, 0
    %v410 = vmul.f32 %v379, %v409
    %v411 = vmul.f32 %v380, %v409
    %v412 = vmul.f32 %v381, %v409
    %v413 = vmul.f32 %v382, %v409
    %v415 = vperm.slane %v368, 0
    %v417 = vadd.f32 %v410, %v415
    %v418 = vadd.f32 %v411, %v415
    %v419 = vadd.f32 %v412, %v415
    %v420 = vadd.f32 %v413, %v415
    %v421 = vmax.f32 %v417, 0.0
    %v422 = vmax.f32 %v418, 0.0
    %v423 = vmax.f32 %v419, 0.0
    %v424 = vmax.f32 %v420, 0.0
    %v425 = vld [vmem:[%s1] sm:$0xff]
    %v426 = vld [vmem:[%s1 + $0x8] sm:$0xff]
    %v427 = vld [vmem:[%s1 + $0x10] sm:$0xff]
    %v428 = vld [vmem:[%s1 + $0x18] sm:$0xff]
    %v429 = vld [vmem:[#allocation2] sm:$0xff]
    %v430 = vld [vmem:[#allocation2 + $0x8] sm:$0xf]
    %v431 = vld [vmem:[#allocation2 + $0xc] sm:$0xff]
    %v432 = vld [vmem:[#allocation2 + $0x14] sm:$0xf]
    %v433 = vld [vmem:[#allocation2 + $0x18] sm:$0xff]
    %v434 = vld [vmem:[#allocation2 + $0x20] sm:$0xf]
    %v435 = vld [vmem:[#allocation2 + $0x24] sm:$0xff]
    %v436 = vld [vmem:[#allocation2 + $0x2c] sm:$0xf]
    %v437 = vld [vmem:[#allocation2 + $0x30] sm:$0xff]
    %v438 = vld [vmem:[#allocation2 + $0x38] sm:$0xf]
    %v439 = vld [vmem:[#allocation2 + $0x3c] sm:$0xff]
    %v440 = vld [vmem:[#allocation2 + $0x44] sm:$0xf]
    %v441 = vld [vmem:[#allocation2 + $0x48] sm:$0xff]
    %v442 = vld [vmem:[#allocation2 + $0x50] sm:$0xf]
    %v443 = vld [vmem:[#allocation2 + $0x54] sm:$0xff]
    %v444 = vld [vmem:[#allocation2 + $0x5c] sm:$0xf]
    %v445 = vld [vmem:[#allocation2 + $0x60] sm:$0xff]
    %v446 = vld [vmem:[#allocation2 + $0x68] sm:$0xf]
    %v447 = vld [vmem:[#allocation2 + $0x6c] sm:$0xff]
    %v448 = vld [vmem:[#allocation2 + $0x74] sm:$0xf]
    %v449 = vld [vmem:[#allocation2 + $0x78] sm:$0xff]
    %v450 = vld [vmem:[#allocation2 + $0x80] sm:$0xf]
    %v451 = vld [vmem:[#allocation2 + $0x84] sm:$0xff]
    %v452 = vld [vmem:[#allocation2 + $0x8c] sm:$0xf]
    %v453 = vld [vmem:[#allocation2 + $0x90] sm:$0xff]
    %v454 = vld [vmem:[#allocation2 + $0x98] sm:$0xf]
    %v455 = vld [vmem:[#allocation2 + $0x9c] sm:$0xff]
    %v456 = vld [vmem:[#allocation2 + $0xa4] sm:$0xf]
    %v457 = vld [vmem:[#allocation2 + $0xa8] sm:$0xff]
    %v458 = vld [vmem:[#allocation2 + $0xb0] sm:$0xf]
    %v459 = vld [vmem:[#allocation2 + $0xb4] sm:$0xff]
    %v460 = vld [vmem:[#allocation2 + $0xbc] sm:$0xf]
    %v461 = vld [vmem:[%s9] sm:$0x7]
    %v462 = vld [vmem:[%s10] sm:$0xf]
    %v463 = vld [vmem:[%s10 + $0x4] sm:$0xf]
    %v464 = vld [vmem:[%s10 + $0x8] sm:$0xf]
    %v465 = vld [vmem:[%s10 + $0xc] sm:$0xf]
    %v466 = vld [vmem:[%s10 + $0x10] sm:$0xf]
    %v467 = vld [vmem:[%s10 + $0x14] sm:$0xf]
    %v468 = vld [vmem:[%s10 + $0x18] sm:$0xf]
    %v469 = vld [vmem:[%s10 + $0x1c] sm:$0xf]
    %v470 = vld [vmem:[%s10 + $0x20] sm:$0xf]
    %v471 = vld [vmem:[%s10 + $0x24] sm:$0xf]
    %v472 = vld [vmem:[%s10 + $0x28] sm:$0xf]
    %v473 = vld [vmem:[%s10 + $0x2c] sm:$0xf]
    %v474 = vld [vmem:[%s10 + $0x30] sm:$0xf]
    %v475 = vld [vmem:[%s10 + $0x34] sm:$0xf]
    %v476 = vld [vmem:[%s10 + $0x38] sm:$0xf]
    %v477 = vld [vmem:[%s10 + $0x3c] sm:$0xf]
    %v478 = vld [vmem:[%s11] sm:$0x1]
    %v479 = vld [vmem:[%s12] sm:$0xf]
    %v480 = vld [vmem:[%s12 + $0x4] sm:$0xf]
    %v481 = vld [vmem:[%s12 + $0x8] sm:$0xf]
    %v482 = vld [vmem:[%s12 + $0xc] sm:$0xf]
    %v483 = vld [vmem:[%s12 + $0x10] sm:$0xf]
    %v484 = vld [vmem:[%s12 + $0x14] sm:$0xf]
    %v485 = vld [vmem:[%s12 + $0x18] sm:$0xf]
    %v486 = vld [vmem:[%s12 + $0x1c] sm:$0xf]
    %v487 = vld [vmem:[%s12 + $0x20] sm:$0xf]
    %v488 = vld [vmem:[%s12 + $0x24] sm:$0xf]
    %v489 = vld [vmem:[%s12 + $0x28] sm:$0xf]
    %v490 = vld [vmem:[%s12 + $0x2c] sm:$0xf]
    %v491 = vld [vmem:[%s12 + $0x30] sm:$0xf]
    %v492 = vld [vmem:[%s12 + $0x34] sm:$0xf]
    %v493 = vld [vmem:[%s12 + $0x38] sm:$0xf]
    %v494 = vld [vmem:[%s12 + $0x3c] sm:$0xf]
    %v495 = vld [vmem:[%s13] sm:$0x1]
    %v496 = vld [vmem:[%s14] sm:$0xf]
    %v497 = vld [vmem:[%s14 + $0x4] sm:$0xf]
    %v498 = vld [vmem:[%s14 + $0x8] sm:$0xf]
    %v499 = vld [vmem:[%s14 + $0xc] sm:$0xf]
    %v500 = vld [vmem:[%s14 + $0x10] sm:$0xf]
    %v501 = vld [vmem:[%s14 + $0x14] sm:$0xf]
    %v502 = vld [vmem:[%s14 + $0x18] sm:$0xf]
    %v503 = vld [vmem:[%s14 + $0x1c] sm:$0xf]
    %v504 = vld [vmem:[%s14 + $0x20] sm:$0xf]
    %v505 = vld [vmem:[%s14 + $0x24] sm:$0xf]
    %v506 = vld [vmem:[%s14 + $0x28] sm:$0xf]
    %v507 = vld [vmem:[%s14 + $0x2c] sm:$0xf]
    %v508 = vld [vmem:[%s14 + $0x30] sm:$0xf]
    %v509 = vld [vmem:[%s14 + $0x34] sm:$0xf]
    %v510 = vld [vmem:[%s14 + $0x38] sm:$0xf]
    %v511 = vld [vmem:[%s14 + $0x3c] sm:$0xf]
    %v512 = vld [vmem:[%s15] sm:$0x1]
    %v513 = vpack.c.bf16 %v422, %v421
    %v514 = vpack.c.bf16 %v424, %v423
    %v516 = vperm.slane %v461, 0
    %v517 = vperm.slane %v461, 1
    %v518 = vperm.slane %v461, 2
    %v554 = vunpack.c.l.b16 %v429
    %v555 = vunpack.c.h.b16 %v429
    %v556 = vunpack.c.l.b16 %v430
    %v557 = vunpack.c.l.b16 %v431
    %v558 = vunpack.c.h.b16 %v431
    %v559 = vunpack.c.l.b16 %v432
    %v560 = vunpack.c.l.b16 %v433
    %v561 = vunpack.c.h.b16 %v433
    %v562 = vunpack.c.l.b16 %v434
    %v563 = vunpack.c.l.b16 %v435
    %v564 = vunpack.c.h.b16 %v435
    %v565 = vunpack.c.l.b16 %v436
    %v566 = vunpack.c.l.b16 %v437
    %v567 = vunpack.c.h.b16 %v437
    %v568 = vunpack.c.l.b16 %v438
    %v569 = vunpack.c.l.b16 %v439
    %v570 = vunpack.c.h.b16 %v439
    %v571 = vunpack.c.l.b16 %v440
    %v572 = vunpack.c.l.b16 %v441
    %v573 = vunpack.c.h.b16 %v441
    %v574 = vunpack.c.l.b16 %v442
    %v575 = vunpack.c.l.b16 %v443
    %v576 = vunpack.c.h.b16 %v443
    %v577 = vunpack.c.l.b16 %v444
    %v578 = vunpack.c.l.b16 %v445
    %v579 = vunpack.c.h.b16 %v445
    %v580 = vunpack.c.l.b16 %v446
    %v581 = vunpack.c.l.b16 %v447
    %v582 = vunpack.c.h.b16 %v447
    %v583 = vunpack.c.l.b16 %v448
    %v584 = vunpack.c.l.b16 %v449
    %v585 = vunpack.c.h.b16 %v449
    %v586 = vunpack.c.l.b16 %v450
    %v587 = vunpack.c.l.b16 %v451
    %v588 = vunpack.c.h.b16 %v451
    %v589 = vunpack.c.l.b16 %v452
    %v590 = vunpack.c.l.b16 %v453
    %v591 = vunpack.c.h.b16 %v453
    %v592 = vunpack.c.l.b16 %v454
    %v593 = vunpack.c.l.b16 %v455
    %v594 = vunpack.c.h.b16 %v455
    %v595 = vunpack.c.l.b16 %v456
    %v596 = vunpack.c.l.b16 %v457
    %v597 = vunpack.c.h.b16 %v457
    %v598 = vunpack.c.l.b16 %v458
    %v599 = vunpack.c.l.b16 %v459
    %v600 = vunpack.c.h.b16 %v459
    %v601 = vunpack.c.l.b16 %v460
    %v602 = vpack.c.b16 %v557, %v554
    %v603 = vpack.c.b16 %v558, %v555
    %v604 = vpack.c.b16 %v559, %v556
    %v605 = vpack.c.b16 %v563, %v560
    %v606 = vpack.c.b16 %v564, %v561
    %v607 = vpack.c.b16 %v565, %v562
    %v608 = vpack.c.b16 %v569, %v566
    %v609 = vpack.c.b16 %v570, %v567
    %v610 = vpack.c.b16 %v571, %v568
    %v611 = vpack.c.b16 %v575, %v572
    %v612 = vpack.c.b16 %v576, %v573
    %v613 = vpack.c.b16 %v577, %v574
    %v614 = vpack.c.b16 %v581, %v578
    %v615 = vpack.c.b16 %v582, %v579
    %v616 = vpack.c.b16 %v583, %v580
    %v617 = vpack.c.b16 %v587, %v584
    %v618 = vpack.c.b16 %v588, %v585
    %v619 = vpack.c.b16 %v589, %v586
    %v620 = vpack.c.b16 %v593, %v590
    %v621 = vpack.c.b16 %v594, %v591
    %v622 = vpack.c.b16 %v595, %v592
    %v623 = vpack.c.b16 %v599, %v596
    %v624 = vpack.c.b16 %v600, %v597
    %v625 = vpack.c.b16 %v601, %v598
    %650 = vmatpush.bf16.msra.mxu0 %v623
    %651 = vmatpush.bf16.msra.mxu0 %v620
    %652 = vmatpush.bf16.msra.mxu0 %v617
    %653 = vmatpush.bf16.msra.mxu0 %v614
    %654 = vmatpush.bf16.msra.mxu0 %v611
    %655 = vmatpush.bf16.msra.mxu0 %v608
    %656 = vmatpush.bf16.msra.mxu0 %v605
    %657 = vmatpush.bf16.msra.mxu0 %v602
    %658 = vmatmul.bf16.gmra.mxu0 %v513
    %v659 = vpop.f32.mrf.mxu0
    %v660 = vadd.f32 %v516, %v659
    %v661 = vpop.f32.mrf.mxu0
    %v662 = vadd.f32 %v516, %v661
    %663 = vmatmul.bf16.gmra.mxu0 %v514
    %v664 = vpop.f32.mrf.mxu0
    %v665 = vadd.f32 %v516, %v664
    %v666 = vpop.f32.mrf.mxu0
    %v667 = vadd.f32 %v516, %v666
    %668 = vdwg.mxu0
    %669 = vmatpush.bf16.msra.mxu0 %v624
    %670 = vmatpush.bf16.msra.mxu0 %v621
    %671 = vmatpush.bf16.msra.mxu0 %v618
    %672 = vmatpush.bf16.msra.mxu0 %v615
    %673 = vmatpush.bf16.msra.mxu0 %v612
    %674 = vmatpush.bf16.msra.mxu0 %v609
    %675 = vmatpush.bf16.msra.mxu0 %v606
    %676 = vmatpush.bf16.msra.mxu0 %v603
    %677 = vmatmul.bf16.gmra.mxu0 %v513
    %v678 = vpop.f32.mrf.mxu0
    %v679 = vadd.f32 %v517, %v678
    %v680 = vpop.f32.mrf.mxu0
    %v681 = vadd.f32 %v517, %v680
    %682 = vmatmul.bf16.gmra.mxu0 %v514
    %v683 = vpop.f32.mrf.mxu0
    %v684 = vadd.f32 %v517, %v683
    %v685 = vpop.f32.mrf.mxu0
    %v686 = vadd.f32 %v517, %v685
    %687 = vdwg.mxu0
    %688 = vmatpush.bf16.msra.mxu0 %v625
    %689 = vmatpush.bf16.msra.mxu0 %v622
    %690 = vmatpush.bf16.msra.mxu0 %v619
    %691 = vmatpush.bf16.msra.mxu0 %v616
    %692 = vmatpush.bf16.msra.mxu0 %v613
    %693 = vmatpush.bf16.msra.mxu0 %v610
    %694 = vmatpush.bf16.msra.mxu0 %v607
    %695 = vmatpush.bf16.msra.mxu0 %v604
    %696 = vmatmul.bf16.gmra.mxu0 %v513
    %v697 = vpop.f32.mrf.mxu0
    %v698 = vadd.f32 %v518, %v697
    %v699 = vpop.f32.mrf.mxu0
    %v700 = vadd.f32 %v518, %v699
    %701 = vmatmul.bf16.gmra.mxu0 %v514
    %v702 = vpop.f32.mrf.mxu0
    %v703 = vadd.f32 %v518, %v702
    %v704 = vpop.f32.mrf.mxu0
    %v705 = vadd.f32 %v518, %v704
    %706 = vdwg.mxu0
    %v708 = vperm.slane %v478, 0
    %v710 = vadd.f32 %v421, %v708
    %v711 = vadd.f32 %v422, %v708
    %v712 = vadd.f32 %v423, %v708
    %v713 = vadd.f32 %v424, %v708
    %v714 = vpack.c.bf16 %v662, %v660
    %v715 = vpack.c.bf16 %v667, %v665
    %v716 = vpack.c.bf16 %v681, %v679
    %v717 = vpack.c.bf16 %v686, %v684
    %vm718 = vcmask 261120
    %v720 = vsel %vm718, %v714, 0
    %v723 = vsel %vm718, %v715, 0
    %v726 = vsel %vm718, %v716, 0
    %v729 = vsel %vm718, %v717, 0
    %731 = vmatpush.bf16.xpose.msra.mxu0 0
    %732 = vmatpush.bf16.xpose.msra.mxu0 0
    %733 = vmatpush.bf16.xpose.msra.mxu0 0
    %734 = vmatpush.bf16.xpose.msra.mxu0 0
    %735 = vmatpush.bf16.xpose.msra.mxu0 0
    %736 = vmatpush.bf16.xpose.msra.mxu0 0
    %737 = vmatpush.bf16.xpose.msra.mxu0 %v729
    %738 = vmatpush.bf16.xpose.msra.mxu0 %v726
    %739 = vmatmul.bf16.gmra.mxu0 %v720
    %v740 = vpop.f32.mrf.mxu0
    %v741 = vadd.f32 %v425, %v740
    %v742 = vpop.f32.mrf.mxu0
    %v743 = vadd.f32 %v426, %v742
    %744 = vmatmul.bf16.gmra.mxu0 %v723
    %v745 = vpop.f32.mrf.mxu0
    %v746 = vadd.f32 %v427, %v745
    %v747 = vpop.f32.mrf.mxu0
    %v748 = vadd.f32 %v428, %v747
    %749 = vdwg.mxu0
    %v750 = vsel %vm718, %v741, -inf
    %751 = vmax.xlane.f32.xlu0 %v750
    %v752 = vpop.xlane.xlu0 %751
    %v753 = vsel %vm718, %v743, -inf
    %754 = vmax.xlane.f32.xlu0 %v753
    %v755 = vpop.xlane.xlu0 %754
    %v756 = vsel %vm718, %v746, -inf
    %757 = vmax.xlane.f32.xlu0 %v756
    %v758 = vpop.xlane.xlu0 %757
    %v759 = vsel %vm718, %v748, -inf
    %760 = vmax.xlane.f32.xlu0 %v759
    %v761 = vpop.xlane.xlu0 %760
    %v762 = vsub.f32 %v741, %v752
    %v763 = vsub.f32 %v743, %v755
    %v764 = vsub.f32 %v746, %v758
    %v765 = vsub.f32 %v748, %v761
    %v766 = vmul.f32 %v762, 1.442695
    %v767 = vpow.pop %v766
    %v768 = vmul.f32 %v763, 1.442695
    %v769 = vpow.pop %v768
    %v770 = vmul.f32 %v764, 1.442695
    %v771 = vpow.pop %v770
    %v772 = vmul.f32 %v765, 1.442695
    %v773 = vpow.pop %v772
    %v774 = vsel %vm718, %v767, 0.0
    %775 = vadd.xlane.f32.xlu0 %v774
    %v776 = vpop.xlane.xlu0 %775
    %v777 = vsel %vm718, %v769, 0.0
    %778 = vadd.xlane.f32.xlu0 %v777
    %v779 = vpop.xlane.xlu0 %778
    %v780 = vsel %vm718, %v771, 0.0
    %781 = vadd.xlane.f32.xlu0 %v780
    %v782 = vpop.xlane.xlu0 %781
    %v783 = vsel %vm718, %v773, 0.0
    %784 = vadd.xlane.f32.xlu0 %v783
    %v785 = vpop.xlane.xlu0 %784
    %v786 = vpack.c.bf16 %v769, %v767
    %v787 = vpack.c.bf16 %v773, %v771
    %v788 = vpack.c.bf16 %v700, %v698
    %v789 = vpack.c.bf16 %v705, %v703
    %v791 = vsel %vm718, %v786, 0
    %v794 = vsel %vm718, %v787, 0
    %796 = vmatpush.bf16.msra.mxu0 0
    %797 = vmatpush.bf16.msra.mxu0 0
    %798 = vmatpush.bf16.msra.mxu0 0
    %799 = vmatpush.bf16.msra.mxu0 0
    %800 = vmatpush.bf16.msra.mxu0 0
    %801 = vmatpush.bf16.msra.mxu0 0
    %802 = vmatpush.bf16.msra.mxu0 %v789
    %803 = vmatpush.bf16.msra.mxu0 %v788
    %804 = vmatmul.bf16.gmra.mxu0 %v791
    %v805 = vpop.f32.mrf.mxu0
    %v806 = vadd.f32 0.0, %v805
    %v807 = vpop.f32.mrf.mxu0
    %v808 = vadd.f32 0.0, %v807
    %809 = vmatmul.bf16.gmra.mxu0 %v794
    %v810 = vpop.f32.mrf.mxu0
    %v811 = vadd.f32 0.0, %v810
    %v812 = vpop.f32.mrf.mxu0
    %v813 = vadd.f32 0.0, %v812
    %814 = vdwg.mxu0
    %v815 = vrcp.pop %v776
    %v816 = vrcp.pop %v779
    %v817 = vrcp.pop %v782
    %v818 = vrcp.pop %v785
    %v819 = vmul.f32 %v806, %v815
    %v820 = vmul.f32 %v808, %v816
    %v821 = vmul.f32 %v811, %v817
    %v822 = vmul.f32 %v813, %v818
    %v823 = vpack.c.bf16 %v820, %v819
    %v824 = vpack.c.bf16 %v822, %v821
    %v829 = vunpack.c.l.b16 %v462
    %v830 = vunpack.c.l.b16 %v463
    %v831 = vunpack.c.l.b16 %v464
    %v832 = vunpack.c.l.b16 %v465
    %v833 = vpack.c.b16 %v830, %v829
    %v834 = vpack.c.b16 %v832, %v831
    %v838 = vsel %vm718, %v823, 0
    %v841 = vsel %vm718, %v824, 0
    %843 = vmatpush.bf16.msra.mxu0 0
    %844 = vmatpush.bf16.msra.mxu0 0
    %845 = vmatpush.bf16.msra.mxu0 0
    %846 = vmatpush.bf16.msra.mxu0 0
    %847 = vmatpush.bf16.msra.mxu0 0
    %848 = vmatpush.bf16.msra.mxu0 0
    %849 = vmatpush.bf16.msra.mxu0 %v834
    %850 = vmatpush.bf16.msra.mxu0 %v833
    %851 = vmatmul.bf16.gmra.mxu0 %v838
    %v852 = vpop.f32.mrf.mxu0
    %v853 = vadd.f32 0.0, %v852
    %v854 = vpop.f32.mrf.mxu0
    %v855 = vadd.f32 0.0, %v854
    %856 = vmatmul.bf16.gmra.mxu0 %v841
    %v857 = vpop.f32.mrf.mxu0
    %v858 = vadd.f32 0.0, %v857
    %v859 = vpop.f32.mrf.mxu0
    %v860 = vadd.f32 0.0, %v859
    %861 = vdwg.mxu0
    %v862 = vadd.f32 %v710, %v853
    %v863 = vadd.f32 %v711, %v855
    %v864 = vadd.f32 %v712, %v858
    %v865 = vadd.f32 %v713, %v860
    %868 = vrot.lane.b32.xlu0 %v714, 96
    %v869 = vpop.permute.xlu0 %868
    %870 = vrot.lane.b32.xlu0 %v715, 96
    %v871 = vpop.permute.xlu0 %870
    %874 = vrot.lane.b32.xlu0 %v716, 96
    %v875 = vpop.permute.xlu0 %874
    %876 = vrot.lane.b32.xlu0 %v717, 96
    %v877 = vpop.permute.xlu0 %876
    %v879 = vsel %vm718, %v869, 0
    %v882 = vsel %vm718, %v871, 0
    %v885 = vsel %vm718, %v875, 0
    %v888 = vsel %vm718, %v877, 0
    %890 = vmatpush.bf16.xpose.msra.mxu0 0
    %891 = vmatpush.bf16.xpose.msra.mxu0 0
    %892 = vmatpush.bf16.xpose.msra.mxu0 0
    %893 = vmatpush.bf16.xpose.msra.mxu0 0
    %894 = vmatpush.bf16.xpose.msra.mxu0 0
    %895 = vmatpush.bf16.xpose.msra.mxu0 0
    %896 = vmatpush.bf16.xpose.msra.mxu0 %v888
    %897 = vmatpush.bf16.xpose.msra.mxu0 %v885
    %898 = vmatmul.bf16.gmra.mxu0 %v879
    %v899 = vpop.f32.mrf.mxu0
    %v900 = vadd.f32 %v425, %v899
    %v901 = vpop.f32.mrf.mxu0
    %v902 = vadd.f32 %v426, %v901
    %903 = vmatmul.bf16.gmra.mxu0 %v882
    %v904 = vpop.f32.mrf.mxu0
    %v905 = vadd.f32 %v427, %v904
    %v906 = vpop.f32.mrf.mxu0
    %v907 = vadd.f32 %v428, %v906
    %908 = vdwg.mxu0
    %v909 = vsel %vm718, %v900, -inf
    %910 = vmax.xlane.f32.xlu0 %v909
    %v911 = vpop.xlane.xlu0 %910
    %v912 = vsel %vm718, %v902, -inf
    %913 = vmax.xlane.f32.xlu0 %v912
    %v914 = vpop.xlane.xlu0 %913
    %v915 = vsel %vm718, %v905, -inf
    %916 = vmax.xlane.f32.xlu0 %v915
    %v917 = vpop.xlane.xlu0 %916
    %v918 = vsel %vm718, %v907, -inf
    %919 = vmax.xlane.f32.xlu0 %v918
    %v920 = vpop.xlane.xlu0 %919
    %v921 = vsub.f32 %v900, %v911
    %v922 = vsub.f32 %v902, %v914
    %v923 = vsub.f32 %v905, %v917
    %v924 = vsub.f32 %v907, %v920
    %v925 = vmul.f32 %v921, 1.442695
    %v926 = vpow.pop %v925
    %v927 = vmul.f32 %v922, 1.442695
    %v928 = vpow.pop %v927
    %v929 = vmul.f32 %v923, 1.442695
    %v930 = vpow.pop %v929
    %v931 = vmul.f32 %v924, 1.442695
    %v932 = vpow.pop %v931
    %v933 = vsel %vm718, %v926, 0.0
    %934 = vadd.xlane.f32.xlu0 %v933
    %v935 = vpop.xlane.xlu0 %934
    %v936 = vsel %vm718, %v928, 0.0
    %937 = vadd.xlane.f32.xlu0 %v936
    %v938 = vpop.xlane.xlu0 %937
    %v939 = vsel %vm718, %v930, 0.0
    %940 = vadd.xlane.f32.xlu0 %v939
    %v941 = vpop.xlane.xlu0 %940
    %v942 = vsel %vm718, %v932, 0.0
    %943 = vadd.xlane.f32.xlu0 %v942
    %v944 = vpop.xlane.xlu0 %943
    %v945 = vpack.c.bf16 %v928, %v926
    %v946 = vpack.c.bf16 %v932, %v930
    %949 = vrot.lane.b32.xlu0 %v788, 96
    %v950 = vpop.permute.xlu0 %949
    %951 = vrot.lane.b32.xlu0 %v789, 96
    %v952 = vpop.permute.xlu0 %951
    %v956 = vsel %vm718, %v945, 0
    %v959 = vsel %vm718, %v946, 0
    %961 = vmatpush.bf16.msra.mxu0 0
    %962 = vmatpush.bf16.msra.mxu0 0
    %963 = vmatpush.bf16.msra.mxu0 0
    %964 = vmatpush.bf16.msra.mxu0 0
    %965 = vmatpush.bf16.msra.mxu0 0
    %966 = vmatpush.bf16.msra.mxu0 0
    %967 = vmatpush.bf16.msra.mxu0 %v952
    %968 = vmatpush.bf16.msra.mxu0 %v950
    %969 = vmatmul.bf16.gmra.mxu0 %v956
    %v970 = vpop.f32.mrf.mxu0
    %v971 = vadd.f32 0.0, %v970
    %v972 = vpop.f32.mrf.mxu0
    %v973 = vadd.f32 0.0, %v972
    %974 = vmatmul.bf16.gmra.mxu0 %v959
    %v975 = vpop.f32.mrf.mxu0
    %v976 = vadd.f32 0.0, %v975
    %v977 = vpop.f32.mrf.mxu0
    %v978 = vadd.f32 0.0, %v977
    %979 = vdwg.mxu0
    %v980 = vrcp.pop %v935
    %v981 = vrcp.pop %v938
    %v982 = vrcp.pop %v941
    %v983 = vrcp.pop %v944
    %v984 = vmul.f32 %v971, %v980
    %v985 = vmul.f32 %v973, %v981
    %v986 = vmul.f32 %v976, %v982
    %v987 = vmul.f32 %v978, %v983
    %v988 = vpack.c.bf16 %v985, %v984
    %v989 = vpack.c.bf16 %v987, %v986
    %v994 = vunpack.c.l.b16 %v466
    %v995 = vunpack.c.l.b16 %v467
    %v996 = vunpack.c.l.b16 %v468
    %v997 = vunpack.c.l.b16 %v469
    %v998 = vpack.c.b16 %v995, %v994
    %v999 = vpack.c.b16 %v997, %v996
    %v1003 = vsel %vm718, %v988, 0
    %v1006 = vsel %vm718, %v989, 0
    %1008 = vmatpush.bf16.msra.mxu0 0
    %1009 = vmatpush.bf16.msra.mxu0 0
    %1010 = vmatpush.bf16.msra.mxu0 0
    %1011 = vmatpush.bf16.msra.mxu0 0
    %1012 = vmatpush.bf16.msra.mxu0 0
    %1013 = vmatpush.bf16.msra.mxu0 0
    %1014 = vmatpush.bf16.msra.mxu0 %v999
    %1015 = vmatpush.bf16.msra.mxu0 %v998
    %1016 = vmatmul.bf16.gmra.mxu0 %v1003
    %v1017 = vpop.f32.mrf.mxu0
    %v1018 = vadd.f32 0.0, %v1017
    %v1019 = vpop.f32.mrf.mxu0
    %v1020 = vadd.f32 0.0, %v1019
    %1021 = vmatmul.bf16.gmra.mxu0 %v1006
    %v1022 = vpop.f32.mrf.mxu0
    %v1023 = vadd.f32 0.0, %v1022
    %v1024 = vpop.f32.mrf.mxu0
    %v1025 = vadd.f32 0.0, %v1024
    %1026 = vdwg.mxu0
    %v1027 = vadd.f32 %v862, %v1018
    %v1028 = vadd.f32 %v863, %v1020
    %v1029 = vadd.f32 %v864, %v1023
    %v1030 = vadd.f32 %v865, %v1025
    %1031 = vrot.lane.b32.xlu0 %v714, 64
    %v1032 = vpop.permute.xlu0 %1031
    %1033 = vrot.lane.b32.xlu0 %v715, 64
    %v1034 = vpop.permute.xlu0 %1033
    %1035 = vrot.lane.b32.xlu0 %v716, 64
    %v1036 = vpop.permute.xlu0 %1035
    %1037 = vrot.lane.b32.xlu0 %v717, 64
    %v1038 = vpop.permute.xlu0 %1037
    %v1040 = vsel %vm718, %v1032, 0
    %v1043 = vsel %vm718, %v1034, 0
    %v1046 = vsel %vm718, %v1036, 0
    %v1049 = vsel %vm718, %v1038, 0
    %1051 = vmatpush.bf16.xpose.msra.mxu0 0
    %1052 = vmatpush.bf16.xpose.msra.mxu0 0
    %1053 = vmatpush.bf16.xpose.msra.mxu0 0
    %1054 = vmatpush.bf16.xpose.msra.mxu0 0
    %1055 = vmatpush.bf16.xpose.msra.mxu0 0
    %1056 = vmatpush.bf16.xpose.msra.mxu0 0
    %1057 = vmatpush.bf16.xpose.msra.mxu0 %v1049
    %1058 = vmatpush.bf16.xpose.msra.mxu0 %v1046
    %1059 = vmatmul.bf16.gmra.mxu0 %v1040
    %v1060 = vpop.f32.mrf.mxu0
    %v1061 = vadd.f32 %v425, %v1060
    %v1062 = vpop.f32.mrf.mxu0
    %v1063 = vadd.f32 %v426, %v1062
    %1064 = vmatmul.bf16.gmra.mxu0 %v1043
    %v1065 = vpop.f32.mrf.mxu0
    %v1066 = vadd.f32 %v427, %v1065
    %v1067 = vpop.f32.mrf.mxu0
    %v1068 = vadd.f32 %v428, %v1067
    %1069 = vdwg.mxu0
    %v1070 = vsel %vm718, %v1061, -inf
    %1071 = vmax.xlane.f32.xlu0 %v1070
    %v1072 = vpop.xlane.xlu0 %1071
    %v1073 = vsel %vm718, %v1063, -inf
    %1074 = vmax.xlane.f32.xlu0 %v1073
    %v1075 = vpop.xlane.xlu0 %1074
    %v1076 = vsel %vm718, %v1066, -inf
    %1077 = vmax.xlane.f32.xlu0 %v1076
    %v1078 = vpop.xlane.xlu0 %1077
    %v1079 = vsel %vm718, %v1068, -inf
    %1080 = vmax.xlane.f32.xlu0 %v1079
    %v1081 = vpop.xlane.xlu0 %1080
    %v1082 = vsub.f32 %v1061, %v1072
    %v1083 = vsub.f32 %v1063, %v1075
    %v1084 = vsub.f32 %v1066, %v1078
    %v1085 = vsub.f32 %v1068, %v1081
    %v1086 = vmul.f32 %v1082, 1.442695
    %v1087 = vpow.pop %v1086
    %v1088 = vmul.f32 %v1083, 1.442695
    %v1089 = vpow.pop %v1088
    %v1090 = vmul.f32 %v1084, 1.442695
    %v1091 = vpow.pop %v1090
    %v1092 = vmul.f32 %v1085, 1.442695
    %v1093 = vpow.pop %v1092
    %v1094 = vsel %vm718, %v1087, 0.0
    %1095 = vadd.xlane.f32.xlu0 %v1094
    %v1096 = vpop.xlane.xlu0 %1095
    %v1097 = vsel %vm718, %v1089, 0.0
    %1098 = vadd.xlane.f32.xlu0 %v1097
    %v1099 = vpop.xlane.xlu0 %1098
    %v1100 = vsel %vm718, %v1091, 0.0
    %1101 = vadd.xlane.f32.xlu0 %v1100
    %v1102 = vpop.xlane.xlu0 %1101
    %v1103 = vsel %vm718, %v1093, 0.0
    %1104 = vadd.xlane.f32.xlu0 %v1103
    %v1105 = vpop.xlane.xlu0 %1104
    %v1106 = vpack.c.bf16 %v1089, %v1087
    %v1107 = vpack.c.bf16 %v1093, %v1091
    %1108 = vrot.lane.b32.xlu0 %v788, 64
    %v1109 = vpop.permute.xlu0 %1108
    %1110 = vrot.lane.b32.xlu0 %v789, 64
    %v1111 = vpop.permute.xlu0 %1110
    %v1115 = vsel %vm718, %v1106, 0
    %v1118 = vsel %vm718, %v1107, 0
    %1120 = vmatpush.bf16.msra.mxu0 0
    %1121 = vmatpush.bf16.msra.mxu0 0
    %1122 = vmatpush.bf16.msra.mxu0 0
    %1123 = vmatpush.bf16.msra.mxu0 0
    %1124 = vmatpush.bf16.msra.mxu0 0
    %1125 = vmatpush.bf16.msra.mxu0 0
    %1126 = vmatpush.bf16.msra.mxu0 %v1111
    %1127 = vmatpush.bf16.msra.mxu0 %v1109
    %1128 = vmatmul.bf16.gmra.mxu0 %v1115
    %v1129 = vpop.f32.mrf.mxu0
    %v1130 = vadd.f32 0.0, %v1129
    %v1131 = vpop.f32.mrf.mxu0
    %v1132 = vadd.f32 0.0, %v1131
    %1133 = vmatmul.bf16.gmra.mxu0 %v1118
    %v1134 = vpop.f32.mrf.mxu0
    %v1135 = vadd.f32 0.0, %v1134
    %v1136 = vpop.f32.mrf.mxu0
    %v1137 = vadd.f32 0.0, %v1136
    %1138 = vdwg.mxu0
    %v1139 = vrcp.pop %v1096
    %v1140 = vrcp.pop %v1099
    %v1141 = vrcp.pop %v1102
    %v1142 = vrcp.pop %v1105
    %v1143 = vmul.f32 %v1130, %v1139
    %v1144 = vmul.f32 %v1132, %v1140
    %v1145 = vmul.f32 %v1135, %v1141
    %v1146 = vmul.f32 %v1137, %v1142
    %v1147 = vpack.c.bf16 %v1144, %v1143
    %v1148 = vpack.c.bf16 %v1146, %v1145
    %v1153 = vunpack.c.l.b16 %v470
    %v1154 = vunpack.c.l.b16 %v471
    %v1155 = vunpack.c.l.b16 %v472
    %v1156 = vunpack.c.l.b16 %v473
    %v1157 = vpack.c.b16 %v1154, %v1153
    %v1158 = vpack.c.b16 %v1156, %v1155
    %v1162 = vsel %vm718, %v1147, 0
    %v1165 = vsel %vm718, %v1148, 0
    %1167 = vmatpush.bf16.msra.mxu0 0
    %1168 = vmatpush.bf16.msra.mxu0 0
    %1169 = vmatpush.bf16.msra.mxu0 0
    %1170 = vmatpush.bf16.msra.mxu0 0
    %1171 = vmatpush.bf16.msra.mxu0 0
    %1172 = vmatpush.bf16.msra.mxu0 0
    %1173 = vmatpush.bf16.msra.mxu0 %v1158
    %1174 = vmatpush.bf16.msra.mxu0 %v1157
    %1175 = vmatmul.bf16.gmra.mxu0 %v1162
    %v1176 = vpop.f32.mrf.mxu0
    %v1177 = vadd.f32 0.0, %v1176
    %v1178 = vpop.f32.mrf.mxu0
    %v1179 = vadd.f32 0.0, %v1178
    %1180 = vmatmul.bf16.gmra.mxu0 %v1165
    %v1181 = vpop.f32.mrf.mxu0
    %v1182 = vadd.f32 0.0, %v1181
    %v1183 = vpop.f32.mrf.mxu0
    %v1184 = vadd.f32 0.0, %v1183
    %1185 = vdwg.mxu0
    %v1186 = vadd.f32 %v1027, %v1177
    %v1187 = vadd.f32 %v1028, %v1179
    %v1188 = vadd.f32 %v1029, %v1182
    %v1189 = vadd.f32 %v1030, %v1184
    %1190 = vrot.lane.b32.xlu0 %v714, 32
    %v1191 = vpop.permute.xlu0 %1190
    %1192 = vrot.lane.b32.xlu0 %v715, 32
    %v1193 = vpop.permute.xlu0 %1192
    %1194 = vrot.lane.b32.xlu0 %v716, 32
    %v1195 = vpop.permute.xlu0 %1194
    %1196 = vrot.lane.b32.xlu0 %v717, 32
    %v1197 = vpop.permute.xlu0 %1196
    %v1199 = vsel %vm718, %v1191, 0
    %v1202 = vsel %vm718, %v1193, 0
    %v1205 = vsel %vm718, %v1195, 0
    %v1208 = vsel %vm718, %v1197, 0
    %1210 = vmatpush.bf16.xpose.msra.mxu0 0
    %1211 = vmatpush.bf16.xpose.msra.mxu0 0
    %1212 = vmatpush.bf16.xpose.msra.mxu0 0
    %1213 = vmatpush.bf16.xpose.msra.mxu0 0
    %1214 = vmatpush.bf16.xpose.msra.mxu0 0
    %1215 = vmatpush.bf16.xpose.msra.mxu0 0
    %1216 = vmatpush.bf16.xpose.msra.mxu0 %v1208
    %1217 = vmatpush.bf16.xpose.msra.mxu0 %v1205
    %1218 = vmatmul.bf16.gmra.mxu0 %v1199
    %v1219 = vpop.f32.mrf.mxu0
    %v1220 = vadd.f32 %v425, %v1219
    %v1221 = vpop.f32.mrf.mxu0
    %v1222 = vadd.f32 %v426, %v1221
    %1223 = vmatmul.bf16.gmra.mxu0 %v1202
    %v1224 = vpop.f32.mrf.mxu0
    %v1225 = vadd.f32 %v427, %v1224
    %v1226 = vpop.f32.mrf.mxu0
    %v1227 = vadd.f32 %v428, %v1226
    %1228 = vdwg.mxu0
    %v1229 = vsel %vm718, %v1220, -inf
    %1230 = vmax.xlane.f32.xlu0 %v1229
    %v1231 = vpop.xlane.xlu0 %1230
    %v1232 = vsel %vm718, %v1222, -inf
    %1233 = vmax.xlane.f32.xlu0 %v1232
    %v1234 = vpop.xlane.xlu0 %1233
    %v1235 = vsel %vm718, %v1225, -inf
    %1236 = vmax.xlane.f32.xlu0 %v1235
    %v1237 = vpop.xlane.xlu0 %1236
    %v1238 = vsel %vm718, %v1227, -inf
    %1239 = vmax.xlane.f32.xlu0 %v1238
    %v1240 = vpop.xlane.xlu0 %1239
    %v1241 = vsub.f32 %v1220, %v1231
    %v1242 = vsub.f32 %v1222, %v1234
    %v1243 = vsub.f32 %v1225, %v1237
    %v1244 = vsub.f32 %v1227, %v1240
    %v1245 = vmul.f32 %v1241, 1.442695
    %v1246 = vpow.pop %v1245
    %v1247 = vmul.f32 %v1242, 1.442695
    %v1248 = vpow.pop %v1247
    %v1249 = vmul.f32 %v1243, 1.442695
    %v1250 = vpow.pop %v1249
    %v1251 = vmul.f32 %v1244, 1.442695
    %v1252 = vpow.pop %v1251
    %v1253 = vsel %vm718, %v1246, 0.0
    %1254 = vadd.xlane.f32.xlu0 %v1253
    %v1255 = vpop.xlane.xlu0 %1254
    %v1256 = vsel %vm718, %v1248, 0.0
    %1257 = vadd.xlane.f32.xlu0 %v1256
    %v1258 = vpop.xlane.xlu0 %1257
    %v1259 = vsel %vm718, %v1250, 0.0
    %1260 = vadd.xlane.f32.xlu0 %v1259
    %v1261 = vpop.xlane.xlu0 %1260
    %v1262 = vsel %vm718, %v1252, 0.0
    %1263 = vadd.xlane.f32.xlu0 %v1262
    %v1264 = vpop.xlane.xlu0 %1263
    %v1265 = vpack.c.bf16 %v1248, %v1246
    %v1266 = vpack.c.bf16 %v1252, %v1250
    %1267 = vrot.lane.b32.xlu0 %v788, 32
    %v1268 = vpop.permute.xlu0 %1267
    %1269 = vrot.lane.b32.xlu0 %v789, 32
    %v1270 = vpop.permute.xlu0 %1269
    %v1274 = vsel %vm718, %v1265, 0
    %v1277 = vsel %vm718, %v1266, 0
    %1279 = vmatpush.bf16.msra.mxu0 0
    %1280 = vmatpush.bf16.msra.mxu0 0
    %1281 = vmatpush.bf16.msra.mxu0 0
    %1282 = vmatpush.bf16.msra.mxu0 0
    %1283 = vmatpush.bf16.msra.mxu0 0
    %1284 = vmatpush.bf16.msra.mxu0 0
    %1285 = vmatpush.bf16.msra.mxu0 %v1270
    %1286 = vmatpush.bf16.msra.mxu0 %v1268
    %1287 = vmatmul.bf16.gmra.mxu0 %v1274
    %v1288 = vpop.f32.mrf.mxu0
    %v1289 = vadd.f32 0.0, %v1288
    %v1290 = vpop.f32.mrf.mxu0
    %v1291 = vadd.f32 0.0, %v1290
    %1292 = vmatmul.bf16.gmra.mxu0 %v1277
    %v1293 = vpop.f32.mrf.mxu0
    %v1294 = vadd.f32 0.0, %v1293
    %v1295 = vpop.f32.mrf.mxu0
    %v1296 = vadd.f32 0.0, %v1295
    %1297 = vdwg.mxu0
    %v1298 = vrcp.pop %v1255
    %v1299 = vrcp.pop %v1258
    %v1300 = vrcp.pop %v1261
    %v1301 = vrcp.pop %v1264
    %v1302 = vmul.f32 %v1289, %v1298
    %v1303 = vmul.f32 %v1291, %v1299
    %v1304 = vmul.f32 %v1294, %v1300
    %v1305 = vmul.f32 %v1296, %v1301
    %v1306 = vpack.c.bf16 %v1303, %v1302
    %v1307 = vpack.c.bf16 %v1305, %v1304
    %v1312 = vunpack.c.l.b16 %v474
    %v1313 = vunpack.c.l.b16 %v475
    %v1314 = vunpack.c.l.b16 %v476
    %v1315 = vunpack.c.l.b16 %v477
    %v1316 = vpack.c.b16 %v1313, %v1312
    %v1317 = vpack.c.b16 %v1315, %v1314
    %v1321 = vsel %vm718, %v1306, 0
    %v1324 = vsel %vm718, %v1307, 0
    %1326 = vmatpush.bf16.msra.mxu0 0
    %1327 = vmatpush.bf16.msra.mxu0 0
    %1328 = vmatpush.bf16.msra.mxu0 0
    %1329 = vmatpush.bf16.msra.mxu0 0
    %1330 = vmatpush.bf16.msra.mxu0 0
    %1331 = vmatpush.bf16.msra.mxu0 0
    %1332 = vmatpush.bf16.msra.mxu0 %v1317
    %1333 = vmatpush.bf16.msra.mxu0 %v1316
    %1334 = vmatmul.bf16.gmra.mxu0 %v1321
    %v1335 = vpop.f32.mrf.mxu0
    %v1336 = vadd.f32 0.0, %v1335
    %v1337 = vpop.f32.mrf.mxu0
    %v1338 = vadd.f32 0.0, %v1337
    %1339 = vmatmul.bf16.gmra.mxu0 %v1324
    %v1340 = vpop.f32.mrf.mxu0
    %v1341 = vadd.f32 0.0, %v1340
    %v1342 = vpop.f32.mrf.mxu0
    %v1343 = vadd.f32 0.0, %v1342
    %1344 = vdwg.mxu0
    %v1345 = vadd.f32 %v1186, %v1336
    %v1346 = vadd.f32 %v1187, %v1338
    %v1347 = vadd.f32 %v1188, %v1341
    %v1348 = vadd.f32 %v1189, %v1343
    %v1349 = vpack.c.bf16 %v1346, %v1345
    %v1350 = vpack.c.bf16 %v1348, %v1347
    %v1352 = vperm.slane %v495, 0
    %v1370 = vunpack.c.l.b16 %v479
    %v1371 = vunpack.c.l.b16 %v480
    %v1372 = vunpack.c.l.b16 %v481
    %v1373 = vunpack.c.l.b16 %v482
    %v1374 = vunpack.c.l.b16 %v483
    %v1375 = vunpack.c.l.b16 %v484
    %v1376 = vunpack.c.l.b16 %v485
    %v1377 = vunpack.c.l.b16 %v486
    %v1378 = vunpack.c.l.b16 %v487
    %v1379 = vunpack.c.l.b16 %v488
    %v1380 = vunpack.c.l.b16 %v489
    %v1381 = vunpack.c.l.b16 %v490
    %v1382 = vunpack.c.l.b16 %v491
    %v1383 = vunpack.c.l.b16 %v492
    %v1384 = vunpack.c.l.b16 %v493
    %v1385 = vunpack.c.l.b16 %v494
    %v1386 = vpack.c.b16 %v1371, %v1370
    %v1387 = vpack.c.b16 %v1373, %v1372
    %v1388 = vpack.c.b16 %v1375, %v1374
    %v1389 = vpack.c.b16 %v1377, %v1376
    %v1390 = vpack.c.b16 %v1379, %v1378
    %v1391 = vpack.c.b16 %v1381, %v1380
    %v1392 = vpack.c.b16 %v1383, %v1382
    %v1393 = vpack.c.b16 %v1385, %v1384
    %1402 = vmatpush.bf16.msra.mxu0 %v1393
    %1403 = vmatpush.bf16.msra.mxu0 %v1392
    %1404 = vmatpush.bf16.msra.mxu0 %v1391
    %1405 = vmatpush.bf16.msra.mxu0 %v1390
    %1406 = vmatpush.bf16.msra.mxu0 %v1389
    %1407 = vmatpush.bf16.msra.mxu0 %v1388
    %1408 = vmatpush.bf16.msra.mxu0 %v1387
    %1409 = vmatpush.bf16.msra.mxu0 %v1386
    %1410 = vmatmul.bf16.gmra.mxu0 %v1349
    %v1411 = vpop.f32.mrf.mxu0
    %v1412 = vadd.f32 %v1352, %v1411
    %v1413 = vpop.f32.mrf.mxu0
    %v1414 = vadd.f32 %v1352, %v1413
    %1415 = vmatmul.bf16.gmra.mxu0 %v1350
    %v1416 = vpop.f32.mrf.mxu0
    %v1417 = vadd.f32 %v1352, %v1416
    %v1418 = vpop.f32.mrf.mxu0
    %v1419 = vadd.f32 %v1352, %v1418
    %1420 = vdwg.mxu0
    %v1421 = vmax.f32 %v1412, 0.0
    %v1422 = vmax.f32 %v1414, 0.0
    %v1423 = vmax.f32 %v1417, 0.0
    %v1424 = vmax.f32 %v1419, 0.0
    %v1425 = vpack.c.bf16 %v1422, %v1421
    %v1426 = vpack.c.bf16 %v1424, %v1423
    %v1428 = vperm.slane %v512, 0
    %v1446 = vunpack.c.l.b16 %v496
    %v1447 = vunpack.c.l.b16 %v497
    %v1448 = vunpack.c.l.b16 %v498
    %v1449 = vunpack.c.l.b16 %v499
    %v1450 = vunpack.c.l.b16 %v500
    %v1451 = vunpack.c.l.b16 %v501
    %v1452 = vunpack.c.l.b16 %v502
    %v1453 = vunpack.c.l.b16 %v503
    %v1454 = vunpack.c.l.b16 %v504
    %v1455 = vunpack.c.l.b16 %v505
    %v1456 = vunpack.c.l.b16 %v506
    %v1457 = vunpack.c.l.b16 %v507
    %v1458 = vunpack.c.l.b16 %v508
    %v1459 = vunpack.c.l.b16 %v509
    %v1460 = vunpack.c.l.b16 %v510
    %v1461 = vunpack.c.l.b16 %v511
    %v1462 = vpack.c.b16 %v1447, %v1446
    %v1463 = vpack.c.b16 %v1449, %v1448
    %v1464 = vpack.c.b16 %v1451, %v1450
    %v1465 = vpack.c.b16 %v1453, %v1452
    %v1466 = vpack.c.b16 %v1455, %v1454
    %v1467 = vpack.c.b16 %v1457, %v1456
    %v1468 = vpack.c.b16 %v1459, %v1458
    %v1469 = vpack.c.b16 %v1461, %v1460
    %1478 = vmatpush.bf16.msra.mxu0 %v1469
    %1479 = vmatpush.bf16.msra.mxu0 %v1468
    %1480 = vmatpush.bf16.msra.mxu0 %v1467
    %1481 = vmatpush.bf16.msra.mxu0 %v1466
    %1482 = vmatpush.bf16.msra.mxu0 %v1465
    %1483 = vmatpush.bf16.msra.mxu0 %v1464
    %1484 = vmatpush.bf16.msra.mxu0 %v1463
    %1485 = vmatpush.bf16.msra.mxu0 %v1462
    %1486 = vmatmul.bf16.gmra.mxu0 %v1425
    %v1487 = vpop.f32.mrf.mxu0
    %v1488 = vadd.f32 %v1428, %v1487
    %v1489 = vpop.f32.mrf.mxu0
    %v1490 = vadd.f32 %v1428, %v1489
    %1491 = vmatmul.bf16.gmra.mxu0 %v1426
    %v1492 = vpop.f32.mrf.mxu0
    %v1493 = vadd.f32 %v1428, %v1492
    %v1494 = vpop.f32.mrf.mxu0
    %v1495 = vadd.f32 %v1428, %v1494
    %1496 = vdwg.mxu0
    %v1497 = vadd.f32 %v1345, %v1488
    %v1498 = vadd.f32 %v1346, %v1490
    %v1499 = vadd.f32 %v1347, %v1493
    %v1500 = vadd.f32 %v1348, %v1495
    %s1501 = scalar_lea.vmem [#allocation2], 192
    %v1502 = vld [vmem:[%s1501] sm:$0xff]
    %v1503 = vld [vmem:[%s1501 + $0x8] sm:$0xf]
    %v1504 = vld [vmem:[%s1501 + $0xc] sm:$0xff]
    %v1505 = vld [vmem:[%s1501 + $0x14] sm:$0xf]
    %v1506 = vld [vmem:[%s1501 + $0x18] sm:$0xff]
    %v1507 = vld [vmem:[%s1501 + $0x20] sm:$0xf]
    %v1508 = vld [vmem:[%s1501 + $0x24] sm:$0xff]
    %v1509 = vld [vmem:[%s1501 + $0x2c] sm:$0xf]
    %v1510 = vld [vmem:[%s1501 + $0x30] sm:$0xff]
    %v1511 = vld [vmem:[%s1501 + $0x38] sm:$0xf]
    %v1512 = vld [vmem:[%s1501 + $0x3c] sm:$0xff]
    %v1513 = vld [vmem:[%s1501 + $0x44] sm:$0xf]
    %v1514 = vld [vmem:[%s1501 + $0x48] sm:$0xff]
    %v1515 = vld [vmem:[%s1501 + $0x50] sm:$0xf]
    %v1516 = vld [vmem:[%s1501 + $0x54] sm:$0xff]
    %v1517 = vld [vmem:[%s1501 + $0x5c] sm:$0xf]
    %v1518 = vld [vmem:[%s1501 + $0x60] sm:$0xff]
    %v1519 = vld [vmem:[%s1501 + $0x68] sm:$0xf]
    %v1520 = vld [vmem:[%s1501 + $0x6c] sm:$0xff]
    %v1521 = vld [vmem:[%s1501 + $0x74] sm:$0xf]
    %v1522 = vld [vmem:[%s1501 + $0x78] sm:$0xff]
    %v1523 = vld [vmem:[%s1501 + $0x80] sm:$0xf]
    %v1524 = vld [vmem:[%s1501 + $0x84] sm:$0xff]
    %v1525 = vld [vmem:[%s1501 + $0x8c] sm:$0xf]
    %v1526 = vld [vmem:[%s1501 + $0x90] sm:$0xff]
    %v1527 = vld [vmem:[%s1501 + $0x98] sm:$0xf]
    %v1528 = vld [vmem:[%s1501 + $0x9c] sm:$0xff]
    %v1529 = vld [vmem:[%s1501 + $0xa4] sm:$0xf]
    %v1530 = vld [vmem:[%s1501 + $0xa8] sm:$0xff]
    %v1531 = vld [vmem:[%s1501 + $0xb0] sm:$0xf]
    %v1532 = vld [vmem:[%s1501 + $0xb4] sm:$0xff]
    %v1533 = vld [vmem:[%s1501 + $0xbc] sm:$0xf]
    %s1534 = scalar_lea.vmem %s9, 3
    %v1535 = vld [vmem:[%s1534] sm:$0x7]
    %s1536 = scalar_lea.vmem %s10, 64
    %v1537 = vld [vmem:[%s1536] sm:$0xf]
    %v1538 = vld [vmem:[%s1536 + $0x4] sm:$0xf]
    %v1539 = vld [vmem:[%s1536 + $0x8] sm:$0xf]
    %v1540 = vld [vmem:[%s1536 + $0xc] sm:$0xf]
    %v1541 = vld [vmem:[%s1536 + $0x10] sm:$0xf]
    %v1542 = vld [vmem:[%s1536 + $0x14] sm:$0xf]
    %v1543 = vld [vmem:[%s1536 + $0x18] sm:$0xf]
    %v1544 = vld [vmem:[%s1536 + $0x1c] sm:$0xf]
    %v1545 = vld [vmem:[%s1536 + $0x20] sm:$0xf]
    %v1546 = vld [vmem:[%s1536 + $0x24] sm:$0xf]
    %v1547 = vld [vmem:[%s1536 + $0x28] sm:$0xf]
    %v1548 = vld [vmem:[%s1536 + $0x2c] sm:$0xf]
    %v1549 = vld [vmem:[%s1536 + $0x30] sm:$0xf]
    %v1550 = vld [vmem:[%s1536 + $0x34] sm:$0xf]
    %v1551 = vld [vmem:[%s1536 + $0x38] sm:$0xf]
    %v1552 = vld [vmem:[%s1536 + $0x3c] sm:$0xf]
    %s1553 = scalar_lea.vmem %s11, 1
    %v1554 = vld [vmem:[%s1553] sm:$0x1]
    %s1555 = scalar_lea.vmem %s12, 64
    %v1556 = vld [vmem:[%s1555] sm:$0xf]
    %v1557 = vld [vmem:[%s1555 + $0x4] sm:$0xf]
    %v1558 = vld [vmem:[%s1555 + $0x8] sm:$0xf]
    %v1559 = vld [vmem:[%s1555 + $0xc] sm:$0xf]
    %v1560 = vld [vmem:[%s1555 + $0x10] sm:$0xf]
    %v1561 = vld [vmem:[%s1555 + $0x14] sm:$0xf]
    %v1562 = vld [vmem:[%s1555 + $0x18] sm:$0xf]
    %v1563 = vld [vmem:[%s1555 + $0x1c] sm:$0xf]
    %v1564 = vld [vmem:[%s1555 + $0x20] sm:$0xf]
    %v1565 = vld [vmem:[%s1555 + $0x24] sm:$0xf]
    %v1566 = vld [vmem:[%s1555 + $0x28] sm:$0xf]
    %v1567 = vld [vmem:[%s1555 + $0x2c] sm:$0xf]
    %v1568 = vld [vmem:[%s1555 + $0x30] sm:$0xf]
    %v1569 = vld [vmem:[%s1555 + $0x34] sm:$0xf]
    %v1570 = vld [vmem:[%s1555 + $0x38] sm:$0xf]
    %v1571 = vld [vmem:[%s1555 + $0x3c] sm:$0xf]
    %s1572 = scalar_lea.vmem %s13, 1
    %v1573 = vld [vmem:[%s1572] sm:$0x1]
    %s1574 = scalar_lea.vmem %s14, 64
    %v1575 = vld [vmem:[%s1574] sm:$0xf]
    %v1576 = vld [vmem:[%s1574 + $0x4] sm:$0xf]
    %v1577 = vld [vmem:[%s1574 + $0x8] sm:$0xf]
    %v1578 = vld [vmem:[%s1574 + $0xc] sm:$0xf]
    %v1579 = vld [vmem:[%s1574 + $0x10] sm:$0xf]
    %v1580 = vld [vmem:[%s1574 + $0x14] sm:$0xf]
    %v1581 = vld [vmem:[%s1574 + $0x18] sm:$0xf]
    %v1582 = vld [vmem:[%s1574 + $0x1c] sm:$0xf]
    %v1583 = vld [vmem:[%s1574 + $0x20] sm:$0xf]
    %v1584 = vld [vmem:[%s1574 + $0x24] sm:$0xf]
    %v1585 = vld [vmem:[%s1574 + $0x28] sm:$0xf]
    %v1586 = vld [vmem:[%s1574 + $0x2c] sm:$0xf]
    %v1587 = vld [vmem:[%s1574 + $0x30] sm:$0xf]
    %v1588 = vld [vmem:[%s1574 + $0x34] sm:$0xf]
    %v1589 = vld [vmem:[%s1574 + $0x38] sm:$0xf]
    %v1590 = vld [vmem:[%s1574 + $0x3c] sm:$0xf]
    %s1591 = scalar_lea.vmem %s15, 1
    %v1592 = vld [vmem:[%s1591] sm:$0x1]
    %v1593 = vpack.c.bf16 %v1498, %v1497
    %v1594 = vpack.c.bf16 %v1500, %v1499
    %v1596 = vperm.slane %v1535, 0
    %v1597 = vperm.slane %v1535, 1
    %v1598 = vperm.slane %v1535, 2
    %v1634 = vunpack.c.l.b16 %v1502
    %v1635 = vunpack.c.h.b16 %v1502
    %v1636 = vunpack.c.l.b16 %v1503
    %v1637 = vunpack.c.l.b16 %v1504
    %v1638 = vunpack.c.h.b16 %v1504
    %v1639 = vunpack.c.l.b16 %v1505
    %v1640 = vunpack.c.l.b16 %v1506
    %v1641 = vunpack.c.h.b16 %v1506
    %v1642 = vunpack.c.l.b16 %v1507
    %v1643 = vunpack.c.l.b16 %v1508
    %v1644 = vunpack.c.h.b16 %v1508
    %v1645 = vunpack.c.l.b16 %v1509
    %v1646 = vunpack.c.l.b16 %v1510
    %v1647 = vunpack.c.h.b16 %v1510
    %v1648 = vunpack.c.l.b16 %v1511
    %v1649 = vunpack.c.l.b16 %v1512
    %v1650 = vunpack.c.h.b16 %v1512
    %v1651 = vunpack.c.l.b16 %v1513
    %v1652 = vunpack.c.l.b16 %v1514
    %v1653 = vunpack.c.h.b16 %v1514
    %v1654 = vunpack.c.l.b16 %v1515
    %v1655 = vunpack.c.l.b16 %v1516
    %v1656 = vunpack.c.h.b16 %v1516
    %v1657 = vunpack.c.l.b16 %v1517
    %v1658 = vunpack.c.l.b16 %v1518
    %v1659 = vunpack.c.h.b16 %v1518
    %v1660 = vunpack.c.l.b16 %v1519
    %v1661 = vunpack.c.l.b16 %v1520
    %v1662 = vunpack.c.h.b16 %v1520
    %v1663 = vunpack.c.l.b16 %v1521
    %v1664 = vunpack.c.l.b16 %v1522
    %v1665 = vunpack.c.h.b16 %v1522
    %v1666 = vunpack.c.l.b16 %v1523
    %v1667 = vunpack.c.l.b16 %v1524
    %v1668 = vunpack.c.h.b16 %v1524
    %v1669 = vunpack.c.l.b16 %v1525
    %v1670 = vunpack.c.l.b16 %v1526
    %v1671 = vunpack.c.h.b16 %v1526
    %v1672 = vunpack.c.l.b16 %v1527
    %v1673 = vunpack.c.l.b16 %v1528
    %v1674 = vunpack.c.h.b16 %v1528
    %v1675 = vunpack.c.l.b16 %v1529
    %v1676 = vunpack.c.l.b16 %v1530
    %v1677 = vunpack.c.h.b16 %v1530
    %v1678 = vunpack.c.l.b16 %v1531
    %v1679 = vunpack.c.l.b16 %v1532
    %v1680 = vunpack.c.h.b16 %v1532
    %v1681 = vunpack.c.l.b16 %v1533
    %v1682 = vpack.c.b16 %v1637, %v1634
    %v1683 = vpack.c.b16 %v1638, %v1635
    %v1684 = vpack.c.b16 %v1639, %v1636
    %v1685 = vpack.c.b16 %v1643, %v1640
    %v1686 = vpack.c.b16 %v1644, %v1641
    %v1687 = vpack.c.b16 %v1645, %v1642
    %v1688 = vpack.c.b16 %v1649, %v1646
    %v1689 = vpack.c.b16 %v1650, %v1647
    %v1690 = vpack.c.b16 %v1651, %v1648
    %v1691 = vpack.c.b16 %v1655, %v1652
    %v1692 = vpack.c.b16 %v1656, %v1653
    %v1693 = vpack.c.b16 %v1657, %v1654
    %v1694 = vpack.c.b16 %v1661, %v1658
    %v1695 = vpack.c.b16 %v1662, %v1659
    %v1696 = vpack.c.b16 %v1663, %v1660
    %v1697 = vpack.c.b16 %v1667, %v1664
    %v1698 = vpack.c.b16 %v1668, %v1665
    %v1699 = vpack.c.b16 %v1669, %v1666
    %v1700 = vpack.c.b16 %v1673, %v1670
    %v1701 = vpack.c.b16 %v1674, %v1671
    %v1702 = vpack.c.b16 %v1675, %v1672
    %v1703 = vpack.c.b16 %v1679, %v1676
    %v1704 = vpack.c.b16 %v1680, %v1677
    %v1705 = vpack.c.b16 %v1681, %v1678
    %1730 = vmatpush.bf16.msra.mxu0 %v1703
    %1731 = vmatpush.bf16.msra.mxu0 %v1700
    %1732 = vmatpush.bf16.msra.mxu0 %v1697
    %1733 = vmatpush.bf16.msra.mxu0 %v1694
    %1734 = vmatpush.bf16.msra.mxu0 %v1691
    %1735 = vmatpush.bf16.msra.mxu0 %v1688
    %1736 = vmatpush.bf16.msra.mxu0 %v1685
    %1737 = vmatpush.bf16.msra.mxu0 %v1682
    %1738 = vmatmul.bf16.gmra.mxu0 %v1593
    %v1739 = vpop.f32.mrf.mxu0
    %v1740 = vadd.f32 %v1596, %v1739
    %v1741 = vpop.f32.mrf.mxu0
    %v1742 = vadd.f32 %v1596, %v1741
    %1743 = vmatmul.bf16.gmra.mxu0 %v1594
    %v1744 = vpop.f32.mrf.mxu0
    %v1745 = vadd.f32 %v1596, %v1744
    %v1746 = vpop.f32.mrf.mxu0
    %v1747 = vadd.f32 %v1596, %v1746
    %1748 = vdwg.mxu0
    %1749 = vmatpush.bf16.msra.mxu0 %v1704
    %1750 = vmatpush.bf16.msra.mxu0 %v1701
    %1751 = vmatpush.bf16.msra.mxu0 %v1698
    %1752 = vmatpush.bf16.msra.mxu0 %v1695
    %1753 = vmatpush.bf16.msra.mxu0 %v1692
    %1754 = vmatpush.bf16.msra.mxu0 %v1689
    %1755 = vmatpush.bf16.msra.mxu0 %v1686
    %1756 = vmatpush.bf16.msra.mxu0 %v1683
    %1757 = vmatmul.bf16.gmra.mxu0 %v1593
    %v1758 = vpop.f32.mrf.mxu0
    %v1759 = vadd.f32 %v1597, %v1758
    %v1760 = vpop.f32.mrf.mxu0
    %v1761 = vadd.f32 %v1597, %v1760
    %1762 = vmatmul.bf16.gmra.mxu0 %v1594
    %v1763 = vpop.f32.mrf.mxu0
    %v1764 = vadd.f32 %v1597, %v1763
    %v1765 = vpop.f32.mrf.mxu0
    %v1766 = vadd.f32 %v1597, %v1765
    %1767 = vdwg.mxu0
    %1768 = vmatpush.bf16.msra.mxu0 %v1705
    %1769 = vmatpush.bf16.msra.mxu0 %v1702
    %1770 = vmatpush.bf16.msra.mxu0 %v1699
    %1771 = vmatpush.bf16.msra.mxu0 %v1696
    %1772 = vmatpush.bf16.msra.mxu0 %v1693
    %1773 = vmatpush.bf16.msra.mxu0 %v1690
    %1774 = vmatpush.bf16.msra.mxu0 %v1687
    %1775 = vmatpush.bf16.msra.mxu0 %v1684
    %1776 = vmatmul.bf16.gmra.mxu0 %v1593
    %v1777 = vpop.f32.mrf.mxu0
    %v1778 = vadd.f32 %v1598, %v1777
    %v1779 = vpop.f32.mrf.mxu0
    %v1780 = vadd.f32 %v1598, %v1779
    %1781 = vmatmul.bf16.gmra.mxu0 %v1594
    %v1782 = vpop.f32.mrf.mxu0
    %v1783 = vadd.f32 %v1598, %v1782
    %v1784 = vpop.f32.mrf.mxu0
    %v1785 = vadd.f32 %v1598, %v1784
    %1786 = vdwg.mxu0
    %v1788 = vperm.slane %v1554, 0
    %v1790 = vadd.f32 %v1497, %v1788
    %v1791 = vadd.f32 %v1498, %v1788
    %v1792 = vadd.f32 %v1499, %v1788
    %v1793 = vadd.f32 %v1500, %v1788
    %v1794 = vpack.c.bf16 %v1742, %v1740
    %v1795 = vpack.c.bf16 %v1747, %v1745
    %v1796 = vpack.c.bf16 %v1761, %v1759
    %v1797 = vpack.c.bf16 %v1766, %v1764
    %v1799 = vsel %vm718, %v1794, 0
    %v1802 = vsel %vm718, %v1795, 0
    %v1805 = vsel %vm718, %v1796, 0
    %v1808 = vsel %vm718, %v1797, 0
    %1810 = vmatpush.bf16.xpose.msra.mxu0 0
    %1811 = vmatpush.bf16.xpose.msra.mxu0 0
    %1812 = vmatpush.bf16.xpose.msra.mxu0 0
    %1813 = vmatpush.bf16.xpose.msra.mxu0 0
    %1814 = vmatpush.bf16.xpose.msra.mxu0 0
    %1815 = vmatpush.bf16.xpose.msra.mxu0 0
    %1816 = vmatpush.bf16.xpose.msra.mxu0 %v1808
    %1817 = vmatpush.bf16.xpose.msra.mxu0 %v1805
    %1818 = vmatmul.bf16.gmra.mxu0 %v1799
    %v1819 = vpop.f32.mrf.mxu0
    %v1820 = vadd.f32 %v425, %v1819
    %v1821 = vpop.f32.mrf.mxu0
    %v1822 = vadd.f32 %v426, %v1821
    %1823 = vmatmul.bf16.gmra.mxu0 %v1802
    %v1824 = vpop.f32.mrf.mxu0
    %v1825 = vadd.f32 %v427, %v1824
    %v1826 = vpop.f32.mrf.mxu0
    %v1827 = vadd.f32 %v428, %v1826
    %1828 = vdwg.mxu0
    %v1829 = vsel %vm718, %v1820, -inf
    %1830 = vmax.xlane.f32.xlu0 %v1829
    %v1831 = vpop.xlane.xlu0 %1830
    %v1832 = vsel %vm718, %v1822, -inf
    %1833 = vmax.xlane.f32.xlu0 %v1832
    %v1834 = vpop.xlane.xlu0 %1833
    %v1835 = vsel %vm718, %v1825, -inf
    %1836 = vmax.xlane.f32.xlu0 %v1835
    %v1837 = vpop.xlane.xlu0 %1836
    %v1838 = vsel %vm718, %v1827, -inf
    %1839 = vmax.xlane.f32.xlu0 %v1838
    %v1840 = vpop.xlane.xlu0 %1839
    %v1841 = vsub.f32 %v1820, %v1831
    %v1842 = vsub.f32 %v1822, %v1834
    %v1843 = vsub.f32 %v1825, %v1837
    %v1844 = vsub.f32 %v1827, %v1840
    %v1845 = vmul.f32 %v1841, 1.442695
    %v1846 = vpow.pop %v1845
    %v1847 = vmul.f32 %v1842, 1.442695
    %v1848 = vpow.pop %v1847
    %v1849 = vmul.f32 %v1843, 1.442695
    %v1850 = vpow.pop %v1849
    %v1851 = vmul.f32 %v1844, 1.442695
    %v1852 = vpow.pop %v1851
    %v1853 = vsel %vm718, %v1846, 0.0
    %1854 = vadd.xlane.f32.xlu0 %v1853
    %v1855 = vpop.xlane.xlu0 %1854
    %v1856 = vsel %vm718, %v1848, 0.0
    %1857 = vadd.xlane.f32.xlu0 %v1856
    %v1858 = vpop.xlane.xlu0 %1857
    %v1859 = vsel %vm718, %v1850, 0.0
    %1860 = vadd.xlane.f32.xlu0 %v1859
    %v1861 = vpop.xlane.xlu0 %1860
    %v1862 = vsel %vm718, %v1852, 0.0
    %1863 = vadd.xlane.f32.xlu0 %v1862
    %v1864 = vpop.xlane.xlu0 %1863
    %v1865 = vpack.c.bf16 %v1848, %v1846
    %v1866 = vpack.c.bf16 %v1852, %v1850
    %v1867 = vpack.c.bf16 %v1780, %v1778
    %v1868 = vpack.c.bf16 %v1785, %v1783
    %v1870 = vsel %vm718, %v1865, 0
    %v1873 = vsel %vm718, %v1866, 0
    %1875 = vmatpush.bf16.msra.mxu0 0
    %1876 = vmatpush.bf16.msra.mxu0 0
    %1877 = vmatpush.bf16.msra.mxu0 0
    %1878 = vmatpush.bf16.msra.mxu0 0
    %1879 = vmatpush.bf16.msra.mxu0 0
    %1880 = vmatpush.bf16.msra.mxu0 0
    %1881 = vmatpush.bf16.msra.mxu0 %v1868
    %1882 = vmatpush.bf16.msra.mxu0 %v1867
    %1883 = vmatmul.bf16.gmra.mxu0 %v1870
    %v1884 = vpop.f32.mrf.mxu0
    %v1885 = vadd.f32 0.0, %v1884
    %v1886 = vpop.f32.mrf.mxu0
    %v1887 = vadd.f32 0.0, %v1886
    %1888 = vmatmul.bf16.gmra.mxu0 %v1873
    %v1889 = vpop.f32.mrf.mxu0
    %v1890 = vadd.f32 0.0, %v1889
    %v1891 = vpop.f32.mrf.mxu0
    %v1892 = vadd.f32 0.0, %v1891
    %1893 = vdwg.mxu0
    %v1894 = vrcp.pop %v1855
    %v1895 = vrcp.pop %v1858
    %v1896 = vrcp.pop %v1861
    %v1897 = vrcp.pop %v1864
    %v1898 = vmul.f32 %v1885, %v1894
    %v1899 = vmul.f32 %v1887, %v1895
    %v1900 = vmul.f32 %v1890, %v1896
    %v1901 = vmul.f32 %v1892, %v1897
    %v1902 = vpack.c.bf16 %v1899, %v1898
    %v1903 = vpack.c.bf16 %v1901, %v1900
    %v1908 = vunpack.c.l.b16 %v1537
    %v1909 = vunpack.c.l.b16 %v1538
    %v1910 = vunpack.c.l.b16 %v1539
    %v1911 = vunpack.c.l.b16 %v1540
    %v1912 = vpack.c.b16 %v1909, %v1908
    %v1913 = vpack.c.b16 %v1911, %v1910
    %v1917 = vsel %vm718, %v1902, 0
    %v1920 = vsel %vm718, %v1903, 0
    %1922 = vmatpush.bf16.msra.mxu0 0
    %1923 = vmatpush.bf16.msra.mxu0 0
    %1924 = vmatpush.bf16.msra.mxu0 0
    %1925 = vmatpush.bf16.msra.mxu0 0
    %1926 = vmatpush.bf16.msra.mxu0 0
    %1927 = vmatpush.bf16.msra.mxu0 0
    %1928 = vmatpush.bf16.msra.mxu0 %v1913
    %1929 = vmatpush.bf16.msra.mxu0 %v1912
    %1930 = vmatmul.bf16.gmra.mxu0 %v1917
    %v1931 = vpop.f32.mrf.mxu0
    %v1932 = vadd.f32 0.0, %v1931
    %v1933 = vpop.f32.mrf.mxu0
    %v1934 = vadd.f32 0.0, %v1933
    %1935 = vmatmul.bf16.gmra.mxu0 %v1920
    %v1936 = vpop.f32.mrf.mxu0
    %v1937 = vadd.f32 0.0, %v1936
    %v1938 = vpop.f32.mrf.mxu0
    %v1939 = vadd.f32 0.0, %v1938
    %1940 = vdwg.mxu0
    %v1941 = vadd.f32 %v1790, %v1932
    %v1942 = vadd.f32 %v1791, %v1934
    %v1943 = vadd.f32 %v1792, %v1937
    %v1944 = vadd.f32 %v1793, %v1939
    %1947 = vrot.lane.b32.xlu0 %v1794, 96
    %v1948 = vpop.permute.xlu0 %1947
    %1949 = vrot.lane.b32.xlu0 %v1795, 96
    %v1950 = vpop.permute.xlu0 %1949
    %1953 = vrot.lane.b32.xlu0 %v1796, 96
    %v1954 = vpop.permute.xlu0 %1953
    %1955 = vrot.lane.b32.xlu0 %v1797, 96
    %v1956 = vpop.permute.xlu0 %1955
    %v1958 = vsel %vm718, %v1948, 0
    %v1961 = vsel %vm718, %v1950, 0
    %v1964 = vsel %vm718, %v1954, 0
    %v1967 = vsel %vm718, %v1956, 0
    %1969 = vmatpush.bf16.xpose.msra.mxu0 0
    %1970 = vmatpush.bf16.xpose.msra.mxu0 0
    %1971 = vmatpush.bf16.xpose.msra.mxu0 0
    %1972 = vmatpush.bf16.xpose.msra.mxu0 0
    %1973 = vmatpush.bf16.xpose.msra.mxu0 0
    %1974 = vmatpush.bf16.xpose.msra.mxu0 0
    %1975 = vmatpush.bf16.xpose.msra.mxu0 %v1967
    %1976 = vmatpush.bf16.xpose.msra.mxu0 %v1964
    %1977 = vmatmul.bf16.gmra.mxu0 %v1958
    %v1978 = vpop.f32.mrf.mxu0
    %v1979 = vadd.f32 %v425, %v1978
    %v1980 = vpop.f32.mrf.mxu0
    %v1981 = vadd.f32 %v426, %v1980
    %1982 = vmatmul.bf16.gmra.mxu0 %v1961
    %v1983 = vpop.f32.mrf.mxu0
    %v1984 = vadd.f32 %v427, %v1983
    %v1985 = vpop.f32.mrf.mxu0
    %v1986 = vadd.f32 %v428, %v1985
    %1987 = vdwg.mxu0
    %v1988 = vsel %vm718, %v1979, -inf
    %1989 = vmax.xlane.f32.xlu0 %v1988
    %v1990 = vpop.xlane.xlu0 %1989
    %v1991 = vsel %vm718, %v1981, -inf
    %1992 = vmax.xlane.f32.xlu0 %v1991
    %v1993 = vpop.xlane.xlu0 %1992
    %v1994 = vsel %vm718, %v1984, -inf
    %1995 = vmax.xlane.f32.xlu0 %v1994
    %v1996 = vpop.xlane.xlu0 %1995
    %v1997 = vsel %vm718, %v1986, -inf
    %1998 = vmax.xlane.f32.xlu0 %v1997
    %v1999 = vpop.xlane.xlu0 %1998
    %v2000 = vsub.f32 %v1979, %v1990
    %v2001 = vsub.f32 %v1981, %v1993
    %v2002 = vsub.f32 %v1984, %v1996
    %v2003 = vsub.f32 %v1986, %v1999
    %v2004 = vmul.f32 %v2000, 1.442695
    %v2005 = vpow.pop %v2004
    %v2006 = vmul.f32 %v2001, 1.442695
    %v2007 = vpow.pop %v2006
    %v2008 = vmul.f32 %v2002, 1.442695
    %v2009 = vpow.pop %v2008
    %v2010 = vmul.f32 %v2003, 1.442695
    %v2011 = vpow.pop %v2010
    %v2012 = vsel %vm718, %v2005, 0.0
    %2013 = vadd.xlane.f32.xlu0 %v2012
    %v2014 = vpop.xlane.xlu0 %2013
    %v2015 = vsel %vm718, %v2007, 0.0
    %2016 = vadd.xlane.f32.xlu0 %v2015
    %v2017 = vpop.xlane.xlu0 %2016
    %v2018 = vsel %vm718, %v2009, 0.0
    %2019 = vadd.xlane.f32.xlu0 %v2018
    %v2020 = vpop.xlane.xlu0 %2019
    %v2021 = vsel %vm718, %v2011, 0.0
    %2022 = vadd.xlane.f32.xlu0 %v2021
    %v2023 = vpop.xlane.xlu0 %2022
    %v2024 = vpack.c.bf16 %v2007, %v2005
    %v2025 = vpack.c.bf16 %v2011, %v2009
    %2028 = vrot.lane.b32.xlu0 %v1867, 96
    %v2029 = vpop.permute.xlu0 %2028
    %2030 = vrot.lane.b32.xlu0 %v1868, 96
    %v2031 = vpop.permute.xlu0 %2030
    %v2035 = vsel %vm718, %v2024, 0
    %v2038 = vsel %vm718, %v2025, 0
    %2040 = vmatpush.bf16.msra.mxu0 0
    %2041 = vmatpush.bf16.msra.mxu0 0
    %2042 = vmatpush.bf16.msra.mxu0 0
    %2043 = vmatpush.bf16.msra.mxu0 0
    %2044 = vmatpush.bf16.msra.mxu0 0
    %2045 = vmatpush.bf16.msra.mxu0 0
    %2046 = vmatpush.bf16.msra.mxu0 %v2031
    %2047 = vmatpush.bf16.msra.mxu0 %v2029
    %2048 = vmatmul.bf16.gmra.mxu0 %v2035
    %v2049 = vpop.f32.mrf.mxu0
    %v2050 = vadd.f32 0.0, %v2049
    %v2051 = vpop.f32.mrf.mxu0
    %v2052 = vadd.f32 0.0, %v2051
    %2053 = vmatmul.bf16.gmra.mxu0 %v2038
    %v2054 = vpop.f32.mrf.mxu0
    %v2055 = vadd.f32 0.0, %v2054
    %v2056 = vpop.f32.mrf.mxu0
    %v2057 = vadd.f32 0.0, %v2056
    %2058 = vdwg.mxu0
    %v2059 = vrcp.pop %v2014
    %v2060 = vrcp.pop %v2017
    %v2061 = vrcp.pop %v2020
    %v2062 = vrcp.pop %v2023
    %v2063 = vmul.f32 %v2050, %v2059
    %v2064 = vmul.f32 %v2052, %v2060
    %v2065 = vmul.f32 %v2055, %v2061
    %v2066 = vmul.f32 %v2057, %v2062
    %v2067 = vpack.c.bf16 %v2064, %v2063
    %v2068 = vpack.c.bf16 %v2066, %v2065
    %v2073 = vunpack.c.l.b16 %v1541
    %v2074 = vunpack.c.l.b16 %v1542
    %v2075 = vunpack.c.l.b16 %v1543
    %v2076 = vunpack.c.l.b16 %v1544
    %v2077 = vpack.c.b16 %v2074, %v2073
    %v2078 = vpack.c.b16 %v2076, %v2075
    %v2082 = vsel %vm718, %v2067, 0
    %v2085 = vsel %vm718, %v2068, 0
    %2087 = vmatpush.bf16.msra.mxu0 0
    %2088 = vmatpush.bf16.msra.mxu0 0
    %2089 = vmatpush.bf16.msra.mxu0 0
    %2090 = vmatpush.bf16.msra.mxu0 0
    %2091 = vmatpush.bf16.msra.mxu0 0
    %2092 = vmatpush.bf16.msra.mxu0 0
    %2093 = vmatpush.bf16.msra.mxu0 %v2078
    %2094 = vmatpush.bf16.msra.mxu0 %v2077
    %2095 = vmatmul.bf16.gmra.mxu0 %v2082
    %v2096 = vpop.f32.mrf.mxu0
    %v2097 = vadd.f32 0.0, %v2096
    %v2098 = vpop.f32.mrf.mxu0
    %v2099 = vadd.f32 0.0, %v2098
    %2100 = vmatmul.bf16.gmra.mxu0 %v2085
    %v2101 = vpop.f32.mrf.mxu0
    %v2102 = vadd.f32 0.0, %v2101
    %v2103 = vpop.f32.mrf.mxu0
    %v2104 = vadd.f32 0.0, %v2103
    %2105 = vdwg.mxu0
    %v2106 = vadd.f32 %v1941, %v2097
    %v2107 = vadd.f32 %v1942, %v2099
    %v2108 = vadd.f32 %v1943, %v2102
    %v2109 = vadd.f32 %v1944, %v2104
    %2110 = vrot.lane.b32.xlu0 %v1794, 64
    %v2111 = vpop.permute.xlu0 %2110
    %2112 = vrot.lane.b32.xlu0 %v1795, 64
    %v2113 = vpop.permute.xlu0 %2112
    %2114 = vrot.lane.b32.xlu0 %v1796, 64
    %v2115 = vpop.permute.xlu0 %2114
    %2116 = vrot.lane.b32.xlu0 %v1797, 64
    %v2117 = vpop.permute.xlu0 %2116
    %v2119 = vsel %vm718, %v2111, 0
    %v2122 = vsel %vm718, %v2113, 0
    %v2125 = vsel %vm718, %v2115, 0
    %v2128 = vsel %vm718, %v2117, 0
    %2130 = vmatpush.bf16.xpose.msra.mxu0 0
    %2131 = vmatpush.bf16.xpose.msra.mxu0 0
    %2132 = vmatpush.bf16.xpose.msra.mxu0 0
    %2133 = vmatpush.bf16.xpose.msra.mxu0 0
    %2134 = vmatpush.bf16.xpose.msra.mxu0 0
    %2135 = vmatpush.bf16.xpose.msra.mxu0 0
    %2136 = vmatpush.bf16.xpose.msra.mxu0 %v2128
    %2137 = vmatpush.bf16.xpose.msra.mxu0 %v2125
    %2138 = vmatmul.bf16.gmra.mxu0 %v2119
    %v2139 = vpop.f32.mrf.mxu0
    %v2140 = vadd.f32 %v425, %v2139
    %v2141 = vpop.f32.mrf.mxu0
    %v2142 = vadd.f32 %v426, %v2141
    %2143 = vmatmul.bf16.gmra.mxu0 %v2122
    %v2144 = vpop.f32.mrf.mxu0
    %v2145 = vadd.f32 %v427, %v2144
    %v2146 = vpop.f32.mrf.mxu0
    %v2147 = vadd.f32 %v428, %v2146
    %2148 = vdwg.mxu0
    %v2149 = vsel %vm718, %v2140, -inf
    %2150 = vmax.xlane.f32.xlu0 %v2149
    %v2151 = vpop.xlane.xlu0 %2150
    %v2152 = vsel %vm718, %v2142, -inf
    %2153 = vmax.xlane.f32.xlu0 %v2152
    %v2154 = vpop.xlane.xlu0 %2153
    %v2155 = vsel %vm718, %v2145, -inf
    %2156 = vmax.xlane.f32.xlu0 %v2155
    %v2157 = vpop.xlane.xlu0 %2156
    %v2158 = vsel %vm718, %v2147, -inf
    %2159 = vmax.xlane.f32.xlu0 %v2158
    %v2160 = vpop.xlane.xlu0 %2159
    %v2161 = vsub.f32 %v2140, %v2151
    %v2162 = vsub.f32 %v2142, %v2154
    %v2163 = vsub.f32 %v2145, %v2157
    %v2164 = vsub.f32 %v2147, %v2160
    %v2165 = vmul.f32 %v2161, 1.442695
    %v2166 = vpow.pop %v2165
    %v2167 = vmul.f32 %v2162, 1.442695
    %v2168 = vpow.pop %v2167
    %v2169 = vmul.f32 %v2163, 1.442695
    %v2170 = vpow.pop %v2169
    %v2171 = vmul.f32 %v2164, 1.442695
    %v2172 = vpow.pop %v2171
    %v2173 = vsel %vm718, %v2166, 0.0
    %2174 = vadd.xlane.f32.xlu0 %v2173
    %v2175 = vpop.xlane.xlu0 %2174
    %v2176 = vsel %vm718, %v2168, 0.0
    %2177 = vadd.xlane.f32.xlu0 %v2176
    %v2178 = vpop.xlane.xlu0 %2177
    %v2179 = vsel %vm718, %v2170, 0.0
    %2180 = vadd.xlane.f32.xlu0 %v2179
    %v2181 = vpop.xlane.xlu0 %2180
    %v2182 = vsel %vm718, %v2172, 0.0
    %2183 = vadd.xlane.f32.xlu0 %v2182
    %v2184 = vpop.xlane.xlu0 %2183
    %v2185 = vpack.c.bf16 %v2168, %v2166
    %v2186 = vpack.c.bf16 %v2172, %v2170
    %2187 = vrot.lane.b32.xlu0 %v1867, 64
    %v2188 = vpop.permute.xlu0 %2187
    %2189 = vrot.lane.b32.xlu0 %v1868, 64
    %v2190 = vpop.permute.xlu0 %2189
    %v2194 = vsel %vm718, %v2185, 0
    %v2197 = vsel %vm718, %v2186, 0
    %2199 = vmatpush.bf16.msra.mxu0 0
    %2200 = vmatpush.bf16.msra.mxu0 0
    %2201 = vmatpush.bf16.msra.mxu0 0
    %2202 = vmatpush.bf16.msra.mxu0 0
    %2203 = vmatpush.bf16.msra.mxu0 0
    %2204 = vmatpush.bf16.msra.mxu0 0
    %2205 = vmatpush.bf16.msra.mxu0 %v2190
    %2206 = vmatpush.bf16.msra.mxu0 %v2188
    %2207 = vmatmul.bf16.gmra.mxu0 %v2194
    %v2208 = vpop.f32.mrf.mxu0
    %v2209 = vadd.f32 0.0, %v2208
    %v2210 = vpop.f32.mrf.mxu0
    %v2211 = vadd.f32 0.0, %v2210
    %2212 = vmatmul.bf16.gmra.mxu0 %v2197
    %v2213 = vpop.f32.mrf.mxu0
    %v2214 = vadd.f32 0.0, %v2213
    %v2215 = vpop.f32.mrf.mxu0
    %v2216 = vadd.f32 0.0, %v2215
    %2217 = vdwg.mxu0
    %v2218 = vrcp.pop %v2175
    %v2219 = vrcp.pop %v2178
    %v2220 = vrcp.pop %v2181
    %v2221 = vrcp.pop %v2184
    %v2222 = vmul.f32 %v2209, %v2218
    %v2223 = vmul.f32 %v2211, %v2219
    %v2224 = vmul.f32 %v2214, %v2220
    %v2225 = vmul.f32 %v2216, %v2221
    %v2226 = vpack.c.bf16 %v2223, %v2222
    %v2227 = vpack.c.bf16 %v2225, %v2224
    %v2232 = vunpack.c.l.b16 %v1545
    %v2233 = vunpack.c.l.b16 %v1546
    %v2234 = vunpack.c.l.b16 %v1547
    %v2235 = vunpack.c.l.b16 %v1548
    %v2236 = vpack.c.b16 %v2233, %v2232
    %v2237 = vpack.c.b16 %v2235, %v2234
    %v2241 = vsel %vm718, %v2226, 0
    %v2244 = vsel %vm718, %v2227, 0
    %2246 = vmatpush.bf16.msra.mxu0 0
    %2247 = vmatpush.bf16.msra.mxu0 0
    %2248 = vmatpush.bf16.msra.mxu0 0
    %2249 = vmatpush.bf16.msra.mxu0 0
    %2250 = vmatpush.bf16.msra.mxu0 0
    %2251 = vmatpush.bf16.msra.mxu0 0
    %2252 = vmatpush.bf16.msra.mxu0 %v2237
    %2253 = vmatpush.bf16.msra.mxu0 %v2236
    %2254 = vmatmul.bf16.gmra.mxu0 %v2241
    %v2255 = vpop.f32.mrf.mxu0
    %v2256 = vadd.f32 0.0, %v2255
    %v2257 = vpop.f32.mrf.mxu0
    %v2258 = vadd.f32 0.0, %v2257
    %2259 = vmatmul.bf16.gmra.mxu0 %v2244
    %v2260 = vpop.f32.mrf.mxu0
    %v2261 = vadd.f32 0.0, %v2260
    %v2262 = vpop.f32.mrf.mxu0
    %v2263 = vadd.f32 0.0, %v2262
    %2264 = vdwg.mxu0
    %v2265 = vadd.f32 %v2106, %v2256
    %v2266 = vadd.f32 %v2107, %v2258
    %v2267 = vadd.f32 %v2108, %v2261
    %v2268 = vadd.f32 %v2109, %v2263
    %2269 = vrot.lane.b32.xlu0 %v1794, 32
    %v2270 = vpop.permute.xlu0 %2269
    %2271 = vrot.lane.b32.xlu0 %v1795, 32
    %v2272 = vpop.permute.xlu0 %2271
    %2273 = vrot.lane.b32.xlu0 %v1796, 32
    %v2274 = vpop.permute.xlu0 %2273
    %2275 = vrot.lane.b32.xlu0 %v1797, 32
    %v2276 = vpop.permute.xlu0 %2275
    %v2278 = vsel %vm718, %v2270, 0
    %v2281 = vsel %vm718, %v2272, 0
    %v2284 = vsel %vm718, %v2274, 0
    %v2287 = vsel %vm718, %v2276, 0
    %2289 = vmatpush.bf16.xpose.msra.mxu0 0
    %2290 = vmatpush.bf16.xpose.msra.mxu0 0
    %2291 = vmatpush.bf16.xpose.msra.mxu0 0
    %2292 = vmatpush.bf16.xpose.msra.mxu0 0
    %2293 = vmatpush.bf16.xpose.msra.mxu0 0
    %2294 = vmatpush.bf16.xpose.msra.mxu0 0
    %2295 = vmatpush.bf16.xpose.msra.mxu0 %v2287
    %2296 = vmatpush.bf16.xpose.msra.mxu0 %v2284
    %2297 = vmatmul.bf16.gmra.mxu0 %v2278
    %v2298 = vpop.f32.mrf.mxu0
    %v2299 = vadd.f32 %v425, %v2298
    %v2300 = vpop.f32.mrf.mxu0
    %v2301 = vadd.f32 %v426, %v2300
    %2302 = vmatmul.bf16.gmra.mxu0 %v2281
    %v2303 = vpop.f32.mrf.mxu0
    %v2304 = vadd.f32 %v427, %v2303
    %v2305 = vpop.f32.mrf.mxu0
    %v2306 = vadd.f32 %v428, %v2305
    %2307 = vdwg.mxu0
    %v2308 = vsel %vm718, %v2299, -inf
    %2309 = vmax.xlane.f32.xlu0 %v2308
    %v2310 = vpop.xlane.xlu0 %2309
    %v2311 = vsel %vm718, %v2301, -inf
    %2312 = vmax.xlane.f32.xlu0 %v2311
    %v2313 = vpop.xlane.xlu0 %2312
    %v2314 = vsel %vm718, %v2304, -inf
    %2315 = vmax.xlane.f32.xlu0 %v2314
    %v2316 = vpop.xlane.xlu0 %2315
    %v2317 = vsel %vm718, %v2306, -inf
    %2318 = vmax.xlane.f32.xlu0 %v2317
    %v2319 = vpop.xlane.xlu0 %2318
    %v2320 = vsub.f32 %v2299, %v2310
    %v2321 = vsub.f32 %v2301, %v2313
    %v2322 = vsub.f32 %v2304, %v2316
    %v2323 = vsub.f32 %v2306, %v2319
    %v2324 = vmul.f32 %v2320, 1.442695
    %v2325 = vpow.pop %v2324
    %v2326 = vmul.f32 %v2321, 1.442695
    %v2327 = vpow.pop %v2326
    %v2328 = vmul.f32 %v2322, 1.442695
    %v2329 = vpow.pop %v2328
    %v2330 = vmul.f32 %v2323, 1.442695
    %v2331 = vpow.pop %v2330
    %v2332 = vsel %vm718, %v2325, 0.0
    %2333 = vadd.xlane.f32.xlu0 %v2332
    %v2334 = vpop.xlane.xlu0 %2333
    %v2335 = vsel %vm718, %v2327, 0.0
    %2336 = vadd.xlane.f32.xlu0 %v2335
    %v2337 = vpop.xlane.xlu0 %2336
    %v2338 = vsel %vm718, %v2329, 0.0
    %2339 = vadd.xlane.f32.xlu0 %v2338
    %v2340 = vpop.xlane.xlu0 %2339
    %v2341 = vsel %vm718, %v2331, 0.0
    %2342 = vadd.xlane.f32.xlu0 %v2341
    %v2343 = vpop.xlane.xlu0 %2342
    %v2344 = vpack.c.bf16 %v2327, %v2325
    %v2345 = vpack.c.bf16 %v2331, %v2329
    %2346 = vrot.lane.b32.xlu0 %v1867, 32
    %v2347 = vpop.permute.xlu0 %2346
    %2348 = vrot.lane.b32.xlu0 %v1868, 32
    %v2349 = vpop.permute.xlu0 %2348
    %v2353 = vsel %vm718, %v2344, 0
    %v2356 = vsel %vm718, %v2345, 0
    %2358 = vmatpush.bf16.msra.mxu0 0
    %2359 = vmatpush.bf16.msra.mxu0 0
    %2360 = vmatpush.bf16.msra.mxu0 0
    %2361 = vmatpush.bf16.msra.mxu0 0
    %2362 = vmatpush.bf16.msra.mxu0 0
    %2363 = vmatpush.bf16.msra.mxu0 0
    %2364 = vmatpush.bf16.msra.mxu0 %v2349
    %2365 = vmatpush.bf16.msra.mxu0 %v2347
    %2366 = vmatmul.bf16.gmra.mxu0 %v2353
    %v2367 = vpop.f32.mrf.mxu0
    %v2368 = vadd.f32 0.0, %v2367
    %v2369 = vpop.f32.mrf.mxu0
    %v2370 = vadd.f32 0.0, %v2369
    %2371 = vmatmul.bf16.gmra.mxu0 %v2356
    %v2372 = vpop.f32.mrf.mxu0
    %v2373 = vadd.f32 0.0, %v2372
    %v2374 = vpop.f32.mrf.mxu0
    %v2375 = vadd.f32 0.0, %v2374
    %2376 = vdwg.mxu0
    %v2377 = vrcp.pop %v2334
    %v2378 = vrcp.pop %v2337
    %v2379 = vrcp.pop %v2340
    %v2380 = vrcp.pop %v2343
    %v2381 = vmul.f32 %v2368, %v2377
    %v2382 = vmul.f32 %v2370, %v2378
    %v2383 = vmul.f32 %v2373, %v2379
    %v2384 = vmul.f32 %v2375, %v2380
    %v2385 = vpack.c.bf16 %v2382, %v2381
    %v2386 = vpack.c.bf16 %v2384, %v2383
    %v2391 = vunpack.c.l.b16 %v1549
    %v2392 = vunpack.c.l.b16 %v1550
    %v2393 = vunpack.c.l.b16 %v1551
    %v2394 = vunpack.c.l.b16 %v1552
    %v2395 = vpack.c.b16 %v2392, %v2391
    %v2396 = vpack.c.b16 %v2394, %v2393
    %v2400 = vsel %vm718, %v2385, 0
    %v2403 = vsel %vm718, %v2386, 0
    %2405 = vmatpush.bf16.msra.mxu0 0
    %2406 = vmatpush.bf16.msra.mxu0 0
    %2407 = vmatpush.bf16.msra.mxu0 0
    %2408 = vmatpush.bf16.msra.mxu0 0
    %2409 = vmatpush.bf16.msra.mxu0 0
    %2410 = vmatpush.bf16.msra.mxu0 0
    %2411 = vmatpush.bf16.msra.mxu0 %v2396
    %2412 = vmatpush.bf16.msra.mxu0 %v2395
    %2413 = vmatmul.bf16.gmra.mxu0 %v2400
    %v2414 = vpop.f32.mrf.mxu0
    %v2415 = vadd.f32 0.0, %v2414
    %v2416 = vpop.f32.mrf.mxu0
    %v2417 = vadd.f32 0.0, %v2416
    %2418 = vmatmul.bf16.gmra.mxu0 %v2403
    %v2419 = vpop.f32.mrf.mxu0
    %v2420 = vadd.f32 0.0, %v2419
    %v2421 = vpop.f32.mrf.mxu0
    %v2422 = vadd.f32 0.0, %v2421
    %2423 = vdwg.mxu0
    %v2424 = vadd.f32 %v2265, %v2415
    %v2425 = vadd.f32 %v2266, %v2417
    %v2426 = vadd.f32 %v2267, %v2420
    %v2427 = vadd.f32 %v2268, %v2422
    %v2428 = vpack.c.bf16 %v2425, %v2424
    %v2429 = vpack.c.bf16 %v2427, %v2426
    %v2431 = vperm.slane %v1573, 0
    %v2449 = vunpack.c.l.b16 %v1556
    %v2450 = vunpack.c.l.b16 %v1557
    %v2451 = vunpack.c.l.b16 %v1558
    %v2452 = vunpack.c.l.b16 %v1559
    %v2453 = vunpack.c.l.b16 %v1560
    %v2454 = vunpack.c.l.b16 %v1561
    %v2455 = vunpack.c.l.b16 %v1562
    %v2456 = vunpack.c.l.b16 %v1563
    %v2457 = vunpack.c.l.b16 %v1564
    %v2458 = vunpack.c.l.b16 %v1565
    %v2459 = vunpack.c.l.b16 %v1566
    %v2460 = vunpack.c.l.b16 %v1567
    %v2461 = vunpack.c.l.b16 %v1568
    %v2462 = vunpack.c.l.b16 %v1569
    %v2463 = vunpack.c.l.b16 %v1570
    %v2464 = vunpack.c.l.b16 %v1571
    %v2465 = vpack.c.b16 %v2450, %v2449
    %v2466 = vpack.c.b16 %v2452, %v2451
    %v2467 = vpack.c.b16 %v2454, %v2453
    %v2468 = vpack.c.b16 %v2456, %v2455
    %v2469 = vpack.c.b16 %v2458, %v2457
    %v2470 = vpack.c.b16 %v2460, %v2459
    %v2471 = vpack.c.b16 %v2462, %v2461
    %v2472 = vpack.c.b16 %v2464, %v2463
    %2481 = vmatpush.bf16.msra.mxu0 %v2472
    %2482 = vmatpush.bf16.msra.mxu0 %v2471
    %2483 = vmatpush.bf16.msra.mxu0 %v2470
    %2484 = vmatpush.bf16.msra.mxu0 %v2469
    %2485 = vmatpush.bf16.msra.mxu0 %v2468
    %2486 = vmatpush.bf16.msra.mxu0 %v2467
    %2487 = vmatpush.bf16.msra.mxu0 %v2466
    %2488 = vmatpush.bf16.msra.mxu0 %v2465
    %2489 = vmatmul.bf16.gmra.mxu0 %v2428
    %v2490 = vpop.f32.mrf.mxu0
    %v2491 = vadd.f32 %v2431, %v2490
    %v2492 = vpop.f32.mrf.mxu0
    %v2493 = vadd.f32 %v2431, %v2492
    %2494 = vmatmul.bf16.gmra.mxu0 %v2429
    %v2495 = vpop.f32.mrf.mxu0
    %v2496 = vadd.f32 %v2431, %v2495
    %v2497 = vpop.f32.mrf.mxu0
    %v2498 = vadd.f32 %v2431, %v2497
    %2499 = vdwg.mxu0
    %v2500 = vmax.f32 %v2491, 0.0
    %v2501 = vmax.f32 %v2493, 0.0
    %v2502 = vmax.f32 %v2496, 0.0
    %v2503 = vmax.f32 %v2498, 0.0
    %v2504 = vpack.c.bf16 %v2501, %v2500
    %v2505 = vpack.c.bf16 %v2503, %v2502
    %v2507 = vperm.slane %v1592, 0
    %v2525 = vunpack.c.l.b16 %v1575
    %v2526 = vunpack.c.l.b16 %v1576
    %v2527 = vunpack.c.l.b16 %v1577
    %v2528 = vunpack.c.l.b16 %v1578
    %v2529 = vunpack.c.l.b16 %v1579
    %v2530 = vunpack.c.l.b16 %v1580
    %v2531 = vunpack.c.l.b16 %v1581
    %v2532 = vunpack.c.l.b16 %v1582
    %v2533 = vunpack.c.l.b16 %v1583
    %v2534 = vunpack.c.l.b16 %v1584
    %v2535 = vunpack.c.l.b16 %v1585
    %v2536 = vunpack.c.l.b16 %v1586
    %v2537 = vunpack.c.l.b16 %v1587
    %v2538 = vunpack.c.l.b16 %v1588
    %v2539 = vunpack.c.l.b16 %v1589
    %v2540 = vunpack.c.l.b16 %v1590
    %v2541 = vpack.c.b16 %v2526, %v2525
    %v2542 = vpack.c.b16 %v2528, %v2527
    %v2543 = vpack.c.b16 %v2530, %v2529
    %v2544 = vpack.c.b16 %v2532, %v2531
    %v2545 = vpack.c.b16 %v2534, %v2533
    %v2546 = vpack.c.b16 %v2536, %v2535
    %v2547 = vpack.c.b16 %v2538, %v2537
    %v2548 = vpack.c.b16 %v2540, %v2539
    %2557 = vmatpush.bf16.msra.mxu0 %v2548
    %2558 = vmatpush.bf16.msra.mxu0 %v2547
    %2559 = vmatpush.bf16.msra.mxu0 %v2546
    %2560 = vmatpush.bf16.msra.mxu0 %v2545
    %2561 = vmatpush.bf16.msra.mxu0 %v2544
    %2562 = vmatpush.bf16.msra.mxu0 %v2543
    %2563 = vmatpush.bf16.msra.mxu0 %v2542
    %2564 = vmatpush.bf16.msra.mxu0 %v2541
    %2565 = vmatmul.bf16.gmra.mxu0 %v2504
    %v2566 = vpop.f32.mrf.mxu0
    %v2567 = vadd.f32 %v2507, %v2566
    %v2568 = vpop.f32.mrf.mxu0
    %v2569 = vadd.f32 %v2507, %v2568
    %2570 = vmatmul.bf16.gmra.mxu0 %v2505
    %v2571 = vpop.f32.mrf.mxu0
    %v2572 = vadd.f32 %v2507, %v2571
    %v2573 = vpop.f32.mrf.mxu0
    %v2574 = vadd.f32 %v2507, %v2573
    %2575 = vdwg.mxu0
    %v2576 = vadd.f32 %v2424, %v2567
    %v2577 = vadd.f32 %v2425, %v2569
    %v2578 = vadd.f32 %v2426, %v2572
    %v2579 = vadd.f32 %v2427, %v2574
    %s2580 = scalar_lea.vmem [#allocation2], 384
    %v2581 = vld [vmem:[%s2580] sm:$0xff]
    %v2582 = vld [vmem:[%s2580 + $0x8] sm:$0xf]
    %v2583 = vld [vmem:[%s2580 + $0xc] sm:$0xff]
    %v2584 = vld [vmem:[%s2580 + $0x14] sm:$0xf]
    %v2585 = vld [vmem:[%s2580 + $0x18] sm:$0xff]
    %v2586 = vld [vmem:[%s2580 + $0x20] sm:$0xf]
    %v2587 = vld [vmem:[%s2580 + $0x24] sm:$0xff]
    %v2588 = vld [vmem:[%s2580 + $0x2c] sm:$0xf]
    %v2589 = vld [vmem:[%s2580 + $0x30] sm:$0xff]
    %v2590 = vld [vmem:[%s2580 + $0x38] sm:$0xf]
    %v2591 = vld [vmem:[%s2580 + $0x3c] sm:$0xff]
    %v2592 = vld [vmem:[%s2580 + $0x44] sm:$0xf]
    %v2593 = vld [vmem:[%s2580 + $0x48] sm:$0xff]
    %v2594 = vld [vmem:[%s2580 + $0x50] sm:$0xf]
    %v2595 = vld [vmem:[%s2580 + $0x54] sm:$0xff]
    %v2596 = vld [vmem:[%s2580 + $0x5c] sm:$0xf]
    %v2597 = vld [vmem:[%s2580 + $0x60] sm:$0xff]
    %v2598 = vld [vmem:[%s2580 + $0x68] sm:$0xf]
    %v2599 = vld [vmem:[%s2580 + $0x6c] sm:$0xff]
    %v2600 = vld [vmem:[%s2580 + $0x74] sm:$0xf]
    %v2601 = vld [vmem:[%s2580 + $0x78] sm:$0xff]
    %v2602 = vld [vmem:[%s2580 + $0x80] sm:$0xf]
    %v2603 = vld [vmem:[%s2580 + $0x84] sm:$0xff]
    %v2604 = vld [vmem:[%s2580 + $0x8c] sm:$0xf]
    %v2605 = vld [vmem:[%s2580 + $0x90] sm:$0xff]
    %v2606 = vld [vmem:[%s2580 + $0x98] sm:$0xf]
    %v2607 = vld [vmem:[%s2580 + $0x9c] sm:$0xff]
    %v2608 = vld [vmem:[%s2580 + $0xa4] sm:$0xf]
    %v2609 = vld [vmem:[%s2580 + $0xa8] sm:$0xff]
    %v2610 = vld [vmem:[%s2580 + $0xb0] sm:$0xf]
    %v2611 = vld [vmem:[%s2580 + $0xb4] sm:$0xff]
    %v2612 = vld [vmem:[%s2580 + $0xbc] sm:$0xf]
    %s2613 = scalar_lea.vmem %s9, 6
    %v2614 = vld [vmem:[%s2613] sm:$0x7]
    %s2615 = scalar_lea.vmem %s10, 128
    %v2616 = vld [vmem:[%s2615] sm:$0xf]
    %v2617 = vld [vmem:[%s2615 + $0x4] sm:$0xf]
    %v2618 = vld [vmem:[%s2615 + $0x8] sm:$0xf]
    %v2619 = vld [vmem:[%s2615 + $0xc] sm:$0xf]
    %v2620 = vld [vmem:[%s2615 + $0x10] sm:$0xf]
    %v2621 = vld [vmem:[%s2615 + $0x14] sm:$0xf]
    %v2622 = vld [vmem:[%s2615 + $0x18] sm:$0xf]
    %v2623 = vld [vmem:[%s2615 + $0x1c] sm:$0xf]
    %v2624 = vld [vmem:[%s2615 + $0x20] sm:$0xf]
    %v2625 = vld [vmem:[%s2615 + $0x24] sm:$0xf]
    %v2626 = vld [vmem:[%s2615 + $0x28] sm:$0xf]
    %v2627 = vld [vmem:[%s2615 + $0x2c] sm:$0xf]
    %v2628 = vld [vmem:[%s2615 + $0x30] sm:$0xf]
    %v2629 = vld [vmem:[%s2615 + $0x34] sm:$0xf]
    %v2630 = vld [vmem:[%s2615 + $0x38] sm:$0xf]
    %v2631 = vld [vmem:[%s2615 + $0x3c] sm:$0xf]
    %s2632 = scalar_lea.vmem %s11, 2
    %v2633 = vld [vmem:[%s2632] sm:$0x1]
    %s2634 = scalar_lea.vmem %s12, 128
    %v2635 = vld [vmem:[%s2634] sm:$0xf]
    %v2636 = vld [vmem:[%s2634 + $0x4] sm:$0xf]
    %v2637 = vld [vmem:[%s2634 + $0x8] sm:$0xf]
    %v2638 = vld [vmem:[%s2634 + $0xc] sm:$0xf]
    %v2639 = vld [vmem:[%s2634 + $0x10] sm:$0xf]
    %v2640 = vld [vmem:[%s2634 + $0x14] sm:$0xf]
    %v2641 = vld [vmem:[%s2634 + $0x18] sm:$0xf]
    %v2642 = vld [vmem:[%s2634 + $0x1c] sm:$0xf]
    %v2643 = vld [vmem:[%s2634 + $0x20] sm:$0xf]
    %v2644 = vld [vmem:[%s2634 + $0x24] sm:$0xf]
    %v2645 = vld [vmem:[%s2634 + $0x28] sm:$0xf]
    %v2646 = vld [vmem:[%s2634 + $0x2c] sm:$0xf]
    %v2647 = vld [vmem:[%s2634 + $0x30] sm:$0xf]
    %v2648 = vld [vmem:[%s2634 + $0x34] sm:$0xf]
    %v2649 = vld [vmem:[%s2634 + $0x38] sm:$0xf]
    %v2650 = vld [vmem:[%s2634 + $0x3c] sm:$0xf]
    %s2651 = scalar_lea.vmem %s13, 2
    %v2652 = vld [vmem:[%s2651] sm:$0x1]
    %s2653 = scalar_lea.vmem %s14, 128
    %v2654 = vld [vmem:[%s2653] sm:$0xf]
    %v2655 = vld [vmem:[%s2653 + $0x4] sm:$0xf]
    %v2656 = vld [vmem:[%s2653 + $0x8] sm:$0xf]
    %v2657 = vld [vmem:[%s2653 + $0xc] sm:$0xf]
    %v2658 = vld [vmem:[%s2653 + $0x10] sm:$0xf]
    %v2659 = vld [vmem:[%s2653 + $0x14] sm:$0xf]
    %v2660 = vld [vmem:[%s2653 + $0x18] sm:$0xf]
    %v2661 = vld [vmem:[%s2653 + $0x1c] sm:$0xf]
    %v2662 = vld [vmem:[%s2653 + $0x20] sm:$0xf]
    %v2663 = vld [vmem:[%s2653 + $0x24] sm:$0xf]
    %v2664 = vld [vmem:[%s2653 + $0x28] sm:$0xf]
    %v2665 = vld [vmem:[%s2653 + $0x2c] sm:$0xf]
    %v2666 = vld [vmem:[%s2653 + $0x30] sm:$0xf]
    %v2667 = vld [vmem:[%s2653 + $0x34] sm:$0xf]
    %v2668 = vld [vmem:[%s2653 + $0x38] sm:$0xf]
    %v2669 = vld [vmem:[%s2653 + $0x3c] sm:$0xf]
    %s2670 = scalar_lea.vmem %s15, 2
    %v2671 = vld [vmem:[%s2670] sm:$0x1]
    %v2672 = vpack.c.bf16 %v2577, %v2576
    %v2673 = vpack.c.bf16 %v2579, %v2578
    %v2675 = vperm.slane %v2614, 0
    %v2676 = vperm.slane %v2614, 1
    %v2677 = vperm.slane %v2614, 2
    %v2713 = vunpack.c.l.b16 %v2581
    %v2714 = vunpack.c.h.b16 %v2581
    %v2715 = vunpack.c.l.b16 %v2582
    %v2716 = vunpack.c.l.b16 %v2583
    %v2717 = vunpack.c.h.b16 %v2583
    %v2718 = vunpack.c.l.b16 %v2584
    %v2719 = vunpack.c.l.b16 %v2585
    %v2720 = vunpack.c.h.b16 %v2585
    %v2721 = vunpack.c.l.b16 %v2586
    %v2722 = vunpack.c.l.b16 %v2587
    %v2723 = vunpack.c.h.b16 %v2587
    %v2724 = vunpack.c.l.b16 %v2588
    %v2725 = vunpack.c.l.b16 %v2589
    %v2726 = vunpack.c.h.b16 %v2589
    %v2727 = vunpack.c.l.b16 %v2590
    %v2728 = vunpack.c.l.b16 %v2591
    %v2729 = vunpack.c.h.b16 %v2591
    %v2730 = vunpack.c.l.b16 %v2592
    %v2731 = vunpack.c.l.b16 %v2593
    %v2732 = vunpack.c.h.b16 %v2593
    %v2733 = vunpack.c.l.b16 %v2594
    %v2734 = vunpack.c.l.b16 %v2595
    %v2735 = vunpack.c.h.b16 %v2595
    %v2736 = vunpack.c.l.b16 %v2596
    %v2737 = vunpack.c.l.b16 %v2597
    %v2738 = vunpack.c.h.b16 %v2597
    %v2739 = vunpack.c.l.b16 %v2598
    %v2740 = vunpack.c.l.b16 %v2599
    %v2741 = vunpack.c.h.b16 %v2599
    %v2742 = vunpack.c.l.b16 %v2600
    %v2743 = vunpack.c.l.b16 %v2601
    %v2744 = vunpack.c.h.b16 %v2601
    %v2745 = vunpack.c.l.b16 %v2602
    %v2746 = vunpack.c.l.b16 %v2603
    %v2747 = vunpack.c.h.b16 %v2603
    %v2748 = vunpack.c.l.b16 %v2604
    %v2749 = vunpack.c.l.b16 %v2605
    %v2750 = vunpack.c.h.b16 %v2605
    %v2751 = vunpack.c.l.b16 %v2606
    %v2752 = vunpack.c.l.b16 %v2607
    %v2753 = vunpack.c.h.b16 %v2607
    %v2754 = vunpack.c.l.b16 %v2608
    %v2755 = vunpack.c.l.b16 %v2609
    %v2756 = vunpack.c.h.b16 %v2609
    %v2757 = vunpack.c.l.b16 %v2610
    %v2758 = vunpack.c.l.b16 %v2611
    %v2759 = vunpack.c.h.b16 %v2611
    %v2760 = vunpack.c.l.b16 %v2612
    %v2761 = vpack.c.b16 %v2716, %v2713
    %v2762 = vpack.c.b16 %v2717, %v2714
    %v2763 = vpack.c.b16 %v2718, %v2715
    %v2764 = vpack.c.b16 %v2722, %v2719
    %v2765 = vpack.c.b16 %v2723, %v2720
    %v2766 = vpack.c.b16 %v2724, %v2721
    %v2767 = vpack.c.b16 %v2728, %v2725
    %v2768 = vpack.c.b16 %v2729, %v2726
    %v2769 = vpack.c.b16 %v2730, %v2727
    %v2770 = vpack.c.b16 %v2734, %v2731
    %v2771 = vpack.c.b16 %v2735, %v2732
    %v2772 = vpack.c.b16 %v2736, %v2733
    %v2773 = vpack.c.b16 %v2740, %v2737
    %v2774 = vpack.c.b16 %v2741, %v2738
    %v2775 = vpack.c.b16 %v2742, %v2739
    %v2776 = vpack.c.b16 %v2746, %v2743
    %v2777 = vpack.c.b16 %v2747, %v2744
    %v2778 = vpack.c.b16 %v2748, %v2745
    %v2779 = vpack.c.b16 %v2752, %v2749
    %v2780 = vpack.c.b16 %v2753, %v2750
    %v2781 = vpack.c.b16 %v2754, %v2751
    %v2782 = vpack.c.b16 %v2758, %v2755
    %v2783 = vpack.c.b16 %v2759, %v2756
    %v2784 = vpack.c.b16 %v2760, %v2757
    %2809 = vmatpush.bf16.msra.mxu0 %v2782
    %2810 = vmatpush.bf16.msra.mxu0 %v2779
    %2811 = vmatpush.bf16.msra.mxu0 %v2776
    %2812 = vmatpush.bf16.msra.mxu0 %v2773
    %2813 = vmatpush.bf16.msra.mxu0 %v2770
    %2814 = vmatpush.bf16.msra.mxu0 %v2767
    %2815 = vmatpush.bf16.msra.mxu0 %v2764
    %2816 = vmatpush.bf16.msra.mxu0 %v2761
    %2817 = vmatmul.bf16.gmra.mxu0 %v2672
    %v2818 = vpop.f32.mrf.mxu0
    %v2819 = vadd.f32 %v2675, %v2818
    %v2820 = vpop.f32.mrf.mxu0
    %v2821 = vadd.f32 %v2675, %v2820
    %2822 = vmatmul.bf16.gmra.mxu0 %v2673
    %v2823 = vpop.f32.mrf.mxu0
    %v2824 = vadd.f32 %v2675, %v2823
    %v2825 = vpop.f32.mrf.mxu0
    %v2826 = vadd.f32 %v2675, %v2825
    %2827 = vdwg.mxu0
    %2828 = vmatpush.bf16.msra.mxu0 %v2783
    %2829 = vmatpush.bf16.msra.mxu0 %v2780
    %2830 = vmatpush.bf16.msra.mxu0 %v2777
    %2831 = vmatpush.bf16.msra.mxu0 %v2774
    %2832 = vmatpush.bf16.msra.mxu0 %v2771
    %2833 = vmatpush.bf16.msra.mxu0 %v2768
    %2834 = vmatpush.bf16.msra.mxu0 %v2765
    %2835 = vmatpush.bf16.msra.mxu0 %v2762
    %2836 = vmatmul.bf16.gmra.mxu0 %v2672
    %v2837 = vpop.f32.mrf.mxu0
    %v2838 = vadd.f32 %v2676, %v2837
    %v2839 = vpop.f32.mrf.mxu0
    %v2840 = vadd.f32 %v2676, %v2839
    %2841 = vmatmul.bf16.gmra.mxu0 %v2673
    %v2842 = vpop.f32.mrf.mxu0
    %v2843 = vadd.f32 %v2676, %v2842
    %v2844 = vpop.f32.mrf.mxu0
    %v2845 = vadd.f32 %v2676, %v2844
    %2846 = vdwg.mxu0
    %2847 = vmatpush.bf16.msra.mxu0 %v2784
    %2848 = vmatpush.bf16.msra.mxu0 %v2781
    %2849 = vmatpush.bf16.msra.mxu0 %v2778
    %2850 = vmatpush.bf16.msra.mxu0 %v2775
    %2851 = vmatpush.bf16.msra.mxu0 %v2772
    %2852 = vmatpush.bf16.msra.mxu0 %v2769
    %2853 = vmatpush.bf16.msra.mxu0 %v2766
    %2854 = vmatpush.bf16.msra.mxu0 %v2763
    %2855 = vmatmul.bf16.gmra.mxu0 %v2672
    %v2856 = vpop.f32.mrf.mxu0
    %v2857 = vadd.f32 %v2677, %v2856
    %v2858 = vpop.f32.mrf.mxu0
    %v2859 = vadd.f32 %v2677, %v2858
    %2860 = vmatmul.bf16.gmra.mxu0 %v2673
    %v2861 = vpop.f32.mrf.mxu0
    %v2862 = vadd.f32 %v2677, %v2861
    %v2863 = vpop.f32.mrf.mxu0
    %v2864 = vadd.f32 %v2677, %v2863
    %2865 = vdwg.mxu0
    %v2867 = vperm.slane %v2633, 0
    %v2869 = vadd.f32 %v2576, %v2867
    %v2870 = vadd.f32 %v2577, %v2867
    %v2871 = vadd.f32 %v2578, %v2867
    %v2872 = vadd.f32 %v2579, %v2867
    %v2873 = vpack.c.bf16 %v2821, %v2819
    %v2874 = vpack.c.bf16 %v2826, %v2824
    %v2875 = vpack.c.bf16 %v2840, %v2838
    %v2876 = vpack.c.bf16 %v2845, %v2843
    %v2878 = vsel %vm718, %v2873, 0
    %v2881 = vsel %vm718, %v2874, 0
    %v2884 = vsel %vm718, %v2875, 0
    %v2887 = vsel %vm718, %v2876, 0
    %2889 = vmatpush.bf16.xpose.msra.mxu0 0
    %2890 = vmatpush.bf16.xpose.msra.mxu0 0
    %2891 = vmatpush.bf16.xpose.msra.mxu0 0
    %2892 = vmatpush.bf16.xpose.msra.mxu0 0
    %2893 = vmatpush.bf16.xpose.msra.mxu0 0
    %2894 = vmatpush.bf16.xpose.msra.mxu0 0
    %2895 = vmatpush.bf16.xpose.msra.mxu0 %v2887
    %2896 = vmatpush.bf16.xpose.msra.mxu0 %v2884
    %2897 = vmatmul.bf16.gmra.mxu0 %v2878
    %v2898 = vpop.f32.mrf.mxu0
    %v2899 = vadd.f32 %v425, %v2898
    %v2900 = vpop.f32.mrf.mxu0
    %v2901 = vadd.f32 %v426, %v2900
    %2902 = vmatmul.bf16.gmra.mxu0 %v2881
    %v2903 = vpop.f32.mrf.mxu0
    %v2904 = vadd.f32 %v427, %v2903
    %v2905 = vpop.f32.mrf.mxu0
    %v2906 = vadd.f32 %v428, %v2905
    %2907 = vdwg.mxu0
    %v2908 = vsel %vm718, %v2899, -inf
    %2909 = vmax.xlane.f32.xlu0 %v2908
    %v2910 = vpop.xlane.xlu0 %2909
    %v2911 = vsel %vm718, %v2901, -inf
    %2912 = vmax.xlane.f32.xlu0 %v2911
    %v2913 = vpop.xlane.xlu0 %2912
    %v2914 = vsel %vm718, %v2904, -inf
    %2915 = vmax.xlane.f32.xlu0 %v2914
    %v2916 = vpop.xlane.xlu0 %2915
    %v2917 = vsel %vm718, %v2906, -inf
    %2918 = vmax.xlane.f32.xlu0 %v2917
    %v2919 = vpop.xlane.xlu0 %2918
    %v2920 = vsub.f32 %v2899, %v2910
    %v2921 = vsub.f32 %v2901, %v2913
    %v2922 = vsub.f32 %v2904, %v2916
    %v2923 = vsub.f32 %v2906, %v2919
    %v2924 = vmul.f32 %v2920, 1.442695
    %v2925 = vpow.pop %v2924
    %v2926 = vmul.f32 %v2921, 1.442695
    %v2927 = vpow.pop %v2926
    %v2928 = vmul.f32 %v2922, 1.442695
    %v2929 = vpow.pop %v2928
    %v2930 = vmul.f32 %v2923, 1.442695
    %v2931 = vpow.pop %v2930
    %v2932 = vsel %vm718, %v2925, 0.0
    %2933 = vadd.xlane.f32.xlu0 %v2932
    %v2934 = vpop.xlane.xlu0 %2933
    %v2935 = vsel %vm718, %v2927, 0.0
    %2936 = vadd.xlane.f32.xlu0 %v2935
    %v2937 = vpop.xlane.xlu0 %2936
    %v2938 = vsel %vm718, %v2929, 0.0
    %2939 = vadd.xlane.f32.xlu0 %v2938
    %v2940 = vpop.xlane.xlu0 %2939
    %v2941 = vsel %vm718, %v2931, 0.0
    %2942 = vadd.xlane.f32.xlu0 %v2941
    %v2943 = vpop.xlane.xlu0 %2942
    %v2944 = vpack.c.bf16 %v2927, %v2925
    %v2945 = vpack.c.bf16 %v2931, %v2929
    %v2946 = vpack.c.bf16 %v2859, %v2857
    %v2947 = vpack.c.bf16 %v2864, %v2862
    %v2949 = vsel %vm718, %v2944, 0
    %v2952 = vsel %vm718, %v2945, 0
    %2954 = vmatpush.bf16.msra.mxu0 0
    %2955 = vmatpush.bf16.msra.mxu0 0
    %2956 = vmatpush.bf16.msra.mxu0 0
    %2957 = vmatpush.bf16.msra.mxu0 0
    %2958 = vmatpush.bf16.msra.mxu0 0
    %2959 = vmatpush.bf16.msra.mxu0 0
    %2960 = vmatpush.bf16.msra.mxu0 %v2947
    %2961 = vmatpush.bf16.msra.mxu0 %v2946
    %2962 = vmatmul.bf16.gmra.mxu0 %v2949
    %v2963 = vpop.f32.mrf.mxu0
    %v2964 = vadd.f32 0.0, %v2963
    %v2965 = vpop.f32.mrf.mxu0
    %v2966 = vadd.f32 0.0, %v2965
    %2967 = vmatmul.bf16.gmra.mxu0 %v2952
    %v2968 = vpop.f32.mrf.mxu0
    %v2969 = vadd.f32 0.0, %v2968
    %v2970 = vpop.f32.mrf.mxu0
    %v2971 = vadd.f32 0.0, %v2970
    %2972 = vdwg.mxu0
    %v2973 = vrcp.pop %v2934
    %v2974 = vrcp.pop %v2937
    %v2975 = vrcp.pop %v2940
    %v2976 = vrcp.pop %v2943
    %v2977 = vmul.f32 %v2964, %v2973
    %v2978 = vmul.f32 %v2966, %v2974
    %v2979 = vmul.f32 %v2969, %v2975
    %v2980 = vmul.f32 %v2971, %v2976
    %v2981 = vpack.c.bf16 %v2978, %v2977
    %v2982 = vpack.c.bf16 %v2980, %v2979
    %v2987 = vunpack.c.l.b16 %v2616
    %v2988 = vunpack.c.l.b16 %v2617
    %v2989 = vunpack.c.l.b16 %v2618
    %v2990 = vunpack.c.l.b16 %v2619
    %v2991 = vpack.c.b16 %v2988, %v2987
    %v2992 = vpack.c.b16 %v2990, %v2989
    %v2996 = vsel %vm718, %v2981, 0
    %v2999 = vsel %vm718, %v2982, 0
    %3001 = vmatpush.bf16.msra.mxu0 0
    %3002 = vmatpush.bf16.msra.mxu0 0
    %3003 = vmatpush.bf16.msra.mxu0 0
    %3004 = vmatpush.bf16.msra.mxu0 0
    %3005 = vmatpush.bf16.msra.mxu0 0
    %3006 = vmatpush.bf16.msra.mxu0 0
    %3007 = vmatpush.bf16.msra.mxu0 %v2992
    %3008 = vmatpush.bf16.msra.mxu0 %v2991
    %3009 = vmatmul.bf16.gmra.mxu0 %v2996
    %v3010 = vpop.f32.mrf.mxu0
    %v3011 = vadd.f32 0.0, %v3010
    %v3012 = vpop.f32.mrf.mxu0
    %v3013 = vadd.f32 0.0, %v3012
    %3014 = vmatmul.bf16.gmra.mxu0 %v2999
    %v3015 = vpop.f32.mrf.mxu0
    %v3016 = vadd.f32 0.0, %v3015
    %v3017 = vpop.f32.mrf.mxu0
    %v3018 = vadd.f32 0.0, %v3017
    %3019 = vdwg.mxu0
    %v3020 = vadd.f32 %v2869, %v3011
    %v3021 = vadd.f32 %v2870, %v3013
    %v3022 = vadd.f32 %v2871, %v3016
    %v3023 = vadd.f32 %v2872, %v3018
    %3026 = vrot.lane.b32.xlu0 %v2873, 96
    %v3027 = vpop.permute.xlu0 %3026
    %3028 = vrot.lane.b32.xlu0 %v2874, 96
    %v3029 = vpop.permute.xlu0 %3028
    %3032 = vrot.lane.b32.xlu0 %v2875, 96
    %v3033 = vpop.permute.xlu0 %3032
    %3034 = vrot.lane.b32.xlu0 %v2876, 96
    %v3035 = vpop.permute.xlu0 %3034
    %v3037 = vsel %vm718, %v3027, 0
    %v3040 = vsel %vm718, %v3029, 0
    %v3043 = vsel %vm718, %v3033, 0
    %v3046 = vsel %vm718, %v3035, 0
    %3048 = vmatpush.bf16.xpose.msra.mxu0 0
    %3049 = vmatpush.bf16.xpose.msra.mxu0 0
    %3050 = vmatpush.bf16.xpose.msra.mxu0 0
    %3051 = vmatpush.bf16.xpose.msra.mxu0 0
    %3052 = vmatpush.bf16.xpose.msra.mxu0 0
    %3053 = vmatpush.bf16.xpose.msra.mxu0 0
    %3054 = vmatpush.bf16.xpose.msra.mxu0 %v3046
    %3055 = vmatpush.bf16.xpose.msra.mxu0 %v3043
    %3056 = vmatmul.bf16.gmra.mxu0 %v3037
    %v3057 = vpop.f32.mrf.mxu0
    %v3058 = vadd.f32 %v425, %v3057
    %v3059 = vpop.f32.mrf.mxu0
    %v3060 = vadd.f32 %v426, %v3059
    %3061 = vmatmul.bf16.gmra.mxu0 %v3040
    %v3062 = vpop.f32.mrf.mxu0
    %v3063 = vadd.f32 %v427, %v3062
    %v3064 = vpop.f32.mrf.mxu0
    %v3065 = vadd.f32 %v428, %v3064
    %3066 = vdwg.mxu0
    %v3067 = vsel %vm718, %v3058, -inf
    %3068 = vmax.xlane.f32.xlu0 %v3067
    %v3069 = vpop.xlane.xlu0 %3068
    %v3070 = vsel %vm718, %v3060, -inf
    %3071 = vmax.xlane.f32.xlu0 %v3070
    %v3072 = vpop.xlane.xlu0 %3071
    %v3073 = vsel %vm718, %v3063, -inf
    %3074 = vmax.xlane.f32.xlu0 %v3073
    %v3075 = vpop.xlane.xlu0 %3074
    %v3076 = vsel %vm718, %v3065, -inf
    %3077 = vmax.xlane.f32.xlu0 %v3076
    %v3078 = vpop.xlane.xlu0 %3077
    %v3079 = vsub.f32 %v3058, %v3069
    %v3080 = vsub.f32 %v3060, %v3072
    %v3081 = vsub.f32 %v3063, %v3075
    %v3082 = vsub.f32 %v3065, %v3078
    %v3083 = vmul.f32 %v3079, 1.442695
    %v3084 = vpow.pop %v3083
    %v3085 = vmul.f32 %v3080, 1.442695
    %v3086 = vpow.pop %v3085
    %v3087 = vmul.f32 %v3081, 1.442695
    %v3088 = vpow.pop %v3087
    %v3089 = vmul.f32 %v3082, 1.442695
    %v3090 = vpow.pop %v3089
    %v3091 = vsel %vm718, %v3084, 0.0
    %3092 = vadd.xlane.f32.xlu0 %v3091
    %v3093 = vpop.xlane.xlu0 %3092
    %v3094 = vsel %vm718, %v3086, 0.0
    %3095 = vadd.xlane.f32.xlu0 %v3094
    %v3096 = vpop.xlane.xlu0 %3095
    %v3097 = vsel %vm718, %v3088, 0.0
    %3098 = vadd.xlane.f32.xlu0 %v3097
    %v3099 = vpop.xlane.xlu0 %3098
    %v3100 = vsel %vm718, %v3090, 0.0
    %3101 = vadd.xlane.f32.xlu0 %v3100
    %v3102 = vpop.xlane.xlu0 %3101
    %v3103 = vpack.c.bf16 %v3086, %v3084
    %v3104 = vpack.c.bf16 %v3090, %v3088
    %3107 = vrot.lane.b32.xlu0 %v2946, 96
    %v3108 = vpop.permute.xlu0 %3107
    %3109 = vrot.lane.b32.xlu0 %v2947, 96
    %v3110 = vpop.permute.xlu0 %3109
    %v3114 = vsel %vm718, %v3103, 0
    %v3117 = vsel %vm718, %v3104, 0
    %3119 = vmatpush.bf16.msra.mxu0 0
    %3120 = vmatpush.bf16.msra.mxu0 0
    %3121 = vmatpush.bf16.msra.mxu0 0
    %3122 = vmatpush.bf16.msra.mxu0 0
    %3123 = vmatpush.bf16.msra.mxu0 0
    %3124 = vmatpush.bf16.msra.mxu0 0
    %3125 = vmatpush.bf16.msra.mxu0 %v3110
    %3126 = vmatpush.bf16.msra.mxu0 %v3108
    %3127 = vmatmul.bf16.gmra.mxu0 %v3114
    %v3128 = vpop.f32.mrf.mxu0
    %v3129 = vadd.f32 0.0, %v3128
    %v3130 = vpop.f32.mrf.mxu0
    %v3131 = vadd.f32 0.0, %v3130
    %3132 = vmatmul.bf16.gmra.mxu0 %v3117
    %v3133 = vpop.f32.mrf.mxu0
    %v3134 = vadd.f32 0.0, %v3133
    %v3135 = vpop.f32.mrf.mxu0
    %v3136 = vadd.f32 0.0, %v3135
    %3137 = vdwg.mxu0
    %v3138 = vrcp.pop %v3093
    %v3139 = vrcp.pop %v3096
    %v3140 = vrcp.pop %v3099
    %v3141 = vrcp.pop %v3102
    %v3142 = vmul.f32 %v3129, %v3138
    %v3143 = vmul.f32 %v3131, %v3139
    %v3144 = vmul.f32 %v3134, %v3140
    %v3145 = vmul.f32 %v3136, %v3141
    %v3146 = vpack.c.bf16 %v3143, %v3142
    %v3147 = vpack.c.bf16 %v3145, %v3144
    %v3152 = vunpack.c.l.b16 %v2620
    %v3153 = vunpack.c.l.b16 %v2621
    %v3154 = vunpack.c.l.b16 %v2622
    %v3155 = vunpack.c.l.b16 %v2623
    %v3156 = vpack.c.b16 %v3153, %v3152
    %v3157 = vpack.c.b16 %v3155, %v3154
    %v3161 = vsel %vm718, %v3146, 0
    %v3164 = vsel %vm718, %v3147, 0
    %3166 = vmatpush.bf16.msra.mxu0 0
    %3167 = vmatpush.bf16.msra.mxu0 0
    %3168 = vmatpush.bf16.msra.mxu0 0
    %3169 = vmatpush.bf16.msra.mxu0 0
    %3170 = vmatpush.bf16.msra.mxu0 0
    %3171 = vmatpush.bf16.msra.mxu0 0
    %3172 = vmatpush.bf16.msra.mxu0 %v3157
    %3173 = vmatpush.bf16.msra.mxu0 %v3156
    %3174 = vmatmul.bf16.gmra.mxu0 %v3161
    %v3175 = vpop.f32.mrf.mxu0
    %v3176 = vadd.f32 0.0, %v3175
    %v3177 = vpop.f32.mrf.mxu0
    %v3178 = vadd.f32 0.0, %v3177
    %3179 = vmatmul.bf16.gmra.mxu0 %v3164
    %v3180 = vpop.f32.mrf.mxu0
    %v3181 = vadd.f32 0.0, %v3180
    %v3182 = vpop.f32.mrf.mxu0
    %v3183 = vadd.f32 0.0, %v3182
    %3184 = vdwg.mxu0
    %v3185 = vadd.f32 %v3020, %v3176
    %v3186 = vadd.f32 %v3021, %v3178
    %v3187 = vadd.f32 %v3022, %v3181
    %v3188 = vadd.f32 %v3023, %v3183
    %3189 = vrot.lane.b32.xlu0 %v2873, 64
    %v3190 = vpop.permute.xlu0 %3189
    %3191 = vrot.lane.b32.xlu0 %v2874, 64
    %v3192 = vpop.permute.xlu0 %3191
    %3193 = vrot.lane.b32.xlu0 %v2875, 64
    %v3194 = vpop.permute.xlu0 %3193
    %3195 = vrot.lane.b32.xlu0 %v2876, 64
    %v3196 = vpop.permute.xlu0 %3195
    %v3198 = vsel %vm718, %v3190, 0
    %v3201 = vsel %vm718, %v3192, 0
    %v3204 = vsel %vm718, %v3194, 0
    %v3207 = vsel %vm718, %v3196, 0
    %3209 = vmatpush.bf16.xpose.msra.mxu0 0
    %3210 = vmatpush.bf16.xpose.msra.mxu0 0
    %3211 = vmatpush.bf16.xpose.msra.mxu0 0
    %3212 = vmatpush.bf16.xpose.msra.mxu0 0
    %3213 = vmatpush.bf16.xpose.msra.mxu0 0
    %3214 = vmatpush.bf16.xpose.msra.mxu0 0
    %3215 = vmatpush.bf16.xpose.msra.mxu0 %v3207
    %3216 = vmatpush.bf16.xpose.msra.mxu0 %v3204
    %3217 = vmatmul.bf16.gmra.mxu0 %v3198
    %v3218 = vpop.f32.mrf.mxu0
    %v3219 = vadd.f32 %v425, %v3218
    %v3220 = vpop.f32.mrf.mxu0
    %v3221 = vadd.f32 %v426, %v3220
    %3222 = vmatmul.bf16.gmra.mxu0 %v3201
    %v3223 = vpop.f32.mrf.mxu0
    %v3224 = vadd.f32 %v427, %v3223
    %v3225 = vpop.f32.mrf.mxu0
    %v3226 = vadd.f32 %v428, %v3225
    %3227 = vdwg.mxu0
    %v3228 = vsel %vm718, %v3219, -inf
    %3229 = vmax.xlane.f32.xlu0 %v3228
    %v3230 = vpop.xlane.xlu0 %3229
    %v3231 = vsel %vm718, %v3221, -inf
    %3232 = vmax.xlane.f32.xlu0 %v3231
    %v3233 = vpop.xlane.xlu0 %3232
    %v3234 = vsel %vm718, %v3224, -inf
    %3235 = vmax.xlane.f32.xlu0 %v3234
    %v3236 = vpop.xlane.xlu0 %3235
    %v3237 = vsel %vm718, %v3226, -inf
    %3238 = vmax.xlane.f32.xlu0 %v3237
    %v3239 = vpop.xlane.xlu0 %3238
    %v3240 = vsub.f32 %v3219, %v3230
    %v3241 = vsub.f32 %v3221, %v3233
    %v3242 = vsub.f32 %v3224, %v3236
    %v3243 = vsub.f32 %v3226, %v3239
    %v3244 = vmul.f32 %v3240, 1.442695
    %v3245 = vpow.pop %v3244
    %v3246 = vmul.f32 %v3241, 1.442695
    %v3247 = vpow.pop %v3246
    %v3248 = vmul.f32 %v3242, 1.442695
    %v3249 = vpow.pop %v3248
    %v3250 = vmul.f32 %v3243, 1.442695
    %v3251 = vpow.pop %v3250
    %v3252 = vsel %vm718, %v3245, 0.0
    %3253 = vadd.xlane.f32.xlu0 %v3252
    %v3254 = vpop.xlane.xlu0 %3253
    %v3255 = vsel %vm718, %v3247, 0.0
    %3256 = vadd.xlane.f32.xlu0 %v3255
    %v3257 = vpop.xlane.xlu0 %3256
    %v3258 = vsel %vm718, %v3249, 0.0
    %3259 = vadd.xlane.f32.xlu0 %v3258
    %v3260 = vpop.xlane.xlu0 %3259
    %v3261 = vsel %vm718, %v3251, 0.0
    %3262 = vadd.xlane.f32.xlu0 %v3261
    %v3263 = vpop.xlane.xlu0 %3262
    %v3264 = vpack.c.bf16 %v3247, %v3245
    %v3265 = vpack.c.bf16 %v3251, %v3249
    %3266 = vrot.lane.b32.xlu0 %v2946, 64
    %v3267 = vpop.permute.xlu0 %3266
    %3268 = vrot.lane.b32.xlu0 %v2947, 64
    %v3269 = vpop.permute.xlu0 %3268
    %v3273 = vsel %vm718, %v3264, 0
    %v3276 = vsel %vm718, %v3265, 0
    %3278 = vmatpush.bf16.msra.mxu0 0
    %3279 = vmatpush.bf16.msra.mxu0 0
    %3280 = vmatpush.bf16.msra.mxu0 0
    %3281 = vmatpush.bf16.msra.mxu0 0
    %3282 = vmatpush.bf16.msra.mxu0 0
    %3283 = vmatpush.bf16.msra.mxu0 0
    %3284 = vmatpush.bf16.msra.mxu0 %v3269
    %3285 = vmatpush.bf16.msra.mxu0 %v3267
    %3286 = vmatmul.bf16.gmra.mxu0 %v3273
    %v3287 = vpop.f32.mrf.mxu0
    %v3288 = vadd.f32 0.0, %v3287
    %v3289 = vpop.f32.mrf.mxu0
    %v3290 = vadd.f32 0.0, %v3289
    %3291 = vmatmul.bf16.gmra.mxu0 %v3276
    %v3292 = vpop.f32.mrf.mxu0
    %v3293 = vadd.f32 0.0, %v3292
    %v3294 = vpop.f32.mrf.mxu0
    %v3295 = vadd.f32 0.0, %v3294
    %3296 = vdwg.mxu0
    %v3297 = vrcp.pop %v3254
    %v3298 = vrcp.pop %v3257
    %v3299 = vrcp.pop %v3260
    %v3300 = vrcp.pop %v3263
    %v3301 = vmul.f32 %v3288, %v3297
    %v3302 = vmul.f32 %v3290, %v3298
    %v3303 = vmul.f32 %v3293, %v3299
    %v3304 = vmul.f32 %v3295, %v3300
    %v3305 = vpack.c.bf16 %v3302, %v3301
    %v3306 = vpack.c.bf16 %v3304, %v3303
    %v3311 = vunpack.c.l.b16 %v2624
    %v3312 = vunpack.c.l.b16 %v2625
    %v3313 = vunpack.c.l.b16 %v2626
    %v3314 = vunpack.c.l.b16 %v2627
    %v3315 = vpack.c.b16 %v3312, %v3311
    %v3316 = vpack.c.b16 %v3314, %v3313
    %v3320 = vsel %vm718, %v3305, 0
    %v3323 = vsel %vm718, %v3306, 0
    %3325 = vmatpush.bf16.msra.mxu0 0
    %3326 = vmatpush.bf16.msra.mxu0 0
    %3327 = vmatpush.bf16.msra.mxu0 0
    %3328 = vmatpush.bf16.msra.mxu0 0
    %3329 = vmatpush.bf16.msra.mxu0 0
    %3330 = vmatpush.bf16.msra.mxu0 0
    %3331 = vmatpush.bf16.msra.mxu0 %v3316
    %3332 = vmatpush.bf16.msra.mxu0 %v3315
    %3333 = vmatmul.bf16.gmra.mxu0 %v3320
    %v3334 = vpop.f32.mrf.mxu0
    %v3335 = vadd.f32 0.0, %v3334
    %v3336 = vpop.f32.mrf.mxu0
    %v3337 = vadd.f32 0.0, %v3336
    %3338 = vmatmul.bf16.gmra.mxu0 %v3323
    %v3339 = vpop.f32.mrf.mxu0
    %v3340 = vadd.f32 0.0, %v3339
    %v3341 = vpop.f32.mrf.mxu0
    %v3342 = vadd.f32 0.0, %v3341
    %3343 = vdwg.mxu0
    %v3344 = vadd.f32 %v3185, %v3335
    %v3345 = vadd.f32 %v3186, %v3337
    %v3346 = vadd.f32 %v3187, %v3340
    %v3347 = vadd.f32 %v3188, %v3342
    %3348 = vrot.lane.b32.xlu0 %v2873, 32
    %v3349 = vpop.permute.xlu0 %3348
    %3350 = vrot.lane.b32.xlu0 %v2874, 32
    %v3351 = vpop.permute.xlu0 %3350
    %3352 = vrot.lane.b32.xlu0 %v2875, 32
    %v3353 = vpop.permute.xlu0 %3352
    %3354 = vrot.lane.b32.xlu0 %v2876, 32
    %v3355 = vpop.permute.xlu0 %3354
    %v3357 = vsel %vm718, %v3349, 0
    %v3360 = vsel %vm718, %v3351, 0
    %v3363 = vsel %vm718, %v3353, 0
    %v3366 = vsel %vm718, %v3355, 0
    %3368 = vmatpush.bf16.xpose.msra.mxu0 0
    %3369 = vmatpush.bf16.xpose.msra.mxu0 0
    %3370 = vmatpush.bf16.xpose.msra.mxu0 0
    %3371 = vmatpush.bf16.xpose.msra.mxu0 0
    %3372 = vmatpush.bf16.xpose.msra.mxu0 0
    %3373 = vmatpush.bf16.xpose.msra.mxu0 0
    %3374 = vmatpush.bf16.xpose.msra.mxu0 %v3366
    %3375 = vmatpush.bf16.xpose.msra.mxu0 %v3363
    %3376 = vmatmul.bf16.gmra.mxu0 %v3357
    %v3377 = vpop.f32.mrf.mxu0
    %v3378 = vadd.f32 %v425, %v3377
    %v3379 = vpop.f32.mrf.mxu0
    %v3380 = vadd.f32 %v426, %v3379
    %3381 = vmatmul.bf16.gmra.mxu0 %v3360
    %v3382 = vpop.f32.mrf.mxu0
    %v3383 = vadd.f32 %v427, %v3382
    %v3384 = vpop.f32.mrf.mxu0
    %v3385 = vadd.f32 %v428, %v3384
    %3386 = vdwg.mxu0
    %v3387 = vsel %vm718, %v3378, -inf
    %3388 = vmax.xlane.f32.xlu0 %v3387
    %v3389 = vpop.xlane.xlu0 %3388
    %v3390 = vsel %vm718, %v3380, -inf
    %3391 = vmax.xlane.f32.xlu0 %v3390
    %v3392 = vpop.xlane.xlu0 %3391
    %v3393 = vsel %vm718, %v3383, -inf
    %3394 = vmax.xlane.f32.xlu0 %v3393
    %v3395 = vpop.xlane.xlu0 %3394
    %v3396 = vsel %vm718, %v3385, -inf
    %3397 = vmax.xlane.f32.xlu0 %v3396
    %v3398 = vpop.xlane.xlu0 %3397
    %v3399 = vsub.f32 %v3378, %v3389
    %v3400 = vsub.f32 %v3380, %v3392
    %v3401 = vsub.f32 %v3383, %v3395
    %v3402 = vsub.f32 %v3385, %v3398
    %v3403 = vmul.f32 %v3399, 1.442695
    %v3404 = vpow.pop %v3403
    %v3405 = vmul.f32 %v3400, 1.442695
    %v3406 = vpow.pop %v3405
    %v3407 = vmul.f32 %v3401, 1.442695
    %v3408 = vpow.pop %v3407
    %v3409 = vmul.f32 %v3402, 1.442695
    %v3410 = vpow.pop %v3409
    %v3411 = vsel %vm718, %v3404, 0.0
    %3412 = vadd.xlane.f32.xlu0 %v3411
    %v3413 = vpop.xlane.xlu0 %3412
    %v3414 = vsel %vm718, %v3406, 0.0
    %3415 = vadd.xlane.f32.xlu0 %v3414
    %v3416 = vpop.xlane.xlu0 %3415
    %v3417 = vsel %vm718, %v3408, 0.0
    %3418 = vadd.xlane.f32.xlu0 %v3417
    %v3419 = vpop.xlane.xlu0 %3418
    %v3420 = vsel %vm718, %v3410, 0.0
    %3421 = vadd.xlane.f32.xlu0 %v3420
    %v3422 = vpop.xlane.xlu0 %3421
    %v3423 = vpack.c.bf16 %v3406, %v3404
    %v3424 = vpack.c.bf16 %v3410, %v3408
    %3425 = vrot.lane.b32.xlu0 %v2946, 32
    %v3426 = vpop.permute.xlu0 %3425
    %3427 = vrot.lane.b32.xlu0 %v2947, 32
    %v3428 = vpop.permute.xlu0 %3427
    %v3432 = vsel %vm718, %v3423, 0
    %v3435 = vsel %vm718, %v3424, 0
    %3437 = vmatpush.bf16.msra.mxu0 0
    %3438 = vmatpush.bf16.msra.mxu0 0
    %3439 = vmatpush.bf16.msra.mxu0 0
    %3440 = vmatpush.bf16.msra.mxu0 0
    %3441 = vmatpush.bf16.msra.mxu0 0
    %3442 = vmatpush.bf16.msra.mxu0 0
    %3443 = vmatpush.bf16.msra.mxu0 %v3428
    %3444 = vmatpush.bf16.msra.mxu0 %v3426
    %3445 = vmatmul.bf16.gmra.mxu0 %v3432
    %v3446 = vpop.f32.mrf.mxu0
    %v3447 = vadd.f32 0.0, %v3446
    %v3448 = vpop.f32.mrf.mxu0
    %v3449 = vadd.f32 0.0, %v3448
    %3450 = vmatmul.bf16.gmra.mxu0 %v3435
    %v3451 = vpop.f32.mrf.mxu0
    %v3452 = vadd.f32 0.0, %v3451
    %v3453 = vpop.f32.mrf.mxu0
    %v3454 = vadd.f32 0.0, %v3453
    %3455 = vdwg.mxu0
    %v3456 = vrcp.pop %v3413
    %v3457 = vrcp.pop %v3416
    %v3458 = vrcp.pop %v3419
    %v3459 = vrcp.pop %v3422
    %v3460 = vmul.f32 %v3447, %v3456
    %v3461 = vmul.f32 %v3449, %v3457
    %v3462 = vmul.f32 %v3452, %v3458
    %v3463 = vmul.f32 %v3454, %v3459
    %v3464 = vpack.c.bf16 %v3461, %v3460
    %v3465 = vpack.c.bf16 %v3463, %v3462
    %v3470 = vunpack.c.l.b16 %v2628
    %v3471 = vunpack.c.l.b16 %v2629
    %v3472 = vunpack.c.l.b16 %v2630
    %v3473 = vunpack.c.l.b16 %v2631
    %v3474 = vpack.c.b16 %v3471, %v3470
    %v3475 = vpack.c.b16 %v3473, %v3472
    %v3479 = vsel %vm718, %v3464, 0
    %v3482 = vsel %vm718, %v3465, 0
    %3484 = vmatpush.bf16.msra.mxu0 0
    %3485 = vmatpush.bf16.msra.mxu0 0
    %3486 = vmatpush.bf16.msra.mxu0 0
    %3487 = vmatpush.bf16.msra.mxu0 0
    %3488 = vmatpush.bf16.msra.mxu0 0
    %3489 = vmatpush.bf16.msra.mxu0 0
    %3490 = vmatpush.bf16.msra.mxu0 %v3475
    %3491 = vmatpush.bf16.msra.mxu0 %v3474
    %3492 = vmatmul.bf16.gmra.mxu0 %v3479
    %v3493 = vpop.f32.mrf.mxu0
    %v3494 = vadd.f32 0.0, %v3493
    %v3495 = vpop.f32.mrf.mxu0
    %v3496 = vadd.f32 0.0, %v3495
    %3497 = vmatmul.bf16.gmra.mxu0 %v3482
    %v3498 = vpop.f32.mrf.mxu0
    %v3499 = vadd.f32 0.0, %v3498
    %v3500 = vpop.f32.mrf.mxu0
    %v3501 = vadd.f32 0.0, %v3500
    %3502 = vdwg.mxu0
    %v3503 = vadd.f32 %v3344, %v3494
    %v3504 = vadd.f32 %v3345, %v3496
    %v3505 = vadd.f32 %v3346, %v3499
    %v3506 = vadd.f32 %v3347, %v3501
    %v3507 = vpack.c.bf16 %v3504, %v3503
    %v3508 = vpack.c.bf16 %v3506, %v3505
    %v3510 = vperm.slane %v2652, 0
    %v3528 = vunpack.c.l.b16 %v2635
    %v3529 = vunpack.c.l.b16 %v2636
    %v3530 = vunpack.c.l.b16 %v2637
    %v3531 = vunpack.c.l.b16 %v2638
    %v3532 = vunpack.c.l.b16 %v2639
    %v3533 = vunpack.c.l.b16 %v2640
    %v3534 = vunpack.c.l.b16 %v2641
    %v3535 = vunpack.c.l.b16 %v2642
    %v3536 = vunpack.c.l.b16 %v2643
    %v3537 = vunpack.c.l.b16 %v2644
    %v3538 = vunpack.c.l.b16 %v2645
    %v3539 = vunpack.c.l.b16 %v2646
    %v3540 = vunpack.c.l.b16 %v2647
    %v3541 = vunpack.c.l.b16 %v2648
    %v3542 = vunpack.c.l.b16 %v2649
    %v3543 = vunpack.c.l.b16 %v2650
    %v3544 = vpack.c.b16 %v3529, %v3528
    %v3545 = vpack.c.b16 %v3531, %v3530
    %v3546 = vpack.c.b16 %v3533, %v3532
    %v3547 = vpack.c.b16 %v3535, %v3534
    %v3548 = vpack.c.b16 %v3537, %v3536
    %v3549 = vpack.c.b16 %v3539, %v3538
    %v3550 = vpack.c.b16 %v3541, %v3540
    %v3551 = vpack.c.b16 %v3543, %v3542
    %3560 = vmatpush.bf16.msra.mxu0 %v3551
    %3561 = vmatpush.bf16.msra.mxu0 %v3550
    %3562 = vmatpush.bf16.msra.mxu0 %v3549
    %3563 = vmatpush.bf16.msra.mxu0 %v3548
    %3564 = vmatpush.bf16.msra.mxu0 %v3547
    %3565 = vmatpush.bf16.msra.mxu0 %v3546
    %3566 = vmatpush.bf16.msra.mxu0 %v3545
    %3567 = vmatpush.bf16.msra.mxu0 %v3544
    %3568 = vmatmul.bf16.gmra.mxu0 %v3507
    %v3569 = vpop.f32.mrf.mxu0
    %v3570 = vadd.f32 %v3510, %v3569
    %v3571 = vpop.f32.mrf.mxu0
    %v3572 = vadd.f32 %v3510, %v3571
    %3573 = vmatmul.bf16.gmra.mxu0 %v3508
    %v3574 = vpop.f32.mrf.mxu0
    %v3575 = vadd.f32 %v3510, %v3574
    %v3576 = vpop.f32.mrf.mxu0
    %v3577 = vadd.f32 %v3510, %v3576
    %3578 = vdwg.mxu0
    %v3579 = vmax.f32 %v3570, 0.0
    %v3580 = vmax.f32 %v3572, 0.0
    %v3581 = vmax.f32 %v3575, 0.0
    %v3582 = vmax.f32 %v3577, 0.0
    %v3583 = vpack.c.bf16 %v3580, %v3579
    %v3584 = vpack.c.bf16 %v3582, %v3581
    %v3586 = vperm.slane %v2671, 0
    %v3604 = vunpack.c.l.b16 %v2654
    %v3605 = vunpack.c.l.b16 %v2655
    %v3606 = vunpack.c.l.b16 %v2656
    %v3607 = vunpack.c.l.b16 %v2657
    %v3608 = vunpack.c.l.b16 %v2658
    %v3609 = vunpack.c.l.b16 %v2659
    %v3610 = vunpack.c.l.b16 %v2660
    %v3611 = vunpack.c.l.b16 %v2661
    %v3612 = vunpack.c.l.b16 %v2662
    %v3613 = vunpack.c.l.b16 %v2663
    %v3614 = vunpack.c.l.b16 %v2664
    %v3615 = vunpack.c.l.b16 %v2665
    %v3616 = vunpack.c.l.b16 %v2666
    %v3617 = vunpack.c.l.b16 %v2667
    %v3618 = vunpack.c.l.b16 %v2668
    %v3619 = vunpack.c.l.b16 %v2669
    %v3620 = vpack.c.b16 %v3605, %v3604
    %v3621 = vpack.c.b16 %v3607, %v3606
    %v3622 = vpack.c.b16 %v3609, %v3608
    %v3623 = vpack.c.b16 %v3611, %v3610
    %v3624 = vpack.c.b16 %v3613, %v3612
    %v3625 = vpack.c.b16 %v3615, %v3614
    %v3626 = vpack.c.b16 %v3617, %v3616
    %v3627 = vpack.c.b16 %v3619, %v3618
    %3636 = vmatpush.bf16.msra.mxu0 %v3627
    %3637 = vmatpush.bf16.msra.mxu0 %v3626
    %3638 = vmatpush.bf16.msra.mxu0 %v3625
    %3639 = vmatpush.bf16.msra.mxu0 %v3624
    %3640 = vmatpush.bf16.msra.mxu0 %v3623
    %3641 = vmatpush.bf16.msra.mxu0 %v3622
    %3642 = vmatpush.bf16.msra.mxu0 %v3621
    %3643 = vmatpush.bf16.msra.mxu0 %v3620
    %3644 = vmatmul.bf16.gmra.mxu0 %v3583
    %v3645 = vpop.f32.mrf.mxu0
    %v3646 = vadd.f32 %v3586, %v3645
    %v3647 = vpop.f32.mrf.mxu0
    %v3648 = vadd.f32 %v3586, %v3647
    %3649 = vmatmul.bf16.gmra.mxu0 %v3584
    %v3650 = vpop.f32.mrf.mxu0
    %v3651 = vadd.f32 %v3586, %v3650
    %v3652 = vpop.f32.mrf.mxu0
    %v3653 = vadd.f32 %v3586, %v3652
    %3654 = vdwg.mxu0
    %v3655 = vadd.f32 %v3503, %v3646
    %v3656 = vadd.f32 %v3504, %v3648
    %v3657 = vadd.f32 %v3505, %v3651
    %v3658 = vadd.f32 %v3506, %v3653
    %v3659 = vld [vmem:[%s16] sm:$0xf]
    %v3660 = vld [vmem:[%s16 + $0x4] sm:$0xf]
    %v3661 = vld [vmem:[%s16 + $0x8] sm:$0xf]
    %v3662 = vld [vmem:[%s16 + $0xc] sm:$0xf]
    %v3663 = vld [vmem:[%s16 + $0x10] sm:$0xf]
    %v3664 = vld [vmem:[%s16 + $0x14] sm:$0xf]
    %v3665 = vld [vmem:[%s16 + $0x18] sm:$0xf]
    %v3666 = vld [vmem:[%s16 + $0x1c] sm:$0xf]
    %v3667 = vld [vmem:[%s16 + $0x20] sm:$0xf]
    %v3668 = vld [vmem:[%s16 + $0x24] sm:$0xf]
    %v3669 = vld [vmem:[%s16 + $0x28] sm:$0xf]
    %v3670 = vld [vmem:[%s16 + $0x2c] sm:$0xf]
    %v3671 = vld [vmem:[%s16 + $0x30] sm:$0xf]
    %v3672 = vld [vmem:[%s16 + $0x34] sm:$0xf]
    %v3673 = vld [vmem:[%s16 + $0x38] sm:$0xf]
    %v3674 = vld [vmem:[%s16 + $0x3c] sm:$0xf]
    %v3675 = vpack.c.bf16 %v3656, %v3655
    %v3676 = vpack.c.bf16 %v3658, %v3657
    %v3693 = vunpack.c.l.b16 %v3659
    %v3694 = vunpack.c.l.b16 %v3660
    %v3695 = vunpack.c.l.b16 %v3661
    %v3696 = vunpack.c.l.b16 %v3662
    %v3697 = vunpack.c.l.b16 %v3663
    %v3698 = vunpack.c.l.b16 %v3664
    %v3699 = vunpack.c.l.b16 %v3665
    %v3700 = vunpack.c.l.b16 %v3666
    %v3701 = vunpack.c.l.b16 %v3667
    %v3702 = vunpack.c.l.b16 %v3668
    %v3703 = vunpack.c.l.b16 %v3669
    %v3704 = vunpack.c.l.b16 %v3670
    %v3705 = vunpack.c.l.b16 %v3671
    %v3706 = vunpack.c.l.b16 %v3672
    %v3707 = vunpack.c.l.b16 %v3673
    %v3708 = vunpack.c.l.b16 %v3674
    %v3709 = vpack.c.b16 %v3694, %v3693
    %v3710 = vpack.c.b16 %v3696, %v3695
    %v3711 = vpack.c.b16 %v3698, %v3697
    %v3712 = vpack.c.b16 %v3700, %v3699
    %v3713 = vpack.c.b16 %v3702, %v3701
    %v3714 = vpack.c.b16 %v3704, %v3703
    %v3715 = vpack.c.b16 %v3706, %v3705
    %v3716 = vpack.c.b16 %v3708, %v3707
    %3725 = vmatpush.bf16.msra.mxu0 %v3716
    %3726 = vmatpush.bf16.msra.mxu0 %v3715
    %3727 = vmatpush.bf16.msra.mxu0 %v3714
    %3728 = vmatpush.bf16.msra.mxu0 %v3713
    %3729 = vmatpush.bf16.msra.mxu0 %v3712
    %3730 = vmatpush.bf16.msra.mxu0 %v3711
    %3731 = vmatpush.bf16.msra.mxu0 %v3710
    %3732 = vmatpush.bf16.msra.mxu0 %v3709
    %3733 = vmatmul.bf16.gmra.mxu0 %v3675
    %v3734 = vpop.f32.mrf.mxu0
    %v3735 = vadd.f32 0.0, %v3734
    %v3736 = vpop.f32.mrf.mxu0
    %v3737 = vadd.f32 0.0, %v3736
    %3738 = vmatmul.bf16.gmra.mxu0 %v3676
    %v3739 = vpop.f32.mrf.mxu0
    %v3740 = vadd.f32 0.0, %v3739
    %v3741 = vpop.f32.mrf.mxu0
    %v3742 = vadd.f32 0.0, %v3741
    %3743 = vdwg.mxu0
    %v3744 = vsel %vm197, %v3735, 0.0
    %v3745 = vsel %vm197, %v3737, 0.0
    %v3746 = vadd.f32 %v3744, %v3745
    %v3747 = vsel %vm197, %v3740, 0.0
    %v3748 = vadd.f32 %v3746, %v3747
    %v3749 = vsel %vm197, %v3742, 0.0
    %v3750 = vadd.f32 %v3748, %v3749
    %v3751 = vrot.slane %v3750, 4
    %v3752 = vadd.f32 %v3750, %v3751
    %v3753 = vrot.slane %v3752, 2
    %v3754 = vadd.f32 %v3752, %v3753
    %v3755 = vrot.slane %v3754, 1
    %v3756 = vadd.f32 %v3754, %v3755
    %v3757 = vmul.f32 %v3756, 0.027777778
    %v3758 = vsub.f32 %v3735, %v3757
    %v3759 = vsub.f32 %v3737, %v3757
    %v3760 = vsub.f32 %v3740, %v3757
    %v3761 = vsub.f32 %v3742, %v3757
    %v3762 = vmul.f32 %v3758, %v3758
    %v3763 = vmul.f32 %v3759, %v3759
    %v3764 = vmul.f32 %v3760, %v3760
    %v3765 = vmul.f32 %v3761, %v3761
    %v3766 = vsel %vm197, %v3762, 0.0
    %v3767 = vsel %vm197, %v3763, 0.0
    %v3768 = vadd.f32 %v3766, %v3767
    %v3769 = vsel %vm197, %v3764, 0.0
    %v3770 = vadd.f32 %v3768, %v3769
    %v3771 = vsel %vm197, %v3765, 0.0
    %v3772 = vadd.f32 %v3770, %v3771
    %v3773 = vrot.slane %v3772, 4
    %v3774 = vadd.f32 %v3772, %v3773
    %v3775 = vrot.slane %v3774, 2
    %v3776 = vadd.f32 %v3774, %v3775
    %v3777 = vrot.slane %v3776, 1
    %v3778 = vadd.f32 %v3776, %v3777
    %v3779 = vmul.f32 %v3757, %v3757
    %v3780 = vmul.f32 %v3779, 4.0
    %v3781 = vadd.f32 %v3778, %v3780
    %v3782 = vmul.f32 %v3781, 0.027777778
    %v3783 = vadd.f32 %v3782, 1e-05
    %v3784 = vrsqrt.pop %v3783
    %v3785 = vmul.f32 %v3784, %v3783
    %v3786 = vmul.f32 %v3785, %v3784
    %v3787 = vmul.f32 0.5, %v3786
    %v3788 = vsub.f32 1.5, %v3787
    %v3789 = vmul.f32 %v3784, %v3788
    %vm3790 = vweird.f32 %v3783
    %vm3791 = vweird.f32 %v3784
    %vm3792 = vmor %vm3790, %vm3791
    %v3793 = vsel %vm3792, %v3784, %v3789
    %v3794 = vld [vmem:[%s17] sm:$0x1]
    %v3795 = vmul.f32 %v3793, %v3794
    %v3796 = vld [vmem:[%s18] sm:$0x1]
    %v3797 = vmul.f32 %v3757, %v3795
    %v3798 = vsub.f32 %v3796, %v3797
    %v3799 = vperm.slane %v3795, 0
    %v3800 = vmul.f32 %v3735, %v3799
    %v3801 = vmul.f32 %v3737, %v3799
    %v3802 = vmul.f32 %v3740, %v3799
    %v3803 = vmul.f32 %v3742, %v3799
    %v3805 = vperm.slane %v3798, 0
    %v3807 = vadd.f32 %v3800, %v3805
    %v3808 = vadd.f32 %v3801, %v3805
    %v3809 = vadd.f32 %v3802, %v3805
    %v3810 = vadd.f32 %v3803, %v3805
    %v3811 = vmax.f32 %v3807, 0.0
    %v3812 = vmax.f32 %v3808, 0.0
    %v3813 = vmax.f32 %v3809, 0.0
    %v3814 = vmax.f32 %v3810, 0.0
    %v3815 = vmax.f32 %v3798, 0.0
    %v3816 = vld [vmem:[%s19] sm:$0xf]
    %v3817 = vld [vmem:[%s19 + $0x4] sm:$0xf]
    %v3818 = vld [vmem:[%s19 + $0x8] sm:$0xf]
    %v3819 = vld [vmem:[%s19 + $0xc] sm:$0xf]
    %v3820 = vld [vmem:[%s19 + $0x10] sm:$0xf]
    %v3821 = vld [vmem:[%s19 + $0x14] sm:$0xf]
    %v3822 = vld [vmem:[%s19 + $0x18] sm:$0xf]
    %v3823 = vld [vmem:[%s19 + $0x1c] sm:$0xf]
    %v3824 = vpack.c.bf16 %v3812, %v3811
    %v3825 = vpack.c.bf16 %v3814, %v3813
    %v3834 = vunpack.c.l.b16 %v3816
    %v3835 = vunpack.c.l.b16 %v3817
    %v3836 = vunpack.c.l.b16 %v3818
    %v3837 = vunpack.c.l.b16 %v3819
    %v3838 = vunpack.c.l.b16 %v3820
    %v3839 = vunpack.c.l.b16 %v3821
    %v3840 = vunpack.c.l.b16 %v3822
    %v3841 = vunpack.c.l.b16 %v3823
    %v3842 = vpack.c.b16 %v3835, %v3834
    %v3843 = vpack.c.b16 %v3837, %v3836
    %v3844 = vpack.c.b16 %v3839, %v3838
    %v3845 = vpack.c.b16 %v3841, %v3840
    %v3851 = vsel %vm197, %v3824, 0
    %v3854 = vsel %vm197, %v3825, 0
    %3856 = vmatpush.bf16.msra.mxu0 0
    %3857 = vmatpush.bf16.msra.mxu0 0
    %3858 = vmatpush.bf16.msra.mxu0 0
    %3859 = vmatpush.bf16.msra.mxu0 0
    %3860 = vmatpush.bf16.msra.mxu0 %v3845
    %3861 = vmatpush.bf16.msra.mxu0 %v3844
    %3862 = vmatpush.bf16.msra.mxu0 %v3843
    %3863 = vmatpush.bf16.msra.mxu0 %v3842
    %3864 = vmatmul.bf16.gmra.mxu0 %v3851
    %v3865 = vpop.f32.mrf.mxu0
    %v3866 = vadd.f32 0.0, %v3865
    %v3867 = vpop.f32.mrf.mxu0
    %v3868 = vadd.f32 0.0, %v3867
    %3869 = vmatmul.bf16.gmra.mxu0 %v3854
    %v3870 = vpop.f32.mrf.mxu0
    %v3871 = vadd.f32 0.0, %v3870
    %v3872 = vpop.f32.mrf.mxu0
    %v3873 = vadd.f32 0.0, %v3872
    %3874 = vdwg.mxu0
    %v3875 = vpack.c.bf16 %v3815, %v3815
    %v3877 = vsel %vm197, %v3875, 0
    %3879 = vmatpush.bf16.msra.mxu0 0
    %3880 = vmatpush.bf16.msra.mxu0 0
    %3881 = vmatpush.bf16.msra.mxu0 0
    %3882 = vmatpush.bf16.msra.mxu0 0
    %3883 = vmatpush.bf16.msra.mxu0 %v3845
    %3884 = vmatpush.bf16.msra.mxu0 %v3844
    %3885 = vmatpush.bf16.msra.mxu0 %v3843
    %3886 = vmatpush.bf16.msra.mxu0 %v3842
    %3887 = vmatmul.bf16.gmra.mxu0 %v3877
    %v3888 = vpop.f32.mrf.mxu0
    %v3889 = vadd.f32 0.0, %v3888
    %v3890 = vpop.f32.mrf.mxu0
    %3891 = vdwg.mxu0
    %v3892 = vsel %vm197, %v3866, 0.0
    %v3893 = vsel %vm197, %v3868, 0.0
    %v3894 = vadd.f32 %v3892, %v3893
    %v3895 = vsel %vm197, %v3871, 0.0
    %v3896 = vadd.f32 %v3894, %v3895
    %v3897 = vsel %vm197, %v3873, 0.0
    %v3898 = vadd.f32 %v3896, %v3897
    %v3899 = vrot.slane %v3898, 4
    %v3900 = vadd.f32 %v3898, %v3899
    %v3901 = vrot.slane %v3900, 2
    %v3902 = vadd.f32 %v3900, %v3901
    %v3903 = vrot.slane %v3902, 1
    %v3904 = vadd.f32 %v3902, %v3903
    %v3905 = vmul.f32 %v3889, 4.0
    %v3906 = vadd.f32 %v3904, %v3905
    %v3907 = vmul.f32 %v3906, 0.027777778
    %v3908 = vperm.slane %v3907, 0
    %v3909 = vsub.f32 %v3866, %v3908
    %v3910 = vsub.f32 %v3868, %v3908
    %v3911 = vsub.f32 %v3871, %v3908
    %v3912 = vsub.f32 %v3873, %v3908
    %v3913 = vsub.f32 %v3889, %v3907
    %v3914 = vmul.f32 %v3909, %v3909
    %v3915 = vmul.f32 %v3910, %v3910
    %v3916 = vmul.f32 %v3911, %v3911
    %v3917 = vmul.f32 %v3912, %v3912
    %v3918 = vsel %vm197, %v3914, 0.0
    %v3919 = vsel %vm197, %v3915, 0.0
    %v3920 = vadd.f32 %v3918, %v3919
    %v3921 = vsel %vm197, %v3916, 0.0
    %v3922 = vadd.f32 %v3920, %v3921
    %v3923 = vsel %vm197, %v3917, 0.0
    %v3924 = vadd.f32 %v3922, %v3923
    %v3925 = vrot.slane %v3924, 4
    %v3926 = vadd.f32 %v3924, %v3925
    %v3927 = vrot.slane %v3926, 2
    %v3928 = vadd.f32 %v3926, %v3927
    %v3929 = vrot.slane %v3928, 1
    %v3930 = vadd.f32 %v3928, %v3929
    %v3931 = vmul.f32 %v3913, %v3913
    %v3932 = vmul.f32 %v3931, 4.0
    %v3933 = vadd.f32 %v3930, %v3932
    %v3934 = vmul.f32 %v3933, 0.027777778
    %v3935 = vadd.f32 %v3934, 1e-05
    %v3936 = vrsqrt.pop %v3935
    %v3937 = vmul.f32 %v3936, %v3935
    %v3938 = vmul.f32 %v3937, %v3936
    %v3939 = vmul.f32 0.5, %v3938
    %v3940 = vsub.f32 1.5, %v3939
    %v3941 = vmul.f32 %v3936, %v3940
    %vm3942 = vweird.f32 %v3935
    %vm3943 = vweird.f32 %v3936
    %vm3944 = vmor %vm3942, %vm3943
    %v3945 = vsel %vm3944, %v3936, %v3941
    %v3946 = vld [vmem:[%s20] sm:$0x1]
    %v3947 = vmul.f32 %v3945, %v3946
    %v3948 = vmul.f32 %v3913, %v3947
    %v3949 = vld [vmem:[%s21] sm:$0x1]
    %v3950 = vadd.f32 %v3948, %v3949
    %v3951 = vperm.slane %v3950, 0
    %vm3952 = vcmask 517120
    %3953 = vst.msk [vmem:[#allocation5] sm:$0x3] %vm3952, %v3951
    // Predicated region
    $region94: #{cross_attention_net_fwd.1} parent=1 // pred_check
      _
    $region95: #{cross_attention_net_fwd.1} parent=1 // pred_check_branch
      %3955 = sbr.rel (0) target = $region97
    $region96: #{cross_attention_net_fwd.1} parent=1 // pred_region
      %3957 = vsyncadd [#allocation4], 0
      %s3959 = sshll.u32 [#allocation5], 4
      %s3960 = int_to_ptr.vmem [resolvable:$true] %s3959
      %s3961 = sshll.u32 %s22, 4
      %s3962 = int_to_ptr.hbm [resolvable:$true] %s3961
      %3964 = dma.vmem_to_hbm [thread:$0]  %s3960, 32, %s3962, [#allocation4]
    $region97: #{cross_attention_net_fwd.1} parent=1 // pred_fallthru
      _
    // Predicated region
    $region98: #{cross_attention_net_fwd.1} parent=1 // pred_check
      _
    $region99: #{cross_attention_net_fwd.1} parent=1 // pred_check_branch
      %3966 = sbr.rel (0) target = $region101
    $region100: #{cross_attention_net_fwd.1} parent=1 // pred_region
      %3968 = dma.done [#allocation4], 32
    $region101: #{cross_attention_net_fwd.1} parent=1 // pred_fallthru
      _
    %3969 = vsyncpa [#allocation3], 1
    %3970 = vsyncpa [#allocation4], 1

</llo_original>
